<compile_context>
chip_gen: v7x
topology: tpu7x:2x2x1
jax: 0.10.0
libtpu: 0.0.40
codegen_flags: <defaults>
</compile_context>

<pallas_src>
import functools

import jax
import jax.numpy as jnp
from jax.experimental import pallas as pl
from jax.experimental.pallas import tpu as pltpu


def _pdnorm_kernel(feat_ref, ctx_ref, gamma_ref, beta_ref,
                   wsh_ref, wsc_ref, bsh_ref, bsc_ref, seg_ref, out_ref,
                   *, eps, inv_c):
    f32 = jnp.float32
    hi = jax.lax.Precision.HIGHEST

    # ---- LayerNorm over each C-lane segment (= one point), single pass ----
    x = feat_ref[...].astype(f32)                                  # (bm, R*C)
    seg = seg_ref[...]                                             # (R*C, R*C)
    s1 = jnp.dot(x, seg, preferred_element_type=f32, precision=hi)       # seg sums
    s2 = jnp.dot(x * x, seg, preferred_element_type=f32, precision=hi)   # seg sum sq
    mean = s1 * inv_c
    var = s2 * inv_c - mean * mean                                 # E[x^2]-mean^2
    xn = (x - mean) * jax.lax.rsqrt(var + eps)
    y = xn * gamma_ref[...].astype(f32) + beta_ref[...].astype(f32)

    # ---- adaptive modulation: Linear(SiLU(context)) -> (shift, scale) ----
    c = ctx_ref[...].astype(f32)                                   # (bm, R*CTX)
    c = c * pl.reciprocal(1.0 + jnp.exp(-c), approx=False)         # SiLU (EUP)
    shift = jnp.dot(c, wsh_ref[...].astype(f32),
                    preferred_element_type=f32, precision=hi) + bsh_ref[...].astype(f32)
    scale = jnp.dot(c, wsc_ref[...].astype(f32),
                    preferred_element_type=f32, precision=hi) + bsc_ref[...].astype(f32)

    out_ref[...] = (y * (1.0 + scale) + shift).astype(out_ref.dtype)


def _block_diag(w, r):
    """(K, M) -> (r*K, r*M) block-diagonal embedding (built once in the wrapper)."""
    if r == 1:
        return w
    k, m = w.shape
    out = jnp.zeros((r * k, r * m), w.dtype)
    for s in range(r):
        out = out.at[s * k:(s + 1) * k, s * m:(s + 1) * m].set(w)
    return out


def pdnorm_forward(feat, context, condition, params, *, conditions, eps=1e-5,
                   block_m=512):
    """feat: (N, C), context: (N, CTX). Returns (N, C)."""
    N, C = feat.shape
    CTX = context.shape[1]
    dtype = feat.dtype

    # Lane packing factor: fold R consecutive points into one 128-lane row.
    R = (128 // C) if (C < 128 and 128 % C == 0) else 1
    RC, RCTX = R * C, R * CTX

    # decouple=True: pick the norm parameters for this condition (glue).
    idx = conditions.index(condition)
    gamma = jnp.tile(params["ln_weight"][idx], R).reshape(1, RC)
    beta = jnp.tile(params["ln_bias"][idx], R).reshape(1, RC)

    # Modulation Linear: y = x @ W.T + b with W:(2C, CTX), b:(2C,).
    # Split shift/scale halves here (no mid-tile slice in the kernel) and embed
    # block-diagonally so the matmul output lands already row-packed.
    w = params["mod_weight"]
    b = params["mod_bias"]
    w_shift_bd = _block_diag(w[:C, :].T, R)          # (R*CTX, R*C)
    w_scale_bd = _block_diag(w[C:, :].T, R)          # (R*CTX, R*C)
    b_shift = jnp.tile(b[:C], R).reshape(1, RC)
    b_scale = jnp.tile(b[C:], R).reshape(1, RC)

    # Segment-sum matrix (block-diag ones): x @ seg puts each C-lane segment's
    # sum in every lane of that segment (LN stats on the idle MXU).
    lane = jnp.arange(RC)
    seg = (lane[:, None] // C == lane[None, :] // C).astype(jnp.float32)

    # Row tiling: pack rows, pad N, big blocks to amortize per-step overhead.
    M = pl.cdiv(N, R)                                 # packed rows needed
    bm = max(8, min(block_m, pl.cdiv(M, 8) * 8))      # cap to problem size
    bm = pl.cdiv(bm, 8) * 8                           # multiple of 8 sublanes
    grid_m = pl.cdiv(M, bm)
    n_pad = grid_m * bm * R
    feat_p = jnp.pad(feat, ((0, n_pad - N), (0, 0))).reshape(grid_m * bm, RC)
    ctx_p = jnp.pad(context, ((0, n_pad - N), (0, 0))).reshape(grid_m * bm, RCTX)

    kernel = functools.partial(_pdnorm_kernel, eps=eps, inv_c=1.0 / C)

    out = pl.pallas_call(
        kernel,
        out_shape=jax.ShapeDtypeStruct((grid_m * bm, RC), dtype),
        grid=(grid_m,),
        in_specs=[
            pl.BlockSpec((bm, RC), lambda i: (i, 0)),       # packed feat tile
            pl.BlockSpec((bm, RCTX), lambda i: (i, 0)),     # packed context tile
            pl.BlockSpec((1, RC), lambda i: (0, 0)),        # gamma (tiled)
            pl.BlockSpec((1, RC), lambda i: (0, 0)),        # beta (tiled)
            pl.BlockSpec((RCTX, RC), lambda i: (0, 0)),     # W_shift (block-diag)
            pl.BlockSpec((RCTX, RC), lambda i: (0, 0)),     # W_scale (block-diag)
            pl.BlockSpec((1, RC), lambda i: (0, 0)),        # b_shift (tiled)
            pl.BlockSpec((1, RC), lambda i: (0, 0)),        # b_scale (tiled)
            pl.BlockSpec((RC, RC), lambda i: (0, 0)),       # segment-sum matrix
        ],
        out_specs=pl.BlockSpec((bm, RC), lambda i: (i, 0)),
        compiler_params=pltpu.CompilerParams(
            dimension_semantics=("parallel",)),
    )(feat_p, ctx_p, gamma, beta, w_shift_bd, w_scale_bd, b_shift, b_scale, seg)

    return out.reshape(n_pad, C)[:N]


def pdnorm_reference(feat, context, condition, params, *, conditions, eps=1e-5):
    """Plain-JAX reference mirroring the PyTorch forward."""
    idx = conditions.index(condition)
    gamma = params["ln_weight"][idx]
    beta = params["ln_bias"][idx]
    x = feat.astype(jnp.float32)
    mean = jnp.mean(x, axis=-1, keepdims=True)
    var = jnp.mean(jnp.square(x - mean), axis=-1, keepdims=True)
    y = (x - mean) * jax.lax.rsqrt(var + eps) * gamma + beta
    c = context.astype(jnp.float32)
    c = c * jax.nn.sigmoid(c)
    mod = jnp.dot(c, params["mod_weight"].T,
                  precision=jax.lax.Precision.HIGHEST) + params["mod_bias"]
    shift, scale = jnp.split(mod, 2, axis=1)
    return (y * (1.0 + scale) + shift).astype(feat.dtype)


if __name__ == "__main__":
    # Small shapes consistent with the module; N deliberately NOT a multiple of
    # the tile so the padding path is exercised.
    N = 777                 # number of points
    C = 32                  # num_features
    CTX = 64                # context_channels
    conditions = ("ScanNet", "S3DIS", "Structured3D")
    condition = "S3DIS"

    key = jax.random.PRNGKey(0)
    k_feat, k_ctx, k_g, k_b, k_w, k_bias = jax.random.split(key, 6)

    feat = jax.random.normal(k_feat, (N, C), dtype=jnp.float32)
    context = jax.random.normal(k_ctx, (N, CTX), dtype=jnp.float32)

    params = {
        "ln_weight": 1.0 + 0.1 * jax.random.normal(
            k_g, (len(conditions), C), dtype=jnp.float32),
        "ln_bias": 0.1 * jax.random.normal(
            k_b, (len(conditions), C), dtype=jnp.float32),
        "mod_weight": 0.05 * jax.random.normal(
            k_w, (2 * C, CTX), dtype=jnp.float32),
        "mod_bias": 0.02 * jax.random.normal(
            k_bias, (2 * C,), dtype=jnp.float32),
    }

    # block_m=64 here only to exercise a multi-step grid at demo size; the
    # production default (512 packed rows ~ 2048 points per tile) is the tuned value.
    out = pdnorm_forward(feat, context, condition, params,
                         conditions=conditions, block_m=64)
    out = jax.block_until_ready(out)

    ref = pdnorm_reference(feat, context, condition, params,
                           conditions=conditions)
    assert out.shape == (N, C)
    assert jnp.allclose(out, ref, atol=1e-5, rtol=1e-5), "mismatch vs reference"

    print("KERNEL_OK")
</pallas_src>

<mosaic_0001>
module attributes {stable_mosaic.version = 11 : i64} {
  func.func @_pdnorm_kernel(%arg0: i32, %arg1: memref<64x128xf32, #tpu.memory_space<vmem>>, %arg2: memref<64x256xf32, #tpu.memory_space<vmem>>, %arg3: memref<1x128xf32, #tpu.memory_space<vmem>>, %arg4: memref<1x128xf32, #tpu.memory_space<vmem>>, %arg5: memref<256x128xf32, #tpu.memory_space<vmem>>, %arg6: memref<256x128xf32, #tpu.memory_space<vmem>>, %arg7: memref<1x128xf32, #tpu.memory_space<vmem>>, %arg8: memref<1x128xf32, #tpu.memory_space<vmem>>, %arg9: memref<128x128xf32, #tpu.memory_space<vmem>>, %arg10: memref<64x128xf32, #tpu.memory_space<vmem>>) attributes {dimension_semantics = [#tpu.dimension_semantics<parallel>], iteration_bounds = array<i64: 4>, scalar_prefetch = 0 : i64, scratch_operands = 0 : i64, tpu.core_type = #tpu.core_type<tc>, window_params = [{transform_indices = @transform_0, window_bounds = array<i64: 64, 128>}, {transform_indices = @transform_1, window_bounds = array<i64: 64, 256>}, {pipeline_mode = #tpu.pipeline_mode<synchronous>, transform_indices = @transform_2, window_bounds = array<i64: 1, 128>}, {pipeline_mode = #tpu.pipeline_mode<synchronous>, transform_indices = @transform_3, window_bounds = array<i64: 1, 128>}, {pipeline_mode = #tpu.pipeline_mode<synchronous>, transform_indices = @transform_4, window_bounds = array<i64: 256, 128>}, {pipeline_mode = #tpu.pipeline_mode<synchronous>, transform_indices = @transform_5, window_bounds = array<i64: 256, 128>}, {pipeline_mode = #tpu.pipeline_mode<synchronous>, transform_indices = @transform_6, window_bounds = array<i64: 1, 128>}, {pipeline_mode = #tpu.pipeline_mode<synchronous>, transform_indices = @transform_7, window_bounds = array<i64: 1, 128>}, {pipeline_mode = #tpu.pipeline_mode<synchronous>, transform_indices = @transform_8, window_bounds = array<i64: 128, 128>}, {transform_indices = @transform_9, window_bounds = array<i64: 64, 128>}]} {
    %c0 = arith.constant 0 : index
    %c0_0 = arith.constant 0 : index
    %0 = vector.load %arg1[%c0, %c0_0] : memref<64x128xf32, #tpu.memory_space<vmem>>, vector<64x128xf32>
    %c0_1 = arith.constant 0 : index
    %c0_2 = arith.constant 0 : index
    %1 = vector.load %arg9[%c0_1, %c0_2] : memref<128x128xf32, #tpu.memory_space<vmem>>, vector<128x128xf32>
    %cst = arith.constant dense<0.000000e+00> : vector<64x128xf32>
    %2 = tpu.matmul %0, %1, %cst {dimension_numbers = #tpu.dot_dimension_numbers<[1], [0], [0], [1], [0, 0, 1, 1], [], []>, precision = #tpu.contract_precision<fp32>} : vector<64x128xf32>, vector<128x128xf32>, vector<64x128xf32> -> vector<64x128xf32>
    %3 = arith.mulf %0, %0 : vector<64x128xf32>
    %cst_3 = arith.constant dense<0.000000e+00> : vector<64x128xf32>
    %4 = tpu.matmul %3, %1, %cst_3 {dimension_numbers = #tpu.dot_dimension_numbers<[1], [0], [0], [1], [0, 0, 1, 1], [], []>, precision = #tpu.contract_precision<fp32>} : vector<64x128xf32>, vector<128x128xf32>, vector<64x128xf32> -> vector<64x128xf32>
    %cst_4 = arith.constant 3.125000e-02 : f32
    %5 = vector.broadcast %cst_4 : f32 to vector<64x128xf32>
    %6 = arith.mulf %2, %5 : vector<64x128xf32>
    %cst_5 = arith.constant 3.125000e-02 : f32
    %7 = vector.broadcast %cst_5 : f32 to vector<64x128xf32>
    %8 = arith.mulf %4, %7 : vector<64x128xf32>
    %9 = arith.mulf %6, %6 : vector<64x128xf32>
    %10 = arith.subf %8, %9 : vector<64x128xf32>
    %11 = arith.subf %0, %6 : vector<64x128xf32>
    %cst_6 = arith.constant 9.99999974E-6 : f32
    %12 = vector.broadcast %cst_6 : f32 to vector<64x128xf32>
    %13 = arith.addf %10, %12 : vector<64x128xf32>
    %14 = math.rsqrt %13 : vector<64x128xf32>
    %15 = arith.mulf %11, %14 : vector<64x128xf32>
    %c0_7 = arith.constant 0 : index
    %c0_8 = arith.constant 0 : index
    %16 = vector.load %arg3[%c0_7, %c0_8] : memref<1x128xf32, #tpu.memory_space<vmem>>, vector<1x128xf32>
    %17 = vector.broadcast %16 : vector<1x128xf32> to vector<64x128xf32>
    %18 = arith.mulf %15, %17 : vector<64x128xf32>
    %c0_9 = arith.constant 0 : index
    %c0_10 = arith.constant 0 : index
    %19 = vector.load %arg4[%c0_9, %c0_10] : memref<1x128xf32, #tpu.memory_space<vmem>>, vector<1x128xf32>
    %20 = vector.broadcast %19 : vector<1x128xf32> to vector<64x128xf32>
    %21 = arith.addf %18, %20 : vector<64x128xf32>
    %c0_11 = arith.constant 0 : index
    %c0_12 = arith.constant 0 : index
    %22 = vector.load %arg2[%c0_11, %c0_12] : memref<64x256xf32, #tpu.memory_space<vmem>>, vector<64x256xf32>
    %cst_13 = arith.constant 0.000000e+00 : f32
    %23 = vector.broadcast %cst_13 : f32 to vector<64x256xf32>
    %24 = arith.subf %23, %22 : vector<64x256xf32>
    %25 = math.exp %24 : vector<64x256xf32>
    %cst_14 = arith.constant 1.000000e+00 : f32
    %26 = vector.broadcast %cst_14 : f32 to vector<64x256xf32>
    %27 = arith.addf %26, %25 : vector<64x256xf32>
    %28 = tpu.reciprocal %27 : vector<64x256xf32> -> vector<64x256xf32>
    %29 = arith.mulf %22, %28 : vector<64x256xf32>
    %c0_15 = arith.constant 0 : index
    %c0_16 = arith.constant 0 : index
    %30 = vector.load %arg5[%c0_15, %c0_16] : memref<256x128xf32, #tpu.memory_space<vmem>>, vector<256x128xf32>
    %cst_17 = arith.constant dense<0.000000e+00> : vector<64x128xf32>
    %31 = tpu.matmul %29, %30, %cst_17 {dimension_numbers = #tpu.dot_dimension_numbers<[1], [0], [0], [1], [0, 0, 1, 1], [], []>, precision = #tpu.contract_precision<fp32>} : vector<64x256xf32>, vector<256x128xf32>, vector<64x128xf32> -> vector<64x128xf32>
    %c0_18 = arith.constant 0 : index
    %c0_19 = arith.constant 0 : index
    %32 = vector.load %arg7[%c0_18, %c0_19] : memref<1x128xf32, #tpu.memory_space<vmem>>, vector<1x128xf32>
    %33 = vector.broadcast %32 : vector<1x128xf32> to vector<64x128xf32>
    %34 = arith.addf %31, %33 : vector<64x128xf32>
    %c0_20 = arith.constant 0 : index
    %c0_21 = arith.constant 0 : index
    %35 = vector.load %arg6[%c0_20, %c0_21] : memref<256x128xf32, #tpu.memory_space<vmem>>, vector<256x128xf32>
    %cst_22 = arith.constant dense<0.000000e+00> : vector<64x128xf32>
    %36 = tpu.matmul %29, %35, %cst_22 {dimension_numbers = #tpu.dot_dimension_numbers<[1], [0], [0], [1], [0, 0, 1, 1], [], []>, precision = #tpu.contract_precision<fp32>} : vector<64x256xf32>, vector<256x128xf32>, vector<64x128xf32> -> vector<64x128xf32>
    %c0_23 = arith.constant 0 : index
    %c0_24 = arith.constant 0 : index
    %37 = vector.load %arg8[%c0_23, %c0_24] : memref<1x128xf32, #tpu.memory_space<vmem>>, vector<1x128xf32>
    %38 = vector.broadcast %37 : vector<1x128xf32> to vector<64x128xf32>
    %39 = arith.addf %36, %38 : vector<64x128xf32>
    %cst_25 = arith.constant 1.000000e+00 : f32
    %40 = vector.broadcast %cst_25 : f32 to vector<64x128xf32>
    %41 = arith.addf %40, %39 : vector<64x128xf32>
    %42 = arith.mulf %21, %41 : vector<64x128xf32>
    %43 = arith.addf %42, %34 : vector<64x128xf32>
    %c0_26 = arith.constant 0 : index
    %c0_27 = arith.constant 0 : index
    %44 = vector.load %arg10[%c0_26, %c0_27] : memref<64x128xf32, #tpu.memory_space<vmem>>, vector<64x128xf32>
    tpu.vector_store %arg10[%c0_26, %c0_27], %43 {strides = array<i32>} : memref<64x128xf32, #tpu.memory_space<vmem>>, vector<64x128xf32>,
    return
  }
  func.func @transform_0(%arg0: i32) -> (i32, i32) {
    %c0_i32 = arith.constant 0 : i32
    %c0_i32_0 = arith.constant 0 : i32
    return %arg0, %c0_i32 : i32, i32
  }
  func.func @transform_1(%arg0: i32) -> (i32, i32) {
    %c0_i32 = arith.constant 0 : i32
    %c0_i32_0 = arith.constant 0 : i32
    return %arg0, %c0_i32 : i32, i32
  }
  func.func @transform_2(%arg0: i32) -> (i32, i32) {
    %c0_i32 = arith.constant 0 : i32
    %c0_i32_0 = arith.constant 0 : i32
    %c0_i32_1 = arith.constant 0 : i32
    return %c0_i32, %c0_i32_0 : i32, i32
  }
  func.func @transform_3(%arg0: i32) -> (i32, i32) {
    %c0_i32 = arith.constant 0 : i32
    %c0_i32_0 = arith.constant 0 : i32
    %c0_i32_1 = arith.constant 0 : i32
    return %c0_i32, %c0_i32_0 : i32, i32
  }
  func.func @transform_4(%arg0: i32) -> (i32, i32) {
    %c0_i32 = arith.constant 0 : i32
    %c0_i32_0 = arith.constant 0 : i32
    %c0_i32_1 = arith.constant 0 : i32
    return %c0_i32, %c0_i32_0 : i32, i32
  }
  func.func @transform_5(%arg0: i32) -> (i32, i32) {
    %c0_i32 = arith.constant 0 : i32
    %c0_i32_0 = arith.constant 0 : i32
    %c0_i32_1 = arith.constant 0 : i32
    return %c0_i32, %c0_i32_0 : i32, i32
  }
  func.func @transform_6(%arg0: i32) -> (i32, i32) {
    %c0_i32 = arith.constant 0 : i32
    %c0_i32_0 = arith.constant 0 : i32
    %c0_i32_1 = arith.constant 0 : i32
    return %c0_i32, %c0_i32_0 : i32, i32
  }
  func.func @transform_7(%arg0: i32) -> (i32, i32) {
    %c0_i32 = arith.constant 0 : i32
    %c0_i32_0 = arith.constant 0 : i32
    %c0_i32_1 = arith.constant 0 : i32
    return %c0_i32, %c0_i32_0 : i32, i32
  }
  func.func @transform_8(%arg0: i32) -> (i32, i32) {
    %c0_i32 = arith.constant 0 : i32
    %c0_i32_0 = arith.constant 0 : i32
    %c0_i32_1 = arith.constant 0 : i32
    return %c0_i32, %c0_i32_0 : i32, i32
  }
  func.func @transform_9(%arg0: i32) -> (i32, i32) {
    %c0_i32 = arith.constant 0 : i32
    %c0_i32_0 = arith.constant 0 : i32
    return %arg0, %c0_i32 : i32, i32
  }
}

</mosaic_0001>

<llo_original>
// kernel: tpu_custom_call.1
$region0: #{tpu_custom_call.1}
  #allocation0 [shape = 'u32[]', space=smem, size = 0x4, offset = 0x4, fixed_abs, tag = 'smem constant byte address 0x4 - core index']
  #allocation1 [shape = 'u32[144,128]{1,0:T(1,128)}', space=vmem, size = 0x12000, scoped, tag = 'internal scratch']
  %s0 = inlined_call_operand.hbm [shape: f32[256,128], index: 0, kind: input, shape index: {}]
  %s1 = inlined_call_operand.hbm [shape: f32[256,256], index: 1, kind: input, shape index: {}]
  %s2 = inlined_call_operand.vmem [shape: f32[1,128], index: 2, kind: input, shape index: {}]
  %s3 = inlined_call_operand.vmem [shape: f32[1,128], index: 3, kind: input, shape index: {}]
  %s4 = inlined_call_operand.hbm [shape: f32[256,128], index: 4, kind: input, shape index: {}]
  %s5 = inlined_call_operand.hbm [shape: f32[256,128], index: 5, kind: input, shape index: {}]
  %s6 = inlined_call_operand.vmem [shape: f32[1,128], index: 6, kind: input, shape index: {}]
  %s7 = inlined_call_operand.vmem [shape: f32[1,128], index: 7, kind: input, shape index: {}]
  %s8 = inlined_call_operand.hbm [shape: f32[128,128], index: 8, kind: input, shape index: {}]
  %s9 = inlined_call_operand.hbm [shape: f32[256,128], index: 9, kind: output, shape index: {}]
  %s10 = sld [smem:[#allocation0]]
  $region89: #{tpu_custom_call.1} parent=0
    _
  %s12 = ssub.s32 1, %s10
  %s13 = scalar_select 0, %s12, %s10
  $region1: #{tpu_custom_call.1} parent=0
    #allocation2 [shape = 'u8[65536]{0}', space=vmem, size = 0x10000, scoped, tag = 'input window, operand 0']
    #allocation3 [shape = 's32[2]{0}', space=sflag, size = 0x8, scoped, tag = 'scoped memory for tpu_custom_call.1']
    #allocation4 [shape = 's32[2]{0}', space=sflag, size = 0x8, scoped, tag = 'scoped memory for tpu_custom_call.1']
    #allocation5 [shape = 'u8[131072]{0}', space=vmem, size = 0x20000, scoped, tag = 'input window, operand 1']
    #allocation6 [shape = 's32[2]{0}', space=sflag, size = 0x8, scoped, tag = 'scoped memory for tpu_custom_call.1']
    #allocation7 [shape = 'u8[131072]{0}', space=vmem, size = 0x20000, scoped, tag = 'input window, operand 4, single buffered']
    #allocation8 [shape = 'u8[131072]{0}', space=vmem, size = 0x20000, scoped, tag = 'input window, operand 5, single buffered']
    #allocation9 [shape = 's32[1]{0}', space=sflag, size = 0x4, scoped, tag = 'scoped memory for tpu_custom_call.1']
    #allocation10 [shape = 'u8[65536]{0}', space=vmem, size = 0x10000, scoped, tag = 'input window, operand 8, single buffered']
    #allocation11 [shape = 'u8[65536]{0}', space=vmem, size = 0x10000, scoped, tag = 'output window, operand 0']
    %14 = vsyncpa [#allocation3], 0
    %s15 = scalar_lea.sflag [#allocation3], 1
    %16 = vsyncpa %s15, 0
    %17 = vsyncpa [#allocation6], 0
    %s18 = scalar_lea.sflag [#allocation6], 1
    %19 = vsyncpa %s18, 0
    %20 = vsyncpa [#allocation9], 0
    %21 = vsyncpa [#allocation4], 0
    %s22 = scalar_lea.sflag [#allocation4], 1
    %23 = vsyncpa %s22, 0
    loop: start=0, step=1, limit=6
    $region2: #{tpu_custom_call.1} parent=1 // loop_pre_header
      _
    $region3: #{tpu_custom_call.1} parent=1 // loop_header
      %s25 = sphi 0, %s29
      %p26 = scmp.ge.s32.totalorder %s25, 6
      %s35 = sphi 0, %s37
      %s38 = sphi 0, %s35
      %s39 = sphi 0, %s38
      %s55 = sphi 0, %s39
      %s61 = sphi 0, %s63
      %s64 = sphi 0, %s61
      %s65 = sphi 0, %s64
      %s81 = sphi 0, %s65
      %s85 = sphi 0, %s85
      %s87 = sphi 0, %s85
      %s88 = sphi 0, %s87
      %s102 = sphi 0, %s88
      %s106 = sphi 0, %s106
      %s108 = sphi 0, %s106
      %s109 = sphi 0, %s108
      %s123 = sphi 0, %s109
      %s127 = sphi 0, %s127
      %s129 = sphi 0, %s127
      %s130 = sphi 0, %s129
      %s144 = sphi 0, %s130
      %s148 = sphi 0, %s148
      %s150 = sphi 0, %s148
      %s151 = sphi 0, %s150
      %s165 = sphi 0, %s151
      %s169 = sphi 0, %s169
      %s171 = sphi 0, %s169
      %s172 = sphi 0, %s171
      %s186 = sphi 0, %s172
      %s190 = sphi 0, %s190
      %s192 = sphi 0, %s190
      %s193 = sphi 0, %s192
      %s207 = sphi 0, %s193
      %s211 = sphi 0, %s211
      %s213 = sphi 0, %s211
      %s214 = sphi 0, %s213
      %s228 = sphi 0, %s214
      %s234 = sphi 0, %s236
      %s237 = sphi 0, %s234
      %s238 = sphi 0, %s237
      %s254 = sphi 0, %s238
    $region4: #{tpu_custom_call.1} parent=1 // loop_header_branch
      %28 = sbr.rel (%p26) target = $region8
    $region5: #{tpu_custom_call.1} parent=1 // loop_body
      %s30 = ssub.s32 %s25, 1
      %s31 = ssub.s32 %s25, 2
      %s32 = sadd.s32 %s25, 1
      %s33 = ssub.s32 %s25, %s32
      %p34 = scmp.eq.s32.totalorder %s33, 0
      %s36 = sadd.s32 %s35, 1
      %s37 = scalar_select %p34, %s35, %s36
      %p40 = pneg %p34
      %p41 = scmp.eq.s32.totalorder %s25, 3
      %p42 = por %p40, %p41
      %p43 = scmp.ne.s32.totalorder %s35, %s38
      %p44 = scmp.eq.s32.totalorder %s25, 0
      %p45 = por %p43, %p44
      %p46 = scmp.ne.s32.totalorder %s35, %s38
      %p47 = scmp.eq.s32.totalorder %s30, 3
      %p48 = por %p46, %p47
      %p49 = scmp.ne.s32.totalorder %s38, %s39
      %p50 = scmp.eq.s32.totalorder %s30, 0
      %p51 = por %p49, %p50
      %p52 = scmp.ne.s32.totalorder %s38, %s39
      %p53 = scmp.eq.s32.totalorder %s31, 3
      %p54 = por %p52, %p53
      %p56 = scmp.ne.s32.totalorder %s39, %s55
      %p57 = scmp.eq.s32.totalorder %s31, 0
      %p58 = por %p56, %p57
      %s59 = ssub.s32 %s25, %s32
      %p60 = scmp.eq.s32.totalorder %s59, 0
      %s62 = sadd.s32 %s61, 1
      %s63 = scalar_select %p60, %s61, %s62
      %p66 = pneg %p60
      %p67 = scmp.eq.s32.totalorder %s25, 3
      %p68 = por %p66, %p67
      %p69 = scmp.ne.s32.totalorder %s61, %s64
      %p70 = scmp.eq.s32.totalorder %s25, 0
      %p71 = por %p69, %p70
      %p72 = scmp.ne.s32.totalorder %s61, %s64
      %p73 = scmp.eq.s32.totalorder %s30, 3
      %p74 = por %p72, %p73
      %p75 = scmp.ne.s32.totalorder %s64, %s65
      %p76 = scmp.eq.s32.totalorder %s30, 0
      %p77 = por %p75, %p76
      %p78 = scmp.ne.s32.totalorder %s64, %s65
      %p79 = scmp.eq.s32.totalorder %s31, 3
      %p80 = por %p78, %p79
      %p82 = scmp.ne.s32.totalorder %s65, %s81
      %p83 = scmp.eq.s32.totalorder %s31, 0
      %p84 = por %p82, %p83
      %s86 = sadd.s32 %s85, 1
      %p89 = scmp.eq.s32.totalorder %s25, 3
      %p90 = scmp.ne.s32.totalorder %s85, %s87
      %p91 = scmp.eq.s32.totalorder %s25, 0
      %p92 = por %p90, %p91
      %p93 = scmp.ne.s32.totalorder %s85, %s87
      %p94 = scmp.eq.s32.totalorder %s30, 3
      %p95 = por %p93, %p94
      %p96 = scmp.ne.s32.totalorder %s87, %s88
      %p97 = scmp.eq.s32.totalorder %s30, 0
      %p98 = por %p96, %p97
      %p99 = scmp.ne.s32.totalorder %s87, %s88
      %p100 = scmp.eq.s32.totalorder %s31, 3
      %p101 = por %p99, %p100
      %p103 = scmp.ne.s32.totalorder %s88, %s102
      %p104 = scmp.eq.s32.totalorder %s31, 0
      %p105 = por %p103, %p104
      %s107 = sadd.s32 %s106, 1
      %p110 = scmp.eq.s32.totalorder %s25, 3
      %p111 = scmp.ne.s32.totalorder %s106, %s108
      %p112 = scmp.eq.s32.totalorder %s25, 0
      %p113 = por %p111, %p112
      %p114 = scmp.ne.s32.totalorder %s106, %s108
      %p115 = scmp.eq.s32.totalorder %s30, 3
      %p116 = por %p114, %p115
      %p117 = scmp.ne.s32.totalorder %s108, %s109
      %p118 = scmp.eq.s32.totalorder %s30, 0
      %p119 = por %p117, %p118
      %p120 = scmp.ne.s32.totalorder %s108, %s109
      %p121 = scmp.eq.s32.totalorder %s31, 3
      %p122 = por %p120, %p121
      %p124 = scmp.ne.s32.totalorder %s109, %s123
      %p125 = scmp.eq.s32.totalorder %s31, 0
      %p126 = por %p124, %p125
      %s128 = sadd.s32 %s127, 1
      %p131 = scmp.eq.s32.totalorder %s25, 3
      %p132 = scmp.ne.s32.totalorder %s127, %s129
      %p133 = scmp.eq.s32.totalorder %s25, 0
      %p134 = por %p132, %p133
      %p135 = scmp.ne.s32.totalorder %s127, %s129
      %p136 = scmp.eq.s32.totalorder %s30, 3
      %p137 = por %p135, %p136
      %p138 = scmp.ne.s32.totalorder %s129, %s130
      %p139 = scmp.eq.s32.totalorder %s30, 0
      %p140 = por %p138, %p139
      %p141 = scmp.ne.s32.totalorder %s129, %s130
      %p142 = scmp.eq.s32.totalorder %s31, 3
      %p143 = por %p141, %p142
      %p145 = scmp.ne.s32.totalorder %s130, %s144
      %p146 = scmp.eq.s32.totalorder %s31, 0
      %p147 = por %p145, %p146
      %s149 = sadd.s32 %s148, 1
      %p152 = scmp.eq.s32.totalorder %s25, 3
      %p153 = scmp.ne.s32.totalorder %s148, %s150
      %p154 = scmp.eq.s32.totalorder %s25, 0
      %p155 = por %p153, %p154
      %p156 = scmp.ne.s32.totalorder %s148, %s150
      %p157 = scmp.eq.s32.totalorder %s30, 3
      %p158 = por %p156, %p157
      %p159 = scmp.ne.s32.totalorder %s150, %s151
      %p160 = scmp.eq.s32.totalorder %s30, 0
      %p161 = por %p159, %p160
      %p162 = scmp.ne.s32.totalorder %s150, %s151
      %p163 = scmp.eq.s32.totalorder %s31, 3
      %p164 = por %p162, %p163
      %p166 = scmp.ne.s32.totalorder %s151, %s165
      %p167 = scmp.eq.s32.totalorder %s31, 0
      %p168 = por %p166, %p167
      %s170 = sadd.s32 %s169, 1
      %p173 = scmp.eq.s32.totalorder %s25, 3
      %p174 = scmp.ne.s32.totalorder %s169, %s171
      %p175 = scmp.eq.s32.totalorder %s25, 0
      %p176 = por %p174, %p175
      %p177 = scmp.ne.s32.totalorder %s169, %s171
      %p178 = scmp.eq.s32.totalorder %s30, 3
      %p179 = por %p177, %p178
      %p180 = scmp.ne.s32.totalorder %s171, %s172
      %p181 = scmp.eq.s32.totalorder %s30, 0
      %p182 = por %p180, %p181
      %p183 = scmp.ne.s32.totalorder %s171, %s172
      %p184 = scmp.eq.s32.totalorder %s31, 3
      %p185 = por %p183, %p184
      %p187 = scmp.ne.s32.totalorder %s172, %s186
      %p188 = scmp.eq.s32.totalorder %s31, 0
      %p189 = por %p187, %p188
      %s191 = sadd.s32 %s190, 1
      %p194 = scmp.eq.s32.totalorder %s25, 3
      %p195 = scmp.ne.s32.totalorder %s190, %s192
      %p196 = scmp.eq.s32.totalorder %s25, 0
      %p197 = por %p195, %p196
      %p198 = scmp.ne.s32.totalorder %s190, %s192
      %p199 = scmp.eq.s32.totalorder %s30, 3
      %p200 = por %p198, %p199
      %p201 = scmp.ne.s32.totalorder %s192, %s193
      %p202 = scmp.eq.s32.totalorder %s30, 0
      %p203 = por %p201, %p202
      %p204 = scmp.ne.s32.totalorder %s192, %s193
      %p205 = scmp.eq.s32.totalorder %s31, 3
      %p206 = por %p204, %p205
      %p208 = scmp.ne.s32.totalorder %s193, %s207
      %p209 = scmp.eq.s32.totalorder %s31, 0
      %p210 = por %p208, %p209
      %s212 = sadd.s32 %s211, 1
      %p215 = scmp.eq.s32.totalorder %s25, 3
      %p216 = scmp.ne.s32.totalorder %s211, %s213
      %p217 = scmp.eq.s32.totalorder %s25, 0
      %p218 = por %p216, %p217
      %p219 = scmp.ne.s32.totalorder %s211, %s213
      %p220 = scmp.eq.s32.totalorder %s30, 3
      %p221 = por %p219, %p220
      %p222 = scmp.ne.s32.totalorder %s213, %s214
      %p223 = scmp.eq.s32.totalorder %s30, 0
      %p224 = por %p222, %p223
      %p225 = scmp.ne.s32.totalorder %s213, %s214
      %p226 = scmp.eq.s32.totalorder %s31, 3
      %p227 = por %p225, %p226
      %p229 = scmp.ne.s32.totalorder %s214, %s228
      %p230 = scmp.eq.s32.totalorder %s31, 0
      %p231 = por %p229, %p230
      %s232 = ssub.s32 %s25, %s32
      %p233 = scmp.eq.s32.totalorder %s232, 0
      %s235 = sadd.s32 %s234, 1
      %s236 = scalar_select %p233, %s234, %s235
      %p239 = pneg %p233
      %p240 = scmp.eq.s32.totalorder %s25, 3
      %p241 = por %p239, %p240
      %p242 = scmp.ne.s32.totalorder %s234, %s237
      %p243 = scmp.eq.s32.totalorder %s25, 0
      %p244 = por %p242, %p243
      %p245 = scmp.ne.s32.totalorder %s234, %s237
      %p246 = scmp.eq.s32.totalorder %s30, 3
      %p247 = por %p245, %p246
      %p248 = scmp.ne.s32.totalorder %s237, %s238
      %p249 = scmp.eq.s32.totalorder %s30, 0
      %p250 = por %p248, %p249
      %p251 = scmp.ne.s32.totalorder %s237, %s238
      %p252 = scmp.eq.s32.totalorder %s31, 3
      %p253 = por %p251, %p252
      %p255 = scmp.ne.s32.totalorder %s238, %s254
      %p256 = scmp.eq.s32.totalorder %s31, 0
      %p257 = por %p255, %p256
      %p258 = scmp.le.s32.totalorder 1, %s25
      %p259 = scmp.lt.s32.totalorder %s25, 5
      %p260 = pnand %p258, %p259
      %p261 = pneg %p260
      // Predicated region
      $region9: #{tpu_custom_call.1} parent=5 // pred_check
        _
      $region10: #{tpu_custom_call.1} parent=5 // pred_check_branch
        %263 = sbr.rel (%p260) target = $region12
      $region11: #{tpu_custom_call.1} parent=5 // pred_region
        %s264 = ssub.s32 %s25, 1
        // Predicated region
        $region13: #{tpu_custom_call.1} parent=11 // pred_check
          %p265 = pneg %p98
        $region14: #{tpu_custom_call.1} parent=11 // pred_check_branch
          %267 = sbr.rel (%p265) target = $region16
        $region15: #{tpu_custom_call.1} parent=11 // pred_region
          _
        $region16: #{tpu_custom_call.1} parent=11 // pred_fallthru
          _
        // Predicated region
        $region17: #{tpu_custom_call.1} parent=11 // pred_check
          %p268 = pneg %p119
        $region18: #{tpu_custom_call.1} parent=11 // pred_check_branch
          %270 = sbr.rel (%p268) target = $region20
        $region19: #{tpu_custom_call.1} parent=11 // pred_region
          _
        $region20: #{tpu_custom_call.1} parent=11 // pred_fallthru
          _
        // Predicated region
        $region21: #{tpu_custom_call.1} parent=11 // pred_check
          %p271 = pneg %p140
        $region22: #{tpu_custom_call.1} parent=11 // pred_check_branch
          %273 = sbr.rel (%p271) target = $region24
        $region23: #{tpu_custom_call.1} parent=11 // pred_region
          %s275 = ssub.s32 4096, 4096
          %276 = vsyncadd [#allocation6], %s275
          %s277 = sshll.u32 [#allocation7], 4
          %s278 = int_to_ptr.vmem [resolvable:$true] %s277
          %283 = dma.hbm_to_vmem [thread:$0]  %s4, 4096, %s278, [#allocation6], 128, 128, 8
        $region24: #{tpu_custom_call.1} parent=11 // pred_fallthru
          _
        // Predicated region
        $region25: #{tpu_custom_call.1} parent=11 // pred_check
          %p284 = pneg %p161
        $region26: #{tpu_custom_call.1} parent=11 // pred_check_branch
          %286 = sbr.rel (%p284) target = $region28
        $region27: #{tpu_custom_call.1} parent=11 // pred_region
          %s288 = ssub.s32 4096, 4096
          %289 = vsyncadd [#allocation9], %s288
          %s290 = sshll.u32 [#allocation8], 4
          %s291 = int_to_ptr.vmem [resolvable:$true] %s290
          %296 = dma.hbm_to_vmem [thread:$0]  %s5, 4096, %s291, [#allocation9], 128, 128, 8
        $region28: #{tpu_custom_call.1} parent=11 // pred_fallthru
          _
        // Predicated region
        $region29: #{tpu_custom_call.1} parent=11 // pred_check
          %p297 = pneg %p182
        $region30: #{tpu_custom_call.1} parent=11 // pred_check_branch
          %299 = sbr.rel (%p297) target = $region32
        $region31: #{tpu_custom_call.1} parent=11 // pred_region
          _
        $region32: #{tpu_custom_call.1} parent=11 // pred_fallthru
          _
        // Predicated region
        $region33: #{tpu_custom_call.1} parent=11 // pred_check
          %p300 = pneg %p203
        $region34: #{tpu_custom_call.1} parent=11 // pred_check_branch
          %302 = sbr.rel (%p300) target = $region36
        $region35: #{tpu_custom_call.1} parent=11 // pred_region
          _
        $region36: #{tpu_custom_call.1} parent=11 // pred_fallthru
          _
        // Predicated region
        $region37: #{tpu_custom_call.1} parent=11 // pred_check
          %p303 = pneg %p224
        $region38: #{tpu_custom_call.1} parent=11 // pred_check_branch
          %305 = sbr.rel (%p303) target = $region40
        $region39: #{tpu_custom_call.1} parent=11 // pred_region
          %s307 = ssub.s32 2048, 2048
          %308 = vsyncadd [#allocation9], %s307
          %s309 = sshll.u32 [#allocation10], 4
          %s310 = int_to_ptr.vmem [resolvable:$true] %s309
          %315 = dma.hbm_to_vmem [thread:$0]  %s8, 2048, %s310, [#allocation9], 128, 128, 8
        $region40: #{tpu_custom_call.1} parent=11 // pred_fallthru
          _
      $region12: #{tpu_custom_call.1} parent=5 // pred_fallthru
        _
      %p316 = scmp.lt.s32.totalorder %s25, 4
      // Predicated region
      $region41: #{tpu_custom_call.1} parent=5 // pred_check
        %p317 = pneg %p316
      $region42: #{tpu_custom_call.1} parent=5 // pred_check_branch
        %319 = sbr.rel (%p317) target = $region44
      $region43: #{tpu_custom_call.1} parent=5 // pred_region
        // Predicated region
        $region45: #{tpu_custom_call.1} parent=43 // pred_check
          %p320 = pneg %p45
        $region46: #{tpu_custom_call.1} parent=43 // pred_check_branch
          %322 = sbr.rel (%p320) target = $region48
        $region47: #{tpu_custom_call.1} parent=43 // pred_region
          %s323 = sand.u32 %s35, 1
          %s324 = scalar_lea.sflag [#allocation3], %s323
          %s325 = sand.u32 %s35, 1
          %s326 = smul.addr %s325, 64
          %s327 = scalar_lea.vmem [#allocation2], %s326
          %s328 = smul.u32 8, %s25
          %s330 = ssub.s32 1024, 1024
          %331 = vsyncadd %s324, %s330
          %s332 = smul.addr %s328, 128
          %s333 = scalar_lea.hbm %s0, %s332
          %s334 = sshll.u32 %s327, 4
          %s335 = int_to_ptr.vmem [resolvable:$true] %s334
          %340 = dma.hbm_to_vmem [thread:$0]  %s333, 1024, %s335, %s324, 128, 128, 8
        $region48: #{tpu_custom_call.1} parent=43 // pred_fallthru
          _
        // Predicated region
        $region49: #{tpu_custom_call.1} parent=43 // pred_check
          %p341 = pneg %p71
        $region50: #{tpu_custom_call.1} parent=43 // pred_check_branch
          %343 = sbr.rel (%p341) target = $region52
        $region51: #{tpu_custom_call.1} parent=43 // pred_region
          %s344 = sand.u32 %s25, 1
          %s345 = scalar_lea.sflag [#allocation6], %s344
          %s346 = sand.u32 %s61, 1
          %s347 = smul.addr %s346, 128
          %s348 = scalar_lea.vmem [#allocation5], %s347
          %s349 = smul.u32 8, %s25
          %s351 = ssub.s32 2048, 2048
          %352 = vsyncadd %s345, %s351
          %s353 = smul.addr %s349, 2
          %s354 = smul.addr %s353, 128
          %s355 = scalar_lea.hbm %s1, %s354
          %s356 = sshll.u32 %s348, 4
          %s357 = int_to_ptr.vmem [resolvable:$true] %s356
          %362 = dma.hbm_to_vmem [thread:$0]  %s355, 2048, %s357, %s345, 256, 256, 16
        $region52: #{tpu_custom_call.1} parent=43 // pred_fallthru
          _
      $region44: #{tpu_custom_call.1} parent=5 // pred_fallthru
        _
      %p363 = scmp.le.s32.totalorder 1, %s25
      %p364 = scmp.lt.s32.totalorder %s25, 5
      %p365 = pnand %p363, %p364
      %p366 = pneg %p365
      // Predicated region
      $region53: #{tpu_custom_call.1} parent=5 // pred_check
        _
      $region54: #{tpu_custom_call.1} parent=5 // pred_check_branch
        %368 = sbr.rel (%p365) target = $region56
      $region55: #{tpu_custom_call.1} parent=5 // pred_region
        %s369 = ssub.s32 %s25, 1
        %s370 = sand.u32 %s38, 1
        %s371 = scalar_lea.sflag [#allocation3], %s370
        %s372 = sand.u32 %s38, 1
        %s373 = smul.addr %s372, 64
        %s374 = scalar_lea.vmem [#allocation2], %s373
        // Predicated region
        $region57: #{tpu_custom_call.1} parent=55 // pred_check
          %p375 = pneg %p51
        $region58: #{tpu_custom_call.1} parent=55 // pred_check_branch
          %377 = sbr.rel (%p375) target = $region60
        $region59: #{tpu_custom_call.1} parent=55 // pred_region
          %378 = dma.done %s371, 1024
        $region60: #{tpu_custom_call.1} parent=55 // pred_fallthru
          _
        %s379 = sand.u32 %s30, 1
        %s380 = scalar_lea.sflag [#allocation6], %s379
        %s381 = sand.u32 %s64, 1
        %s382 = smul.addr %s381, 128
        %s383 = scalar_lea.vmem [#allocation5], %s382
        // Predicated region
        $region61: #{tpu_custom_call.1} parent=55 // pred_check
          %p384 = pneg %p77
        $region62: #{tpu_custom_call.1} parent=55 // pred_check_branch
          %386 = sbr.rel (%p384) target = $region64
        $region63: #{tpu_custom_call.1} parent=55 // pred_region
          %387 = dma.done %s380, 2048
        $region64: #{tpu_custom_call.1} parent=55 // pred_fallthru
          _
        // Predicated region
        $region65: #{tpu_custom_call.1} parent=55 // pred_check
          %p388 = pneg %p140
        $region66: #{tpu_custom_call.1} parent=55 // pred_check_branch
          %390 = sbr.rel (%p388) target = $region68
        $region67: #{tpu_custom_call.1} parent=55 // pred_region
          %391 = dma.done [#allocation6], 4096
        $region68: #{tpu_custom_call.1} parent=55 // pred_fallthru
          _
        // Predicated region
        $region69: #{tpu_custom_call.1} parent=55 // pred_check
          %p392 = pneg %p161
        $region70: #{tpu_custom_call.1} parent=55 // pred_check_branch
          %394 = sbr.rel (%p392) target = $region72
        $region71: #{tpu_custom_call.1} parent=55 // pred_region
          %395 = dma.done [#allocation9], 4096
        $region72: #{tpu_custom_call.1} parent=55 // pred_fallthru
          _
        // Predicated region
        $region73: #{tpu_custom_call.1} parent=55 // pred_check
          %p396 = pneg %p224
        $region74: #{tpu_custom_call.1} parent=55 // pred_check_branch
          %398 = sbr.rel (%p396) target = $region76
        $region75: #{tpu_custom_call.1} parent=55 // pred_region
          %399 = dma.done [#allocation9], 2048
        $region76: #{tpu_custom_call.1} parent=55 // pred_fallthru
          _
        %s400 = sand.u32 %s38, 1
        %s401 = scalar_lea.sflag [#allocation3], %s400
        %s402 = sand.u32 %s38, 1
        %s403 = smul.addr %s402, 64
        %s404 = scalar_lea.vmem [#allocation2], %s403
        %p405 = pneg %p51
        %p406 = pneg %p48
        %s407 = sand.u32 %s30, 1
        %s408 = scalar_lea.sflag [#allocation6], %s407
        %s409 = sand.u32 %s64, 1
        %s410 = smul.addr %s409, 128
        %s411 = scalar_lea.vmem [#allocation5], %s410
        %p412 = pneg %p77
        %p413 = pneg %p74
        %p414 = pneg %p98
        %p415 = pneg %p95
        %p416 = pneg %p119
        %p417 = pneg %p116
        %p418 = pneg %p140
        %p419 = pneg %p137
        %p420 = pneg %p161
        %p421 = pneg %p158
        %p422 = pneg %p182
        %p423 = pneg %p179
        %p424 = pneg %p203
        %p425 = pneg %p200
        %p426 = pneg %p224
        %p427 = pneg %p221
        %p428 = pneg %p250
        %p429 = pneg %p247
        %s430 = sand.u32 %s237, 1
        %s431 = scalar_lea.sflag [#allocation4], %s430
        %s432 = sand.u32 %s237, 1
        %s433 = smul.addr %s432, 64
        %s434 = scalar_lea.vmem [#allocation11], %s433
        %s435 = smul.u32 8, %s30
        %s436 = smul.u32 8, %s30
        %s437 = smul.u32 8, %s30
        %v438 = vld [vmem:[%s374] sm:$0xff]
        %v439 = vld [vmem:[%s374 + $0x8] sm:$0xff]
        %v440 = vld [vmem:[%s374 + $0x10] sm:$0xff]
        %v441 = vld [vmem:[%s374 + $0x18] sm:$0xff]
        %v442 = vld [vmem:[%s374 + $0x20] sm:$0xff]
        %v443 = vld [vmem:[%s374 + $0x28] sm:$0xff]
        %v444 = vld [vmem:[%s374 + $0x30] sm:$0xff]
        %v445 = vld [vmem:[%s374 + $0x38] sm:$0xff]
        %v446 = vld [vmem:[#allocation10] sm:$0xff]
        %v447 = vld [vmem:[#allocation10 + $0x8] sm:$0xff]
        %v448 = vld [vmem:[#allocation10 + $0x10] sm:$0xff]
        %v449 = vld [vmem:[#allocation10 + $0x18] sm:$0xff]
        %v450 = vld [vmem:[#allocation10 + $0x20] sm:$0xff]
        %v451 = vld [vmem:[#allocation10 + $0x28] sm:$0xff]
        %v452 = vld [vmem:[#allocation10 + $0x30] sm:$0xff]
        %v453 = vld [vmem:[#allocation10 + $0x38] sm:$0xff]
        %v454 = vld [vmem:[#allocation10 + $0x40] sm:$0xff]
        %v455 = vld [vmem:[#allocation10 + $0x48] sm:$0xff]
        %v456 = vld [vmem:[#allocation10 + $0x50] sm:$0xff]
        %v457 = vld [vmem:[#allocation10 + $0x58] sm:$0xff]
        %v458 = vld [vmem:[#allocation10 + $0x60] sm:$0xff]
        %v459 = vld [vmem:[#allocation10 + $0x68] sm:$0xff]
        %v460 = vld [vmem:[#allocation10 + $0x70] sm:$0xff]
        %v461 = vld [vmem:[#allocation10 + $0x78] sm:$0xff]
        %462 = vmatprep.subr.mxu0 0.0
        %v463 = vand.u32 %v446, 4294901760
        %464 = vmatpush1.msra.mxu0 %v463
        %465 = vmatprep.subr.mxu0 0.0
        %v466 = vand.u32 %v447, 4294901760
        %467 = vmatpush1.msra.mxu0 %v466
        %468 = vmatprep.subr.mxu0 0.0
        %v469 = vand.u32 %v448, 4294901760
        %470 = vmatpush1.msra.mxu0 %v469
        %471 = vmatprep.subr.mxu0 0.0
        %v472 = vand.u32 %v449, 4294901760
        %473 = vmatpush1.msra.mxu0 %v472
        %474 = vmatprep.subr.mxu0 0.0
        %v475 = vand.u32 %v450, 4294901760
        %476 = vmatpush1.msra.mxu0 %v475
        %477 = vmatprep.subr.mxu0 0.0
        %v478 = vand.u32 %v451, 4294901760
        %479 = vmatpush1.msra.mxu0 %v478
        %480 = vmatprep.subr.mxu0 0.0
        %v481 = vand.u32 %v452, 4294901760
        %482 = vmatpush1.msra.mxu0 %v481
        %483 = vmatprep.subr.mxu0 0.0
        %v484 = vand.u32 %v453, 4294901760
        %485 = vmatpush1.msra.mxu0 %v484
        %486 = vmatprep.subr.mxu0 0.0
        %v487 = vand.u32 %v454, 4294901760
        %488 = vmatpush1.msra.mxu0 %v487
        %489 = vmatprep.subr.mxu0 0.0
        %v490 = vand.u32 %v455, 4294901760
        %491 = vmatpush1.msra.mxu0 %v490
        %492 = vmatprep.subr.mxu0 0.0
        %v493 = vand.u32 %v456, 4294901760
        %494 = vmatpush1.msra.mxu0 %v493
        %495 = vmatprep.subr.mxu0 0.0
        %v496 = vand.u32 %v457, 4294901760
        %497 = vmatpush1.msra.mxu0 %v496
        %498 = vmatprep.subr.mxu0 0.0
        %v499 = vand.u32 %v458, 4294901760
        %500 = vmatpush1.msra.mxu0 %v499
        %501 = vmatprep.subr.mxu0 0.0
        %v502 = vand.u32 %v459, 4294901760
        %503 = vmatpush1.msra.mxu0 %v502
        %504 = vmatprep.subr.mxu0 0.0
        %v505 = vand.u32 %v460, 4294901760
        %506 = vmatpush1.msra.mxu0 %v505
        %507 = vmatprep.subr.mxu0 0.0
        %v508 = vand.u32 %v461, 4294901760
        %509 = vmatpush1.msra.mxu0 %v508
        %510 = vmatprep.subr.mxu0 0.0
        %511 = vmatpush1.msra.mxu0 0.0
        %512 = vmatprep.subr.mxu0 0.0
        %513 = vmatpush1.msra.mxu0 0.0
        %514 = vmatprep.subr.mxu0 0.0
        %515 = vmatpush1.msra.mxu0 0.0
        %516 = vmatprep.subr.mxu0 0.0
        %517 = vmatpush1.msra.mxu0 0.0
        %518 = vmatprep.subr.mxu0 0.0
        %519 = vmatpush1.msra.mxu0 0.0
        %520 = vmatprep.subr.mxu0 0.0
        %521 = vmatpush1.msra.mxu0 0.0
        %522 = vmatprep.subr.mxu0 0.0
        %523 = vmatpush1.msra.mxu0 0.0
        %524 = vmatprep.subr.mxu0 0.0
        %525 = vmatpush1.msra.mxu0 0.0
        %526 = vmatprep.subr.mxu0 0.0
        %527 = vmatpush1.msra.mxu0 0.0
        %528 = vmatprep.subr.mxu0 0.0
        %529 = vmatpush1.msra.mxu0 0.0
        %530 = vmatprep.subr.mxu0 0.0
        %531 = vmatpush1.msra.mxu0 0.0
        %532 = vmatprep.subr.mxu0 0.0
        %533 = vmatpush1.msra.mxu0 0.0
        %534 = vmatprep.subr.mxu0 0.0
        %535 = vmatpush1.msra.mxu0 0.0
        %536 = vmatprep.subr.mxu0 0.0
        %537 = vmatpush1.msra.mxu0 0.0
        %538 = vmatprep.subr.mxu0 0.0
        %539 = vmatpush1.msra.mxu0 0.0
        %540 = vmatprep.subr.mxu0 0.0
        %541 = vmatpush1.msra.mxu0 0.0
        %542 = vmatprep.mubr.f32.mxu0 0.0
        %v543 = vand.u32 %v438, 4294901760
        %v544 = vsub.f32 %v438, %v543
        %v545 = vand.u32 %v544, 4294901760
        %v546 = vsub.f32 %v544, %v545
        %v547 = vand.u32 %v546, 4294901760
        %548 = vmatmul.mubr.f32.gmra.mrb[0].mxu0 %v547
        %v549 = vpop.f32.mrb[0].mxu0
        %v550 = vadd.f32 0.0, %v549
        %v551 = vpop.f32.mrb[0].mxu0
        %552 = vmatprep.mubr.f32.mxu0 0.0
        %v553 = vand.u32 %v439, 4294901760
        %v554 = vsub.f32 %v439, %v553
        %v555 = vand.u32 %v554, 4294901760
        %v556 = vsub.f32 %v554, %v555
        %v557 = vand.u32 %v556, 4294901760
        %558 = vmatmul.mubr.f32.gmra.mrb[0].mxu0 %v557
        %v559 = vpop.f32.mrb[0].mxu0
        %v560 = vadd.f32 0.0, %v559
        %v561 = vpop.f32.mrb[0].mxu0
        %562 = vmatprep.mubr.f32.mxu0 0.0
        %v563 = vand.u32 %v440, 4294901760
        %v564 = vsub.f32 %v440, %v563
        %v565 = vand.u32 %v564, 4294901760
        %v566 = vsub.f32 %v564, %v565
        %v567 = vand.u32 %v566, 4294901760
        %568 = vmatmul.mubr.f32.gmra.mrb[0].mxu0 %v567
        %v569 = vpop.f32.mrb[0].mxu0
        %v570 = vadd.f32 0.0, %v569
        %v571 = vpop.f32.mrb[0].mxu0
        %572 = vmatprep.mubr.f32.mxu0 0.0
        %v573 = vand.u32 %v441, 4294901760
        %v574 = vsub.f32 %v441, %v573
        %v575 = vand.u32 %v574, 4294901760
        %v576 = vsub.f32 %v574, %v575
        %v577 = vand.u32 %v576, 4294901760
        %578 = vmatmul.mubr.f32.gmra.mrb[0].mxu0 %v577
        %v579 = vpop.f32.mrb[0].mxu0
        %v580 = vadd.f32 0.0, %v579
        %v581 = vpop.f32.mrb[0].mxu0
        %582 = vmatprep.mubr.f32.mxu0 0.0
        %v583 = vand.u32 %v442, 4294901760
        %v584 = vsub.f32 %v442, %v583
        %v585 = vand.u32 %v584, 4294901760
        %v586 = vsub.f32 %v584, %v585
        %v587 = vand.u32 %v586, 4294901760
        %588 = vmatmul.mubr.f32.gmra.mrb[0].mxu0 %v587
        %v589 = vpop.f32.mrb[0].mxu0
        %v590 = vadd.f32 0.0, %v589
        %v591 = vpop.f32.mrb[0].mxu0
        %592 = vmatprep.mubr.f32.mxu0 0.0
        %v593 = vand.u32 %v443, 4294901760
        %v594 = vsub.f32 %v443, %v593
        %v595 = vand.u32 %v594, 4294901760
        %v596 = vsub.f32 %v594, %v595
        %v597 = vand.u32 %v596, 4294901760
        %598 = vmatmul.mubr.f32.gmra.mrb[0].mxu0 %v597
        %v599 = vpop.f32.mrb[0].mxu0
        %v600 = vadd.f32 0.0, %v599
        %v601 = vpop.f32.mrb[0].mxu0
        %602 = vmatprep.mubr.f32.mxu0 0.0
        %v603 = vand.u32 %v444, 4294901760
        %v604 = vsub.f32 %v444, %v603
        %v605 = vand.u32 %v604, 4294901760
        %v606 = vsub.f32 %v604, %v605
        %v607 = vand.u32 %v606, 4294901760
        %608 = vmatmul.mubr.f32.gmra.mrb[0].mxu0 %v607
        %v609 = vpop.f32.mrb[0].mxu0
        %v610 = vadd.f32 0.0, %v609
        %v611 = vpop.f32.mrb[0].mxu0
        %612 = vmatprep.mubr.f32.mxu0 0.0
        %v613 = vand.u32 %v445, 4294901760
        %v614 = vsub.f32 %v445, %v613
        %v615 = vand.u32 %v614, 4294901760
        %v616 = vsub.f32 %v614, %v615
        %v617 = vand.u32 %v616, 4294901760
        %618 = vmatmul.mubr.f32.gmra.mrb[0].mxu0 %v617
        %v619 = vpop.f32.mrb[0].mxu0
        %v620 = vadd.f32 0.0, %v619
        %v621 = vpop.f32.mrb[0].mxu0
        %622 = vdwg.mxu0
        %623 = vmatprep.subr.mxu0 0.0
        %v624 = vand.u32 %v446, 4294901760
        %v625 = vsub.f32 %v446, %v624
        %v626 = vand.u32 %v625, 4294901760
        %v627 = vsub.f32 %v625, %v626
        %v628 = vand.u32 %v627, 4294901760
        %629 = vmatpush1.msra.mxu0 %v628
        %630 = vmatprep.subr.mxu0 0.0
        %v631 = vand.u32 %v447, 4294901760
        %v632 = vsub.f32 %v447, %v631
        %v633 = vand.u32 %v632, 4294901760
        %v634 = vsub.f32 %v632, %v633
        %v635 = vand.u32 %v634, 4294901760
        %636 = vmatpush1.msra.mxu0 %v635
        %637 = vmatprep.subr.mxu0 0.0
        %v638 = vand.u32 %v448, 4294901760
        %v639 = vsub.f32 %v448, %v638
        %v640 = vand.u32 %v639, 4294901760
        %v641 = vsub.f32 %v639, %v640
        %v642 = vand.u32 %v641, 4294901760
        %643 = vmatpush1.msra.mxu0 %v642
        %644 = vmatprep.subr.mxu0 0.0
        %v645 = vand.u32 %v449, 4294901760
        %v646 = vsub.f32 %v449, %v645
        %v647 = vand.u32 %v646, 4294901760
        %v648 = vsub.f32 %v646, %v647
        %v649 = vand.u32 %v648, 4294901760
        %650 = vmatpush1.msra.mxu0 %v649
        %651 = vmatprep.subr.mxu0 0.0
        %v652 = vand.u32 %v450, 4294901760
        %v653 = vsub.f32 %v450, %v652
        %v654 = vand.u32 %v653, 4294901760
        %v655 = vsub.f32 %v653, %v654
        %v656 = vand.u32 %v655, 4294901760
        %657 = vmatpush1.msra.mxu0 %v656
        %658 = vmatprep.subr.mxu0 0.0
        %v659 = vand.u32 %v451, 4294901760
        %v660 = vsub.f32 %v451, %v659
        %v661 = vand.u32 %v660, 4294901760
        %v662 = vsub.f32 %v660, %v661
        %v663 = vand.u32 %v662, 4294901760
        %664 = vmatpush1.msra.mxu0 %v663
        %665 = vmatprep.subr.mxu0 0.0
        %v666 = vand.u32 %v452, 4294901760
        %v667 = vsub.f32 %v452, %v666
        %v668 = vand.u32 %v667, 4294901760
        %v669 = vsub.f32 %v667, %v668
        %v670 = vand.u32 %v669, 4294901760
        %671 = vmatpush1.msra.mxu0 %v670
        %672 = vmatprep.subr.mxu0 0.0
        %v673 = vand.u32 %v453, 4294901760
        %v674 = vsub.f32 %v453, %v673
        %v675 = vand.u32 %v674, 4294901760
        %v676 = vsub.f32 %v674, %v675
        %v677 = vand.u32 %v676, 4294901760
        %678 = vmatpush1.msra.mxu0 %v677
        %679 = vmatprep.subr.mxu0 0.0
        %v680 = vand.u32 %v454, 4294901760
        %v681 = vsub.f32 %v454, %v680
        %v682 = vand.u32 %v681, 4294901760
        %v683 = vsub.f32 %v681, %v682
        %v684 = vand.u32 %v683, 4294901760
        %685 = vmatpush1.msra.mxu0 %v684
        %686 = vmatprep.subr.mxu0 0.0
        %v687 = vand.u32 %v455, 4294901760
        %v688 = vsub.f32 %v455, %v687
        %v689 = vand.u32 %v688, 4294901760
        %v690 = vsub.f32 %v688, %v689
        %v691 = vand.u32 %v690, 4294901760
        %692 = vmatpush1.msra.mxu0 %v691
        %693 = vmatprep.subr.mxu0 0.0
        %v694 = vand.u32 %v456, 4294901760
        %v695 = vsub.f32 %v456, %v694
        %v696 = vand.u32 %v695, 4294901760
        %v697 = vsub.f32 %v695, %v696
        %v698 = vand.u32 %v697, 4294901760
        %699 = vmatpush1.msra.mxu0 %v698
        %700 = vmatprep.subr.mxu0 0.0
        %v701 = vand.u32 %v457, 4294901760
        %v702 = vsub.f32 %v457, %v701
        %v703 = vand.u32 %v702, 4294901760
        %v704 = vsub.f32 %v702, %v703
        %v705 = vand.u32 %v704, 4294901760
        %706 = vmatpush1.msra.mxu0 %v705
        %707 = vmatprep.subr.mxu0 0.0
        %v708 = vand.u32 %v458, 4294901760
        %v709 = vsub.f32 %v458, %v708
        %v710 = vand.u32 %v709, 4294901760
        %v711 = vsub.f32 %v709, %v710
        %v712 = vand.u32 %v711, 4294901760
        %713 = vmatpush1.msra.mxu0 %v712
        %714 = vmatprep.subr.mxu0 0.0
        %v715 = vand.u32 %v459, 4294901760
        %v716 = vsub.f32 %v459, %v715
        %v717 = vand.u32 %v716, 4294901760
        %v718 = vsub.f32 %v716, %v717
        %v719 = vand.u32 %v718, 4294901760
        %720 = vmatpush1.msra.mxu0 %v719
        %721 = vmatprep.subr.mxu0 0.0
        %v722 = vand.u32 %v460, 4294901760
        %v723 = vsub.f32 %v460, %v722
        %v724 = vand.u32 %v723, 4294901760
        %v725 = vsub.f32 %v723, %v724
        %v726 = vand.u32 %v725, 4294901760
        %727 = vmatpush1.msra.mxu0 %v726
        %728 = vmatprep.subr.mxu0 0.0
        %v729 = vand.u32 %v461, 4294901760
        %v730 = vsub.f32 %v461, %v729
        %v731 = vand.u32 %v730, 4294901760
        %v732 = vsub.f32 %v730, %v731
        %v733 = vand.u32 %v732, 4294901760
        %734 = vmatpush1.msra.mxu0 %v733
        %735 = vmatprep.subr.mxu0 0.0
        %736 = vmatpush1.msra.mxu0 0.0
        %737 = vmatprep.subr.mxu0 0.0
        %738 = vmatpush1.msra.mxu0 0.0
        %739 = vmatprep.subr.mxu0 0.0
        %740 = vmatpush1.msra.mxu0 0.0
        %741 = vmatprep.subr.mxu0 0.0
        %742 = vmatpush1.msra.mxu0 0.0
        %743 = vmatprep.subr.mxu0 0.0
        %744 = vmatpush1.msra.mxu0 0.0
        %745 = vmatprep.subr.mxu0 0.0
        %746 = vmatpush1.msra.mxu0 0.0
        %747 = vmatprep.subr.mxu0 0.0
        %748 = vmatpush1.msra.mxu0 0.0
        %749 = vmatprep.subr.mxu0 0.0
        %750 = vmatpush1.msra.mxu0 0.0
        %751 = vmatprep.subr.mxu0 0.0
        %752 = vmatpush1.msra.mxu0 0.0
        %753 = vmatprep.subr.mxu0 0.0
        %754 = vmatpush1.msra.mxu0 0.0
        %755 = vmatprep.subr.mxu0 0.0
        %756 = vmatpush1.msra.mxu0 0.0
        %757 = vmatprep.subr.mxu0 0.0
        %758 = vmatpush1.msra.mxu0 0.0
        %759 = vmatprep.subr.mxu0 0.0
        %760 = vmatpush1.msra.mxu0 0.0
        %761 = vmatprep.subr.mxu0 0.0
        %762 = vmatpush1.msra.mxu0 0.0
        %763 = vmatprep.subr.mxu0 0.0
        %764 = vmatpush1.msra.mxu0 0.0
        %765 = vmatprep.subr.mxu0 0.0
        %766 = vmatpush1.msra.mxu0 0.0
        %767 = vmatprep.mubr.f32.mxu0 0.0
        %v768 = vand.u32 %v438, 4294901760
        %769 = vmatmul.mubr.f32.gmra.mrb[0].mxu0 %v768
        %v770 = vpop.f32.mrb[0].mxu0
        %v771 = vadd.f32 %v550, %v770
        %v772 = vpop.f32.mrb[0].mxu0
        %773 = vmatprep.mubr.f32.mxu0 0.0
        %v774 = vand.u32 %v439, 4294901760
        %775 = vmatmul.mubr.f32.gmra.mrb[0].mxu0 %v774
        %v776 = vpop.f32.mrb[0].mxu0
        %v777 = vadd.f32 %v560, %v776
        %v778 = vpop.f32.mrb[0].mxu0
        %779 = vmatprep.mubr.f32.mxu0 0.0
        %v780 = vand.u32 %v440, 4294901760
        %781 = vmatmul.mubr.f32.gmra.mrb[0].mxu0 %v780
        %v782 = vpop.f32.mrb[0].mxu0
        %v783 = vadd.f32 %v570, %v782
        %v784 = vpop.f32.mrb[0].mxu0
        %785 = vmatprep.mubr.f32.mxu0 0.0
        %v786 = vand.u32 %v441, 4294901760
        %787 = vmatmul.mubr.f32.gmra.mrb[0].mxu0 %v786
        %v788 = vpop.f32.mrb[0].mxu0
        %v789 = vadd.f32 %v580, %v788
        %v790 = vpop.f32.mrb[0].mxu0
        %791 = vmatprep.mubr.f32.mxu0 0.0
        %v792 = vand.u32 %v442, 4294901760
        %793 = vmatmul.mubr.f32.gmra.mrb[0].mxu0 %v792
        %v794 = vpop.f32.mrb[0].mxu0
        %v795 = vadd.f32 %v590, %v794
        %v796 = vpop.f32.mrb[0].mxu0
        %797 = vmatprep.mubr.f32.mxu0 0.0
        %v798 = vand.u32 %v443, 4294901760
        %799 = vmatmul.mubr.f32.gmra.mrb[0].mxu0 %v798
        %v800 = vpop.f32.mrb[0].mxu0
        %v801 = vadd.f32 %v600, %v800
        %v802 = vpop.f32.mrb[0].mxu0
        %803 = vmatprep.mubr.f32.mxu0 0.0
        %v804 = vand.u32 %v444, 4294901760
        %805 = vmatmul.mubr.f32.gmra.mrb[0].mxu0 %v804
        %v806 = vpop.f32.mrb[0].mxu0
        %v807 = vadd.f32 %v610, %v806
        %v808 = vpop.f32.mrb[0].mxu0
        %809 = vmatprep.mubr.f32.mxu0 0.0
        %v810 = vand.u32 %v445, 4294901760
        %811 = vmatmul.mubr.f32.gmra.mrb[0].mxu0 %v810
        %v812 = vpop.f32.mrb[0].mxu0
        %v813 = vadd.f32 %v620, %v812
        %v814 = vpop.f32.mrb[0].mxu0
        %815 = vdwg.mxu0
        %816 = vmatprep.subr.mxu0 0.0
        %v817 = vand.u32 %v446, 4294901760
        %v818 = vsub.f32 %v446, %v817
        %819 = vmatpush1.msra.mxu0 %v818
        %820 = vmatprep.subr.mxu0 0.0
        %v821 = vand.u32 %v447, 4294901760
        %v822 = vsub.f32 %v447, %v821
        %823 = vmatpush1.msra.mxu0 %v822
        %824 = vmatprep.subr.mxu0 0.0
        %v825 = vand.u32 %v448, 4294901760
        %v826 = vsub.f32 %v448, %v825
        %827 = vmatpush1.msra.mxu0 %v826
        %828 = vmatprep.subr.mxu0 0.0
        %v829 = vand.u32 %v449, 4294901760
        %v830 = vsub.f32 %v449, %v829
        %831 = vmatpush1.msra.mxu0 %v830
        %832 = vmatprep.subr.mxu0 0.0
        %v833 = vand.u32 %v450, 4294901760
        %v834 = vsub.f32 %v450, %v833
        %835 = vmatpush1.msra.mxu0 %v834
        %836 = vmatprep.subr.mxu0 0.0
        %v837 = vand.u32 %v451, 4294901760
        %v838 = vsub.f32 %v451, %v837
        %839 = vmatpush1.msra.mxu0 %v838
        %840 = vmatprep.subr.mxu0 0.0
        %v841 = vand.u32 %v452, 4294901760
        %v842 = vsub.f32 %v452, %v841
        %843 = vmatpush1.msra.mxu0 %v842
        %844 = vmatprep.subr.mxu0 0.0
        %v845 = vand.u32 %v453, 4294901760
        %v846 = vsub.f32 %v453, %v845
        %847 = vmatpush1.msra.mxu0 %v846
        %848 = vmatprep.subr.mxu0 0.0
        %v849 = vand.u32 %v454, 4294901760
        %v850 = vsub.f32 %v454, %v849
        %851 = vmatpush1.msra.mxu0 %v850
        %852 = vmatprep.subr.mxu0 0.0
        %v853 = vand.u32 %v455, 4294901760
        %v854 = vsub.f32 %v455, %v853
        %855 = vmatpush1.msra.mxu0 %v854
        %856 = vmatprep.subr.mxu0 0.0
        %v857 = vand.u32 %v456, 4294901760
        %v858 = vsub.f32 %v456, %v857
        %859 = vmatpush1.msra.mxu0 %v858
        %860 = vmatprep.subr.mxu0 0.0
        %v861 = vand.u32 %v457, 4294901760
        %v862 = vsub.f32 %v457, %v861
        %863 = vmatpush1.msra.mxu0 %v862
        %864 = vmatprep.subr.mxu0 0.0
        %v865 = vand.u32 %v458, 4294901760
        %v866 = vsub.f32 %v458, %v865
        %867 = vmatpush1.msra.mxu0 %v866
        %868 = vmatprep.subr.mxu0 0.0
        %v869 = vand.u32 %v459, 4294901760
        %v870 = vsub.f32 %v459, %v869
        %871 = vmatpush1.msra.mxu0 %v870
        %872 = vmatprep.subr.mxu0 0.0
        %v873 = vand.u32 %v460, 4294901760
        %v874 = vsub.f32 %v460, %v873
        %875 = vmatpush1.msra.mxu0 %v874
        %876 = vmatprep.subr.mxu0 0.0
        %v877 = vand.u32 %v461, 4294901760
        %v878 = vsub.f32 %v461, %v877
        %879 = vmatpush1.msra.mxu0 %v878
        %880 = vmatprep.subr.mxu0 0.0
        %881 = vmatpush1.msra.mxu0 0.0
        %882 = vmatprep.subr.mxu0 0.0
        %883 = vmatpush1.msra.mxu0 0.0
        %884 = vmatprep.subr.mxu0 0.0
        %885 = vmatpush1.msra.mxu0 0.0
        %886 = vmatprep.subr.mxu0 0.0
        %887 = vmatpush1.msra.mxu0 0.0
        %888 = vmatprep.subr.mxu0 0.0
        %889 = vmatpush1.msra.mxu0 0.0
        %890 = vmatprep.subr.mxu0 0.0
        %891 = vmatpush1.msra.mxu0 0.0
        %892 = vmatprep.subr.mxu0 0.0
        %893 = vmatpush1.msra.mxu0 0.0
        %894 = vmatprep.subr.mxu0 0.0
        %895 = vmatpush1.msra.mxu0 0.0
        %896 = vmatprep.subr.mxu0 0.0
        %897 = vmatpush1.msra.mxu0 0.0
        %898 = vmatprep.subr.mxu0 0.0
        %899 = vmatpush1.msra.mxu0 0.0
        %900 = vmatprep.subr.mxu0 0.0
        %901 = vmatpush1.msra.mxu0 0.0
        %902 = vmatprep.subr.mxu0 0.0
        %903 = vmatpush1.msra.mxu0 0.0
        %904 = vmatprep.subr.mxu0 0.0
        %905 = vmatpush1.msra.mxu0 0.0
        %906 = vmatprep.subr.mxu0 0.0
        %907 = vmatpush1.msra.mxu0 0.0
        %908 = vmatprep.subr.mxu0 0.0
        %909 = vmatpush1.msra.mxu0 0.0
        %910 = vmatprep.subr.mxu0 0.0
        %911 = vmatpush1.msra.mxu0 0.0
        %912 = vmatprep.mubr.f32.mxu0 0.0
        %v913 = vand.u32 %v438, 4294901760
        %v914 = vsub.f32 %v438, %v913
        %915 = vmatmul.mubr.f32.gmra.mrb[0].mxu0 %v914
        %v916 = vpop.f32.mrb[0].mxu0
        %v917 = vadd.f32 %v771, %v916
        %v918 = vpop.f32.mrb[0].mxu0
        %919 = vmatprep.mubr.f32.mxu0 0.0
        %v920 = vand.u32 %v439, 4294901760
        %v921 = vsub.f32 %v439, %v920
        %922 = vmatmul.mubr.f32.gmra.mrb[0].mxu0 %v921
        %v923 = vpop.f32.mrb[0].mxu0
        %v924 = vadd.f32 %v777, %v923
        %v925 = vpop.f32.mrb[0].mxu0
        %926 = vmatprep.mubr.f32.mxu0 0.0
        %v927 = vand.u32 %v440, 4294901760
        %v928 = vsub.f32 %v440, %v927
        %929 = vmatmul.mubr.f32.gmra.mrb[0].mxu0 %v928
        %v930 = vpop.f32.mrb[0].mxu0
        %v931 = vadd.f32 %v783, %v930
        %v932 = vpop.f32.mrb[0].mxu0
        %933 = vmatprep.mubr.f32.mxu0 0.0
        %v934 = vand.u32 %v441, 4294901760
        %v935 = vsub.f32 %v441, %v934
        %936 = vmatmul.mubr.f32.gmra.mrb[0].mxu0 %v935
        %v937 = vpop.f32.mrb[0].mxu0
        %v938 = vadd.f32 %v789, %v937
        %v939 = vpop.f32.mrb[0].mxu0
        %940 = vmatprep.mubr.f32.mxu0 0.0
        %v941 = vand.u32 %v442, 4294901760
        %v942 = vsub.f32 %v442, %v941
        %943 = vmatmul.mubr.f32.gmra.mrb[0].mxu0 %v942
        %v944 = vpop.f32.mrb[0].mxu0
        %v945 = vadd.f32 %v795, %v944
        %v946 = vpop.f32.mrb[0].mxu0
        %947 = vmatprep.mubr.f32.mxu0 0.0
        %v948 = vand.u32 %v443, 4294901760
        %v949 = vsub.f32 %v443, %v948
        %950 = vmatmul.mubr.f32.gmra.mrb[0].mxu0 %v949
        %v951 = vpop.f32.mrb[0].mxu0
        %v952 = vadd.f32 %v801, %v951
        %v953 = vpop.f32.mrb[0].mxu0
        %954 = vmatprep.mubr.f32.mxu0 0.0
        %v955 = vand.u32 %v444, 4294901760
        %v956 = vsub.f32 %v444, %v955
        %957 = vmatmul.mubr.f32.gmra.mrb[0].mxu0 %v956
        %v958 = vpop.f32.mrb[0].mxu0
        %v959 = vadd.f32 %v807, %v958
        %v960 = vpop.f32.mrb[0].mxu0
        %961 = vmatprep.mubr.f32.mxu0 0.0
        %v962 = vand.u32 %v445, 4294901760
        %v963 = vsub.f32 %v445, %v962
        %964 = vmatmul.mubr.f32.gmra.mrb[0].mxu0 %v963
        %v965 = vpop.f32.mrb[0].mxu0
        %v966 = vadd.f32 %v813, %v965
        %v967 = vpop.f32.mrb[0].mxu0
        %968 = vdwg.mxu0
        %969 = vmatprep.subr.mxu0 0.0
        %v970 = vand.u32 %v446, 4294901760
        %971 = vmatpush1.msra.mxu0 %v970
        %972 = vmatprep.subr.mxu0 0.0
        %v973 = vand.u32 %v447, 4294901760
        %974 = vmatpush1.msra.mxu0 %v973
        %975 = vmatprep.subr.mxu0 0.0
        %v976 = vand.u32 %v448, 4294901760
        %977 = vmatpush1.msra.mxu0 %v976
        %978 = vmatprep.subr.mxu0 0.0
        %v979 = vand.u32 %v449, 4294901760
        %980 = vmatpush1.msra.mxu0 %v979
        %981 = vmatprep.subr.mxu0 0.0
        %v982 = vand.u32 %v450, 4294901760
        %983 = vmatpush1.msra.mxu0 %v982
        %984 = vmatprep.subr.mxu0 0.0
        %v985 = vand.u32 %v451, 4294901760
        %986 = vmatpush1.msra.mxu0 %v985
        %987 = vmatprep.subr.mxu0 0.0
        %v988 = vand.u32 %v452, 4294901760
        %989 = vmatpush1.msra.mxu0 %v988
        %990 = vmatprep.subr.mxu0 0.0
        %v991 = vand.u32 %v453, 4294901760
        %992 = vmatpush1.msra.mxu0 %v991
        %993 = vmatprep.subr.mxu0 0.0
        %v994 = vand.u32 %v454, 4294901760
        %995 = vmatpush1.msra.mxu0 %v994
        %996 = vmatprep.subr.mxu0 0.0
        %v997 = vand.u32 %v455, 4294901760
        %998 = vmatpush1.msra.mxu0 %v997
        %999 = vmatprep.subr.mxu0 0.0
        %v1000 = vand.u32 %v456, 4294901760
        %1001 = vmatpush1.msra.mxu0 %v1000
        %1002 = vmatprep.subr.mxu0 0.0
        %v1003 = vand.u32 %v457, 4294901760
        %1004 = vmatpush1.msra.mxu0 %v1003
        %1005 = vmatprep.subr.mxu0 0.0
        %v1006 = vand.u32 %v458, 4294901760
        %1007 = vmatpush1.msra.mxu0 %v1006
        %1008 = vmatprep.subr.mxu0 0.0
        %v1009 = vand.u32 %v459, 4294901760
        %1010 = vmatpush1.msra.mxu0 %v1009
        %1011 = vmatprep.subr.mxu0 0.0
        %v1012 = vand.u32 %v460, 4294901760
        %1013 = vmatpush1.msra.mxu0 %v1012
        %1014 = vmatprep.subr.mxu0 0.0
        %v1015 = vand.u32 %v461, 4294901760
        %1016 = vmatpush1.msra.mxu0 %v1015
        %1017 = vmatprep.subr.mxu0 0.0
        %1018 = vmatpush1.msra.mxu0 0.0
        %1019 = vmatprep.subr.mxu0 0.0
        %1020 = vmatpush1.msra.mxu0 0.0
        %1021 = vmatprep.subr.mxu0 0.0
        %1022 = vmatpush1.msra.mxu0 0.0
        %1023 = vmatprep.subr.mxu0 0.0
        %1024 = vmatpush1.msra.mxu0 0.0
        %1025 = vmatprep.subr.mxu0 0.0
        %1026 = vmatpush1.msra.mxu0 0.0
        %1027 = vmatprep.subr.mxu0 0.0
        %1028 = vmatpush1.msra.mxu0 0.0
        %1029 = vmatprep.subr.mxu0 0.0
        %1030 = vmatpush1.msra.mxu0 0.0
        %1031 = vmatprep.subr.mxu0 0.0
        %1032 = vmatpush1.msra.mxu0 0.0
        %1033 = vmatprep.subr.mxu0 0.0
        %1034 = vmatpush1.msra.mxu0 0.0
        %1035 = vmatprep.subr.mxu0 0.0
        %1036 = vmatpush1.msra.mxu0 0.0
        %1037 = vmatprep.subr.mxu0 0.0
        %1038 = vmatpush1.msra.mxu0 0.0
        %1039 = vmatprep.subr.mxu0 0.0
        %1040 = vmatpush1.msra.mxu0 0.0
        %1041 = vmatprep.subr.mxu0 0.0
        %1042 = vmatpush1.msra.mxu0 0.0
        %1043 = vmatprep.subr.mxu0 0.0
        %1044 = vmatpush1.msra.mxu0 0.0
        %1045 = vmatprep.subr.mxu0 0.0
        %1046 = vmatpush1.msra.mxu0 0.0
        %1047 = vmatprep.subr.mxu0 0.0
        %1048 = vmatpush1.msra.mxu0 0.0
        %1049 = vmatprep.mubr.f32.mxu0 0.0
        %v1050 = vand.u32 %v438, 4294901760
        %v1051 = vsub.f32 %v438, %v1050
        %v1052 = vand.u32 %v1051, 4294901760
        %1053 = vmatmul.mubr.f32.gmra.mrb[0].mxu0 %v1052
        %v1054 = vpop.f32.mrb[0].mxu0
        %v1055 = vadd.f32 %v917, %v1054
        %v1056 = vpop.f32.mrb[0].mxu0
        %1057 = vmatprep.mubr.f32.mxu0 0.0
        %v1058 = vand.u32 %v439, 4294901760
        %v1059 = vsub.f32 %v439, %v1058
        %v1060 = vand.u32 %v1059, 4294901760
        %1061 = vmatmul.mubr.f32.gmra.mrb[0].mxu0 %v1060
        %v1062 = vpop.f32.mrb[0].mxu0
        %v1063 = vadd.f32 %v924, %v1062
        %v1064 = vpop.f32.mrb[0].mxu0
        %1065 = vmatprep.mubr.f32.mxu0 0.0
        %v1066 = vand.u32 %v440, 4294901760
        %v1067 = vsub.f32 %v440, %v1066
        %v1068 = vand.u32 %v1067, 4294901760
        %1069 = vmatmul.mubr.f32.gmra.mrb[0].mxu0 %v1068
        %v1070 = vpop.f32.mrb[0].mxu0
        %v1071 = vadd.f32 %v931, %v1070
        %v1072 = vpop.f32.mrb[0].mxu0
        %1073 = vmatprep.mubr.f32.mxu0 0.0
        %v1074 = vand.u32 %v441, 4294901760
        %v1075 = vsub.f32 %v441, %v1074
        %v1076 = vand.u32 %v1075, 4294901760
        %1077 = vmatmul.mubr.f32.gmra.mrb[0].mxu0 %v1076
        %v1078 = vpop.f32.mrb[0].mxu0
        %v1079 = vadd.f32 %v938, %v1078
        %v1080 = vpop.f32.mrb[0].mxu0
        %1081 = vmatprep.mubr.f32.mxu0 0.0
        %v1082 = vand.u32 %v442, 4294901760
        %v1083 = vsub.f32 %v442, %v1082
        %v1084 = vand.u32 %v1083, 4294901760
        %1085 = vmatmul.mubr.f32.gmra.mrb[0].mxu0 %v1084
        %v1086 = vpop.f32.mrb[0].mxu0
        %v1087 = vadd.f32 %v945, %v1086
        %v1088 = vpop.f32.mrb[0].mxu0
        %1089 = vmatprep.mubr.f32.mxu0 0.0
        %v1090 = vand.u32 %v443, 4294901760
        %v1091 = vsub.f32 %v443, %v1090
        %v1092 = vand.u32 %v1091, 4294901760
        %1093 = vmatmul.mubr.f32.gmra.mrb[0].mxu0 %v1092
        %v1094 = vpop.f32.mrb[0].mxu0
        %v1095 = vadd.f32 %v952, %v1094
        %v1096 = vpop.f32.mrb[0].mxu0
        %1097 = vmatprep.mubr.f32.mxu0 0.0
        %v1098 = vand.u32 %v444, 4294901760
        %v1099 = vsub.f32 %v444, %v1098
        %v1100 = vand.u32 %v1099, 4294901760
        %1101 = vmatmul.mubr.f32.gmra.mrb[0].mxu0 %v1100
        %v1102 = vpop.f32.mrb[0].mxu0
        %v1103 = vadd.f32 %v959, %v1102
        %v1104 = vpop.f32.mrb[0].mxu0
        %1105 = vmatprep.mubr.f32.mxu0 0.0
        %v1106 = vand.u32 %v445, 4294901760
        %v1107 = vsub.f32 %v445, %v1106
        %v1108 = vand.u32 %v1107, 4294901760
        %1109 = vmatmul.mubr.f32.gmra.mrb[0].mxu0 %v1108
        %v1110 = vpop.f32.mrb[0].mxu0
        %v1111 = vadd.f32 %v966, %v1110
        %v1112 = vpop.f32.mrb[0].mxu0
        %1113 = vdwg.mxu0
        %1114 = vmatprep.subr.mxu0 0.0
        %v1115 = vand.u32 %v446, 4294901760
        %v1116 = vsub.f32 %v446, %v1115
        %v1117 = vand.u32 %v1116, 4294901760
        %1118 = vmatpush1.msra.mxu0 %v1117
        %1119 = vmatprep.subr.mxu0 0.0
        %v1120 = vand.u32 %v447, 4294901760
        %v1121 = vsub.f32 %v447, %v1120
        %v1122 = vand.u32 %v1121, 4294901760
        %1123 = vmatpush1.msra.mxu0 %v1122
        %1124 = vmatprep.subr.mxu0 0.0
        %v1125 = vand.u32 %v448, 4294901760
        %v1126 = vsub.f32 %v448, %v1125
        %v1127 = vand.u32 %v1126, 4294901760
        %1128 = vmatpush1.msra.mxu0 %v1127
        %1129 = vmatprep.subr.mxu0 0.0
        %v1130 = vand.u32 %v449, 4294901760
        %v1131 = vsub.f32 %v449, %v1130
        %v1132 = vand.u32 %v1131, 4294901760
        %1133 = vmatpush1.msra.mxu0 %v1132
        %1134 = vmatprep.subr.mxu0 0.0
        %v1135 = vand.u32 %v450, 4294901760
        %v1136 = vsub.f32 %v450, %v1135
        %v1137 = vand.u32 %v1136, 4294901760
        %1138 = vmatpush1.msra.mxu0 %v1137
        %1139 = vmatprep.subr.mxu0 0.0
        %v1140 = vand.u32 %v451, 4294901760
        %v1141 = vsub.f32 %v451, %v1140
        %v1142 = vand.u32 %v1141, 4294901760
        %1143 = vmatpush1.msra.mxu0 %v1142
        %1144 = vmatprep.subr.mxu0 0.0
        %v1145 = vand.u32 %v452, 4294901760
        %v1146 = vsub.f32 %v452, %v1145
        %v1147 = vand.u32 %v1146, 4294901760
        %1148 = vmatpush1.msra.mxu0 %v1147
        %1149 = vmatprep.subr.mxu0 0.0
        %v1150 = vand.u32 %v453, 4294901760
        %v1151 = vsub.f32 %v453, %v1150
        %v1152 = vand.u32 %v1151, 4294901760
        %1153 = vmatpush1.msra.mxu0 %v1152
        %1154 = vmatprep.subr.mxu0 0.0
        %v1155 = vand.u32 %v454, 4294901760
        %v1156 = vsub.f32 %v454, %v1155
        %v1157 = vand.u32 %v1156, 4294901760
        %1158 = vmatpush1.msra.mxu0 %v1157
        %1159 = vmatprep.subr.mxu0 0.0
        %v1160 = vand.u32 %v455, 4294901760
        %v1161 = vsub.f32 %v455, %v1160
        %v1162 = vand.u32 %v1161, 4294901760
        %1163 = vmatpush1.msra.mxu0 %v1162
        %1164 = vmatprep.subr.mxu0 0.0
        %v1165 = vand.u32 %v456, 4294901760
        %v1166 = vsub.f32 %v456, %v1165
        %v1167 = vand.u32 %v1166, 4294901760
        %1168 = vmatpush1.msra.mxu0 %v1167
        %1169 = vmatprep.subr.mxu0 0.0
        %v1170 = vand.u32 %v457, 4294901760
        %v1171 = vsub.f32 %v457, %v1170
        %v1172 = vand.u32 %v1171, 4294901760
        %1173 = vmatpush1.msra.mxu0 %v1172
        %1174 = vmatprep.subr.mxu0 0.0
        %v1175 = vand.u32 %v458, 4294901760
        %v1176 = vsub.f32 %v458, %v1175
        %v1177 = vand.u32 %v1176, 4294901760
        %1178 = vmatpush1.msra.mxu0 %v1177
        %1179 = vmatprep.subr.mxu0 0.0
        %v1180 = vand.u32 %v459, 4294901760
        %v1181 = vsub.f32 %v459, %v1180
        %v1182 = vand.u32 %v1181, 4294901760
        %1183 = vmatpush1.msra.mxu0 %v1182
        %1184 = vmatprep.subr.mxu0 0.0
        %v1185 = vand.u32 %v460, 4294901760
        %v1186 = vsub.f32 %v460, %v1185
        %v1187 = vand.u32 %v1186, 4294901760
        %1188 = vmatpush1.msra.mxu0 %v1187
        %1189 = vmatprep.subr.mxu0 0.0
        %v1190 = vand.u32 %v461, 4294901760
        %v1191 = vsub.f32 %v461, %v1190
        %v1192 = vand.u32 %v1191, 4294901760
        %1193 = vmatpush1.msra.mxu0 %v1192
        %1194 = vmatprep.subr.mxu0 0.0
        %1195 = vmatpush1.msra.mxu0 0.0
        %1196 = vmatprep.subr.mxu0 0.0
        %1197 = vmatpush1.msra.mxu0 0.0
        %1198 = vmatprep.subr.mxu0 0.0
        %1199 = vmatpush1.msra.mxu0 0.0
        %1200 = vmatprep.subr.mxu0 0.0
        %1201 = vmatpush1.msra.mxu0 0.0
        %1202 = vmatprep.subr.mxu0 0.0
        %1203 = vmatpush1.msra.mxu0 0.0
        %1204 = vmatprep.subr.mxu0 0.0
        %1205 = vmatpush1.msra.mxu0 0.0
        %1206 = vmatprep.subr.mxu0 0.0
        %1207 = vmatpush1.msra.mxu0 0.0
        %1208 = vmatprep.subr.mxu0 0.0
        %1209 = vmatpush1.msra.mxu0 0.0
        %1210 = vmatprep.subr.mxu0 0.0
        %1211 = vmatpush1.msra.mxu0 0.0
        %1212 = vmatprep.subr.mxu0 0.0
        %1213 = vmatpush1.msra.mxu0 0.0
        %1214 = vmatprep.subr.mxu0 0.0
        %1215 = vmatpush1.msra.mxu0 0.0
        %1216 = vmatprep.subr.mxu0 0.0
        %1217 = vmatpush1.msra.mxu0 0.0
        %1218 = vmatprep.subr.mxu0 0.0
        %1219 = vmatpush1.msra.mxu0 0.0
        %1220 = vmatprep.subr.mxu0 0.0
        %1221 = vmatpush1.msra.mxu0 0.0
        %1222 = vmatprep.subr.mxu0 0.0
        %1223 = vmatpush1.msra.mxu0 0.0
        %1224 = vmatprep.subr.mxu0 0.0
        %1225 = vmatpush1.msra.mxu0 0.0
        %1226 = vmatprep.mubr.f32.mxu0 0.0
        %v1227 = vand.u32 %v438, 4294901760
        %1228 = vmatmul.mubr.f32.gmra.mrb[0].mxu0 %v1227
        %v1229 = vpop.f32.mrb[0].mxu0
        %v1230 = vadd.f32 %v1055, %v1229
        %v1231 = vpop.f32.mrb[0].mxu0
        %1232 = vmatprep.mubr.f32.mxu0 0.0
        %v1233 = vand.u32 %v439, 4294901760
        %1234 = vmatmul.mubr.f32.gmra.mrb[0].mxu0 %v1233
        %v1235 = vpop.f32.mrb[0].mxu0
        %v1236 = vadd.f32 %v1063, %v1235
        %v1237 = vpop.f32.mrb[0].mxu0
        %1238 = vmatprep.mubr.f32.mxu0 0.0
        %v1239 = vand.u32 %v440, 4294901760
        %1240 = vmatmul.mubr.f32.gmra.mrb[0].mxu0 %v1239
        %v1241 = vpop.f32.mrb[0].mxu0
        %v1242 = vadd.f32 %v1071, %v1241
        %v1243 = vpop.f32.mrb[0].mxu0
        %1244 = vmatprep.mubr.f32.mxu0 0.0
        %v1245 = vand.u32 %v441, 4294901760
        %1246 = vmatmul.mubr.f32.gmra.mrb[0].mxu0 %v1245
        %v1247 = vpop.f32.mrb[0].mxu0
        %v1248 = vadd.f32 %v1079, %v1247
        %v1249 = vpop.f32.mrb[0].mxu0
        %1250 = vmatprep.mubr.f32.mxu0 0.0
        %v1251 = vand.u32 %v442, 4294901760
        %1252 = vmatmul.mubr.f32.gmra.mrb[0].mxu0 %v1251
        %v1253 = vpop.f32.mrb[0].mxu0
        %v1254 = vadd.f32 %v1087, %v1253
        %v1255 = vpop.f32.mrb[0].mxu0
        %1256 = vmatprep.mubr.f32.mxu0 0.0
        %v1257 = vand.u32 %v443, 4294901760
        %1258 = vmatmul.mubr.f32.gmra.mrb[0].mxu0 %v1257
        %v1259 = vpop.f32.mrb[0].mxu0
        %v1260 = vadd.f32 %v1095, %v1259
        %v1261 = vpop.f32.mrb[0].mxu0
        %1262 = vmatprep.mubr.f32.mxu0 0.0
        %v1263 = vand.u32 %v444, 4294901760
        %1264 = vmatmul.mubr.f32.gmra.mrb[0].mxu0 %v1263
        %v1265 = vpop.f32.mrb[0].mxu0
        %v1266 = vadd.f32 %v1103, %v1265
        %v1267 = vpop.f32.mrb[0].mxu0
        %1268 = vmatprep.mubr.f32.mxu0 0.0
        %v1269 = vand.u32 %v445, 4294901760
        %1270 = vmatmul.mubr.f32.gmra.mrb[0].mxu0 %v1269
        %v1271 = vpop.f32.mrb[0].mxu0
        %v1272 = vadd.f32 %v1111, %v1271
        %v1273 = vpop.f32.mrb[0].mxu0
        %1274 = vdwg.mxu0
        %1275 = vmatprep.subr.mxu0 0.0
        %v1276 = vand.u32 %v446, 4294901760
        %1277 = vmatpush1.msra.mxu0 %v1276
        %1278 = vmatprep.subr.mxu0 0.0
        %v1279 = vand.u32 %v447, 4294901760
        %1280 = vmatpush1.msra.mxu0 %v1279
        %1281 = vmatprep.subr.mxu0 0.0
        %v1282 = vand.u32 %v448, 4294901760
        %1283 = vmatpush1.msra.mxu0 %v1282
        %1284 = vmatprep.subr.mxu0 0.0
        %v1285 = vand.u32 %v449, 4294901760
        %1286 = vmatpush1.msra.mxu0 %v1285
        %1287 = vmatprep.subr.mxu0 0.0
        %v1288 = vand.u32 %v450, 4294901760
        %1289 = vmatpush1.msra.mxu0 %v1288
        %1290 = vmatprep.subr.mxu0 0.0
        %v1291 = vand.u32 %v451, 4294901760
        %1292 = vmatpush1.msra.mxu0 %v1291
        %1293 = vmatprep.subr.mxu0 0.0
        %v1294 = vand.u32 %v452, 4294901760
        %1295 = vmatpush1.msra.mxu0 %v1294
        %1296 = vmatprep.subr.mxu0 0.0
        %v1297 = vand.u32 %v453, 4294901760
        %1298 = vmatpush1.msra.mxu0 %v1297
        %1299 = vmatprep.subr.mxu0 0.0
        %v1300 = vand.u32 %v454, 4294901760
        %1301 = vmatpush1.msra.mxu0 %v1300
        %1302 = vmatprep.subr.mxu0 0.0
        %v1303 = vand.u32 %v455, 4294901760
        %1304 = vmatpush1.msra.mxu0 %v1303
        %1305 = vmatprep.subr.mxu0 0.0
        %v1306 = vand.u32 %v456, 4294901760
        %1307 = vmatpush1.msra.mxu0 %v1306
        %1308 = vmatprep.subr.mxu0 0.0
        %v1309 = vand.u32 %v457, 4294901760
        %1310 = vmatpush1.msra.mxu0 %v1309
        %1311 = vmatprep.subr.mxu0 0.0
        %v1312 = vand.u32 %v458, 4294901760
        %1313 = vmatpush1.msra.mxu0 %v1312
        %1314 = vmatprep.subr.mxu0 0.0
        %v1315 = vand.u32 %v459, 4294901760
        %1316 = vmatpush1.msra.mxu0 %v1315
        %1317 = vmatprep.subr.mxu0 0.0
        %v1318 = vand.u32 %v460, 4294901760
        %1319 = vmatpush1.msra.mxu0 %v1318
        %1320 = vmatprep.subr.mxu0 0.0
        %v1321 = vand.u32 %v461, 4294901760
        %1322 = vmatpush1.msra.mxu0 %v1321
        %1323 = vmatprep.subr.mxu0 0.0
        %1324 = vmatpush1.msra.mxu0 0.0
        %1325 = vmatprep.subr.mxu0 0.0
        %1326 = vmatpush1.msra.mxu0 0.0
        %1327 = vmatprep.subr.mxu0 0.0
        %1328 = vmatpush1.msra.mxu0 0.0
        %1329 = vmatprep.subr.mxu0 0.0
        %1330 = vmatpush1.msra.mxu0 0.0
        %1331 = vmatprep.subr.mxu0 0.0
        %1332 = vmatpush1.msra.mxu0 0.0
        %1333 = vmatprep.subr.mxu0 0.0
        %1334 = vmatpush1.msra.mxu0 0.0
        %1335 = vmatprep.subr.mxu0 0.0
        %1336 = vmatpush1.msra.mxu0 0.0
        %1337 = vmatprep.subr.mxu0 0.0
        %1338 = vmatpush1.msra.mxu0 0.0
        %1339 = vmatprep.subr.mxu0 0.0
        %1340 = vmatpush1.msra.mxu0 0.0
        %1341 = vmatprep.subr.mxu0 0.0
        %1342 = vmatpush1.msra.mxu0 0.0
        %1343 = vmatprep.subr.mxu0 0.0
        %1344 = vmatpush1.msra.mxu0 0.0
        %1345 = vmatprep.subr.mxu0 0.0
        %1346 = vmatpush1.msra.mxu0 0.0
        %1347 = vmatprep.subr.mxu0 0.0
        %1348 = vmatpush1.msra.mxu0 0.0
        %1349 = vmatprep.subr.mxu0 0.0
        %1350 = vmatpush1.msra.mxu0 0.0
        %1351 = vmatprep.subr.mxu0 0.0
        %1352 = vmatpush1.msra.mxu0 0.0
        %1353 = vmatprep.subr.mxu0 0.0
        %1354 = vmatpush1.msra.mxu0 0.0
        %1355 = vmatprep.mubr.f32.mxu0 0.0
        %v1356 = vand.u32 %v438, 4294901760
        %1357 = vmatmul.mubr.f32.gmra.mrb[0].mxu0 %v1356
        %v1358 = vpop.f32.mrb[0].mxu0
        %v1359 = vadd.f32 %v1230, %v1358
        %v1360 = vpop.f32.mrb[0].mxu0
        %1361 = vmatprep.mubr.f32.mxu0 0.0
        %v1362 = vand.u32 %v439, 4294901760
        %1363 = vmatmul.mubr.f32.gmra.mrb[0].mxu0 %v1362
        %v1364 = vpop.f32.mrb[0].mxu0
        %v1365 = vadd.f32 %v1236, %v1364
        %v1366 = vpop.f32.mrb[0].mxu0
        %1367 = vmatprep.mubr.f32.mxu0 0.0
        %v1368 = vand.u32 %v440, 4294901760
        %1369 = vmatmul.mubr.f32.gmra.mrb[0].mxu0 %v1368
        %v1370 = vpop.f32.mrb[0].mxu0
        %v1371 = vadd.f32 %v1242, %v1370
        %v1372 = vpop.f32.mrb[0].mxu0
        %1373 = vmatprep.mubr.f32.mxu0 0.0
        %v1374 = vand.u32 %v441, 4294901760
        %1375 = vmatmul.mubr.f32.gmra.mrb[0].mxu0 %v1374
        %v1376 = vpop.f32.mrb[0].mxu0
        %v1377 = vadd.f32 %v1248, %v1376
        %v1378 = vpop.f32.mrb[0].mxu0
        %1379 = vmatprep.mubr.f32.mxu0 0.0
        %v1380 = vand.u32 %v442, 4294901760
        %1381 = vmatmul.mubr.f32.gmra.mrb[0].mxu0 %v1380
        %v1382 = vpop.f32.mrb[0].mxu0
        %v1383 = vadd.f32 %v1254, %v1382
        %v1384 = vpop.f32.mrb[0].mxu0
        %1385 = vmatprep.mubr.f32.mxu0 0.0
        %v1386 = vand.u32 %v443, 4294901760
        %1387 = vmatmul.mubr.f32.gmra.mrb[0].mxu0 %v1386
        %v1388 = vpop.f32.mrb[0].mxu0
        %v1389 = vadd.f32 %v1260, %v1388
        %v1390 = vpop.f32.mrb[0].mxu0
        %1391 = vmatprep.mubr.f32.mxu0 0.0
        %v1392 = vand.u32 %v444, 4294901760
        %1393 = vmatmul.mubr.f32.gmra.mrb[0].mxu0 %v1392
        %v1394 = vpop.f32.mrb[0].mxu0
        %v1395 = vadd.f32 %v1266, %v1394
        %v1396 = vpop.f32.mrb[0].mxu0
        %1397 = vmatprep.mubr.f32.mxu0 0.0
        %v1398 = vand.u32 %v445, 4294901760
        %1399 = vmatmul.mubr.f32.gmra.mrb[0].mxu0 %v1398
        %v1400 = vpop.f32.mrb[0].mxu0
        %v1401 = vadd.f32 %v1272, %v1400
        %v1402 = vpop.f32.mrb[0].mxu0
        %1403 = vdwg.mxu0
        %v1404 = vmul.f32 %v438, %v438
        %v1405 = vmul.f32 %v439, %v439
        %v1406 = vmul.f32 %v440, %v440
        %v1407 = vmul.f32 %v441, %v441
        %v1408 = vmul.f32 %v442, %v442
        %v1409 = vmul.f32 %v443, %v443
        %v1410 = vmul.f32 %v444, %v444
        %v1411 = vmul.f32 %v445, %v445
        %1412 = vmatprep.subr.mxu0 0.0
        %v1413 = vand.u32 %v446, 4294901760
        %1414 = vmatpush1.msra.mxu0 %v1413
        %1415 = vmatprep.subr.mxu0 0.0
        %v1416 = vand.u32 %v447, 4294901760
        %1417 = vmatpush1.msra.mxu0 %v1416
        %1418 = vmatprep.subr.mxu0 0.0
        %v1419 = vand.u32 %v448, 4294901760
        %1420 = vmatpush1.msra.mxu0 %v1419
        %1421 = vmatprep.subr.mxu0 0.0
        %v1422 = vand.u32 %v449, 4294901760
        %1423 = vmatpush1.msra.mxu0 %v1422
        %1424 = vmatprep.subr.mxu0 0.0
        %v1425 = vand.u32 %v450, 4294901760
        %1426 = vmatpush1.msra.mxu0 %v1425
        %1427 = vmatprep.subr.mxu0 0.0
        %v1428 = vand.u32 %v451, 4294901760
        %1429 = vmatpush1.msra.mxu0 %v1428
        %1430 = vmatprep.subr.mxu0 0.0
        %v1431 = vand.u32 %v452, 4294901760
        %1432 = vmatpush1.msra.mxu0 %v1431
        %1433 = vmatprep.subr.mxu0 0.0
        %v1434 = vand.u32 %v453, 4294901760
        %1435 = vmatpush1.msra.mxu0 %v1434
        %1436 = vmatprep.subr.mxu0 0.0
        %v1437 = vand.u32 %v454, 4294901760
        %1438 = vmatpush1.msra.mxu0 %v1437
        %1439 = vmatprep.subr.mxu0 0.0
        %v1440 = vand.u32 %v455, 4294901760
        %1441 = vmatpush1.msra.mxu0 %v1440
        %1442 = vmatprep.subr.mxu0 0.0
        %v1443 = vand.u32 %v456, 4294901760
        %1444 = vmatpush1.msra.mxu0 %v1443
        %1445 = vmatprep.subr.mxu0 0.0
        %v1446 = vand.u32 %v457, 4294901760
        %1447 = vmatpush1.msra.mxu0 %v1446
        %1448 = vmatprep.subr.mxu0 0.0
        %v1449 = vand.u32 %v458, 4294901760
        %1450 = vmatpush1.msra.mxu0 %v1449
        %1451 = vmatprep.subr.mxu0 0.0
        %v1452 = vand.u32 %v459, 4294901760
        %1453 = vmatpush1.msra.mxu0 %v1452
        %1454 = vmatprep.subr.mxu0 0.0
        %v1455 = vand.u32 %v460, 4294901760
        %1456 = vmatpush1.msra.mxu0 %v1455
        %1457 = vmatprep.subr.mxu0 0.0
        %v1458 = vand.u32 %v461, 4294901760
        %1459 = vmatpush1.msra.mxu0 %v1458
        %1460 = vmatprep.subr.mxu0 0.0
        %1461 = vmatpush1.msra.mxu0 0.0
        %1462 = vmatprep.subr.mxu0 0.0
        %1463 = vmatpush1.msra.mxu0 0.0
        %1464 = vmatprep.subr.mxu0 0.0
        %1465 = vmatpush1.msra.mxu0 0.0
        %1466 = vmatprep.subr.mxu0 0.0
        %1467 = vmatpush1.msra.mxu0 0.0
        %1468 = vmatprep.subr.mxu0 0.0
        %1469 = vmatpush1.msra.mxu0 0.0
        %1470 = vmatprep.subr.mxu0 0.0
        %1471 = vmatpush1.msra.mxu0 0.0
        %1472 = vmatprep.subr.mxu0 0.0
        %1473 = vmatpush1.msra.mxu0 0.0
        %1474 = vmatprep.subr.mxu0 0.0
        %1475 = vmatpush1.msra.mxu0 0.0
        %1476 = vmatprep.subr.mxu0 0.0
        %1477 = vmatpush1.msra.mxu0 0.0
        %1478 = vmatprep.subr.mxu0 0.0
        %1479 = vmatpush1.msra.mxu0 0.0
        %1480 = vmatprep.subr.mxu0 0.0
        %1481 = vmatpush1.msra.mxu0 0.0
        %1482 = vmatprep.subr.mxu0 0.0
        %1483 = vmatpush1.msra.mxu0 0.0
        %1484 = vmatprep.subr.mxu0 0.0
        %1485 = vmatpush1.msra.mxu0 0.0
        %1486 = vmatprep.subr.mxu0 0.0
        %1487 = vmatpush1.msra.mxu0 0.0
        %1488 = vmatprep.subr.mxu0 0.0
        %1489 = vmatpush1.msra.mxu0 0.0
        %1490 = vmatprep.subr.mxu0 0.0
        %1491 = vmatpush1.msra.mxu0 0.0
        %1492 = vmatprep.mubr.f32.mxu0 0.0
        %v1493 = vand.u32 %v1404, 4294901760
        %v1494 = vsub.f32 %v1404, %v1493
        %v1495 = vand.u32 %v1494, 4294901760
        %v1496 = vsub.f32 %v1494, %v1495
        %v1497 = vand.u32 %v1496, 4294901760
        %1498 = vmatmul.mubr.f32.gmra.mrb[0].mxu0 %v1497
        %v1499 = vpop.f32.mrb[0].mxu0
        %v1500 = vadd.f32 0.0, %v1499
        %v1501 = vpop.f32.mrb[0].mxu0
        %1502 = vmatprep.mubr.f32.mxu0 0.0
        %v1503 = vand.u32 %v1405, 4294901760
        %v1504 = vsub.f32 %v1405, %v1503
        %v1505 = vand.u32 %v1504, 4294901760
        %v1506 = vsub.f32 %v1504, %v1505
        %v1507 = vand.u32 %v1506, 4294901760
        %1508 = vmatmul.mubr.f32.gmra.mrb[0].mxu0 %v1507
        %v1509 = vpop.f32.mrb[0].mxu0
        %v1510 = vadd.f32 0.0, %v1509
        %v1511 = vpop.f32.mrb[0].mxu0
        %1512 = vmatprep.mubr.f32.mxu0 0.0
        %v1513 = vand.u32 %v1406, 4294901760
        %v1514 = vsub.f32 %v1406, %v1513
        %v1515 = vand.u32 %v1514, 4294901760
        %v1516 = vsub.f32 %v1514, %v1515
        %v1517 = vand.u32 %v1516, 4294901760
        %1518 = vmatmul.mubr.f32.gmra.mrb[0].mxu0 %v1517
        %v1519 = vpop.f32.mrb[0].mxu0
        %v1520 = vadd.f32 0.0, %v1519
        %v1521 = vpop.f32.mrb[0].mxu0
        %1522 = vmatprep.mubr.f32.mxu0 0.0
        %v1523 = vand.u32 %v1407, 4294901760
        %v1524 = vsub.f32 %v1407, %v1523
        %v1525 = vand.u32 %v1524, 4294901760
        %v1526 = vsub.f32 %v1524, %v1525
        %v1527 = vand.u32 %v1526, 4294901760
        %1528 = vmatmul.mubr.f32.gmra.mrb[0].mxu0 %v1527
        %v1529 = vpop.f32.mrb[0].mxu0
        %v1530 = vadd.f32 0.0, %v1529
        %v1531 = vpop.f32.mrb[0].mxu0
        %1532 = vmatprep.mubr.f32.mxu0 0.0
        %v1533 = vand.u32 %v1408, 4294901760
        %v1534 = vsub.f32 %v1408, %v1533
        %v1535 = vand.u32 %v1534, 4294901760
        %v1536 = vsub.f32 %v1534, %v1535
        %v1537 = vand.u32 %v1536, 4294901760
        %1538 = vmatmul.mubr.f32.gmra.mrb[0].mxu0 %v1537
        %v1539 = vpop.f32.mrb[0].mxu0
        %v1540 = vadd.f32 0.0, %v1539
        %v1541 = vpop.f32.mrb[0].mxu0
        %1542 = vmatprep.mubr.f32.mxu0 0.0
        %v1543 = vand.u32 %v1409, 4294901760
        %v1544 = vsub.f32 %v1409, %v1543
        %v1545 = vand.u32 %v1544, 4294901760
        %v1546 = vsub.f32 %v1544, %v1545
        %v1547 = vand.u32 %v1546, 4294901760
        %1548 = vmatmul.mubr.f32.gmra.mrb[0].mxu0 %v1547
        %v1549 = vpop.f32.mrb[0].mxu0
        %v1550 = vadd.f32 0.0, %v1549
        %v1551 = vpop.f32.mrb[0].mxu0
        %1552 = vmatprep.mubr.f32.mxu0 0.0
        %v1553 = vand.u32 %v1410, 4294901760
        %v1554 = vsub.f32 %v1410, %v1553
        %v1555 = vand.u32 %v1554, 4294901760
        %v1556 = vsub.f32 %v1554, %v1555
        %v1557 = vand.u32 %v1556, 4294901760
        %1558 = vmatmul.mubr.f32.gmra.mrb[0].mxu0 %v1557
        %v1559 = vpop.f32.mrb[0].mxu0
        %v1560 = vadd.f32 0.0, %v1559
        %v1561 = vpop.f32.mrb[0].mxu0
        %1562 = vmatprep.mubr.f32.mxu0 0.0
        %v1563 = vand.u32 %v1411, 4294901760
        %v1564 = vsub.f32 %v1411, %v1563
        %v1565 = vand.u32 %v1564, 4294901760
        %v1566 = vsub.f32 %v1564, %v1565
        %v1567 = vand.u32 %v1566, 4294901760
        %1568 = vmatmul.mubr.f32.gmra.mrb[0].mxu0 %v1567
        %v1569 = vpop.f32.mrb[0].mxu0
        %v1570 = vadd.f32 0.0, %v1569
        %v1571 = vpop.f32.mrb[0].mxu0
        %1572 = vdwg.mxu0
        %1573 = vmatprep.subr.mxu0 0.0
        %v1574 = vand.u32 %v446, 4294901760
        %v1575 = vsub.f32 %v446, %v1574
        %v1576 = vand.u32 %v1575, 4294901760
        %v1577 = vsub.f32 %v1575, %v1576
        %v1578 = vand.u32 %v1577, 4294901760
        %1579 = vmatpush1.msra.mxu0 %v1578
        %1580 = vmatprep.subr.mxu0 0.0
        %v1581 = vand.u32 %v447, 4294901760
        %v1582 = vsub.f32 %v447, %v1581
        %v1583 = vand.u32 %v1582, 4294901760
        %v1584 = vsub.f32 %v1582, %v1583
        %v1585 = vand.u32 %v1584, 4294901760
        %1586 = vmatpush1.msra.mxu0 %v1585
        %1587 = vmatprep.subr.mxu0 0.0
        %v1588 = vand.u32 %v448, 4294901760
        %v1589 = vsub.f32 %v448, %v1588
        %v1590 = vand.u32 %v1589, 4294901760
        %v1591 = vsub.f32 %v1589, %v1590
        %v1592 = vand.u32 %v1591, 4294901760
        %1593 = vmatpush1.msra.mxu0 %v1592
        %1594 = vmatprep.subr.mxu0 0.0
        %v1595 = vand.u32 %v449, 4294901760
        %v1596 = vsub.f32 %v449, %v1595
        %v1597 = vand.u32 %v1596, 4294901760
        %v1598 = vsub.f32 %v1596, %v1597
        %v1599 = vand.u32 %v1598, 4294901760
        %1600 = vmatpush1.msra.mxu0 %v1599
        %1601 = vmatprep.subr.mxu0 0.0
        %v1602 = vand.u32 %v450, 4294901760
        %v1603 = vsub.f32 %v450, %v1602
        %v1604 = vand.u32 %v1603, 4294901760
        %v1605 = vsub.f32 %v1603, %v1604
        %v1606 = vand.u32 %v1605, 4294901760
        %1607 = vmatpush1.msra.mxu0 %v1606
        %1608 = vmatprep.subr.mxu0 0.0
        %v1609 = vand.u32 %v451, 4294901760
        %v1610 = vsub.f32 %v451, %v1609
        %v1611 = vand.u32 %v1610, 4294901760
        %v1612 = vsub.f32 %v1610, %v1611
        %v1613 = vand.u32 %v1612, 4294901760
        %1614 = vmatpush1.msra.mxu0 %v1613
        %1615 = vmatprep.subr.mxu0 0.0
        %v1616 = vand.u32 %v452, 4294901760
        %v1617 = vsub.f32 %v452, %v1616
        %v1618 = vand.u32 %v1617, 4294901760
        %v1619 = vsub.f32 %v1617, %v1618
        %v1620 = vand.u32 %v1619, 4294901760
        %1621 = vmatpush1.msra.mxu0 %v1620
        %1622 = vmatprep.subr.mxu0 0.0
        %v1623 = vand.u32 %v453, 4294901760
        %v1624 = vsub.f32 %v453, %v1623
        %v1625 = vand.u32 %v1624, 4294901760
        %v1626 = vsub.f32 %v1624, %v1625
        %v1627 = vand.u32 %v1626, 4294901760
        %1628 = vmatpush1.msra.mxu0 %v1627
        %1629 = vmatprep.subr.mxu0 0.0
        %v1630 = vand.u32 %v454, 4294901760
        %v1631 = vsub.f32 %v454, %v1630
        %v1632 = vand.u32 %v1631, 4294901760
        %v1633 = vsub.f32 %v1631, %v1632
        %v1634 = vand.u32 %v1633, 4294901760
        %1635 = vmatpush1.msra.mxu0 %v1634
        %1636 = vmatprep.subr.mxu0 0.0
        %v1637 = vand.u32 %v455, 4294901760
        %v1638 = vsub.f32 %v455, %v1637
        %v1639 = vand.u32 %v1638, 4294901760
        %v1640 = vsub.f32 %v1638, %v1639
        %v1641 = vand.u32 %v1640, 4294901760
        %1642 = vmatpush1.msra.mxu0 %v1641
        %1643 = vmatprep.subr.mxu0 0.0
        %v1644 = vand.u32 %v456, 4294901760
        %v1645 = vsub.f32 %v456, %v1644
        %v1646 = vand.u32 %v1645, 4294901760
        %v1647 = vsub.f32 %v1645, %v1646
        %v1648 = vand.u32 %v1647, 4294901760
        %1649 = vmatpush1.msra.mxu0 %v1648
        %1650 = vmatprep.subr.mxu0 0.0
        %v1651 = vand.u32 %v457, 4294901760
        %v1652 = vsub.f32 %v457, %v1651
        %v1653 = vand.u32 %v1652, 4294901760
        %v1654 = vsub.f32 %v1652, %v1653
        %v1655 = vand.u32 %v1654, 4294901760
        %1656 = vmatpush1.msra.mxu0 %v1655
        %1657 = vmatprep.subr.mxu0 0.0
        %v1658 = vand.u32 %v458, 4294901760
        %v1659 = vsub.f32 %v458, %v1658
        %v1660 = vand.u32 %v1659, 4294901760
        %v1661 = vsub.f32 %v1659, %v1660
        %v1662 = vand.u32 %v1661, 4294901760
        %1663 = vmatpush1.msra.mxu0 %v1662
        %1664 = vmatprep.subr.mxu0 0.0
        %v1665 = vand.u32 %v459, 4294901760
        %v1666 = vsub.f32 %v459, %v1665
        %v1667 = vand.u32 %v1666, 4294901760
        %v1668 = vsub.f32 %v1666, %v1667
        %v1669 = vand.u32 %v1668, 4294901760
        %1670 = vmatpush1.msra.mxu0 %v1669
        %1671 = vmatprep.subr.mxu0 0.0
        %v1672 = vand.u32 %v460, 4294901760
        %v1673 = vsub.f32 %v460, %v1672
        %v1674 = vand.u32 %v1673, 4294901760
        %v1675 = vsub.f32 %v1673, %v1674
        %v1676 = vand.u32 %v1675, 4294901760
        %1677 = vmatpush1.msra.mxu0 %v1676
        %1678 = vmatprep.subr.mxu0 0.0
        %v1679 = vand.u32 %v461, 4294901760
        %v1680 = vsub.f32 %v461, %v1679
        %v1681 = vand.u32 %v1680, 4294901760
        %v1682 = vsub.f32 %v1680, %v1681
        %v1683 = vand.u32 %v1682, 4294901760
        %1684 = vmatpush1.msra.mxu0 %v1683
        %1685 = vmatprep.subr.mxu0 0.0
        %1686 = vmatpush1.msra.mxu0 0.0
        %1687 = vmatprep.subr.mxu0 0.0
        %1688 = vmatpush1.msra.mxu0 0.0
        %1689 = vmatprep.subr.mxu0 0.0
        %1690 = vmatpush1.msra.mxu0 0.0
        %1691 = vmatprep.subr.mxu0 0.0
        %1692 = vmatpush1.msra.mxu0 0.0
        %1693 = vmatprep.subr.mxu0 0.0
        %1694 = vmatpush1.msra.mxu0 0.0
        %1695 = vmatprep.subr.mxu0 0.0
        %1696 = vmatpush1.msra.mxu0 0.0
        %1697 = vmatprep.subr.mxu0 0.0
        %1698 = vmatpush1.msra.mxu0 0.0
        %1699 = vmatprep.subr.mxu0 0.0
        %1700 = vmatpush1.msra.mxu0 0.0
        %1701 = vmatprep.subr.mxu0 0.0
        %1702 = vmatpush1.msra.mxu0 0.0
        %1703 = vmatprep.subr.mxu0 0.0
        %1704 = vmatpush1.msra.mxu0 0.0
        %1705 = vmatprep.subr.mxu0 0.0
        %1706 = vmatpush1.msra.mxu0 0.0
        %1707 = vmatprep.subr.mxu0 0.0
        %1708 = vmatpush1.msra.mxu0 0.0
        %1709 = vmatprep.subr.mxu0 0.0
        %1710 = vmatpush1.msra.mxu0 0.0
        %1711 = vmatprep.subr.mxu0 0.0
        %1712 = vmatpush1.msra.mxu0 0.0
        %1713 = vmatprep.subr.mxu0 0.0
        %1714 = vmatpush1.msra.mxu0 0.0
        %1715 = vmatprep.subr.mxu0 0.0
        %1716 = vmatpush1.msra.mxu0 0.0
        %1717 = vmatprep.mubr.f32.mxu0 0.0
        %v1718 = vand.u32 %v1404, 4294901760
        %1719 = vmatmul.mubr.f32.gmra.mrb[0].mxu0 %v1718
        %v1720 = vpop.f32.mrb[0].mxu0
        %v1721 = vadd.f32 %v1500, %v1720
        %v1722 = vpop.f32.mrb[0].mxu0
        %1723 = vmatprep.mubr.f32.mxu0 0.0
        %v1724 = vand.u32 %v1405, 4294901760
        %1725 = vmatmul.mubr.f32.gmra.mrb[0].mxu0 %v1724
        %v1726 = vpop.f32.mrb[0].mxu0
        %v1727 = vadd.f32 %v1510, %v1726
        %v1728 = vpop.f32.mrb[0].mxu0
        %1729 = vmatprep.mubr.f32.mxu0 0.0
        %v1730 = vand.u32 %v1406, 4294901760
        %1731 = vmatmul.mubr.f32.gmra.mrb[0].mxu0 %v1730
        %v1732 = vpop.f32.mrb[0].mxu0
        %v1733 = vadd.f32 %v1520, %v1732
        %v1734 = vpop.f32.mrb[0].mxu0
        %1735 = vmatprep.mubr.f32.mxu0 0.0
        %v1736 = vand.u32 %v1407, 4294901760
        %1737 = vmatmul.mubr.f32.gmra.mrb[0].mxu0 %v1736
        %v1738 = vpop.f32.mrb[0].mxu0
        %v1739 = vadd.f32 %v1530, %v1738
        %v1740 = vpop.f32.mrb[0].mxu0
        %1741 = vmatprep.mubr.f32.mxu0 0.0
        %v1742 = vand.u32 %v1408, 4294901760
        %1743 = vmatmul.mubr.f32.gmra.mrb[0].mxu0 %v1742
        %v1744 = vpop.f32.mrb[0].mxu0
        %v1745 = vadd.f32 %v1540, %v1744
        %v1746 = vpop.f32.mrb[0].mxu0
        %1747 = vmatprep.mubr.f32.mxu0 0.0
        %v1748 = vand.u32 %v1409, 4294901760
        %1749 = vmatmul.mubr.f32.gmra.mrb[0].mxu0 %v1748
        %v1750 = vpop.f32.mrb[0].mxu0
        %v1751 = vadd.f32 %v1550, %v1750
        %v1752 = vpop.f32.mrb[0].mxu0
        %1753 = vmatprep.mubr.f32.mxu0 0.0
        %v1754 = vand.u32 %v1410, 4294901760
        %1755 = vmatmul.mubr.f32.gmra.mrb[0].mxu0 %v1754
        %v1756 = vpop.f32.mrb[0].mxu0
        %v1757 = vadd.f32 %v1560, %v1756
        %v1758 = vpop.f32.mrb[0].mxu0
        %1759 = vmatprep.mubr.f32.mxu0 0.0
        %v1760 = vand.u32 %v1411, 4294901760
        %1761 = vmatmul.mubr.f32.gmra.mrb[0].mxu0 %v1760
        %v1762 = vpop.f32.mrb[0].mxu0
        %v1763 = vadd.f32 %v1570, %v1762
        %v1764 = vpop.f32.mrb[0].mxu0
        %1765 = vdwg.mxu0
        %1766 = vmatprep.subr.mxu0 0.0
        %v1767 = vand.u32 %v446, 4294901760
        %v1768 = vsub.f32 %v446, %v1767
        %1769 = vmatpush1.msra.mxu0 %v1768
        %1770 = vmatprep.subr.mxu0 0.0
        %v1771 = vand.u32 %v447, 4294901760
        %v1772 = vsub.f32 %v447, %v1771
        %1773 = vmatpush1.msra.mxu0 %v1772
        %1774 = vmatprep.subr.mxu0 0.0
        %v1775 = vand.u32 %v448, 4294901760
        %v1776 = vsub.f32 %v448, %v1775
        %1777 = vmatpush1.msra.mxu0 %v1776
        %1778 = vmatprep.subr.mxu0 0.0
        %v1779 = vand.u32 %v449, 4294901760
        %v1780 = vsub.f32 %v449, %v1779
        %1781 = vmatpush1.msra.mxu0 %v1780
        %1782 = vmatprep.subr.mxu0 0.0
        %v1783 = vand.u32 %v450, 4294901760
        %v1784 = vsub.f32 %v450, %v1783
        %1785 = vmatpush1.msra.mxu0 %v1784
        %1786 = vmatprep.subr.mxu0 0.0
        %v1787 = vand.u32 %v451, 4294901760
        %v1788 = vsub.f32 %v451, %v1787
        %1789 = vmatpush1.msra.mxu0 %v1788
        %1790 = vmatprep.subr.mxu0 0.0
        %v1791 = vand.u32 %v452, 4294901760
        %v1792 = vsub.f32 %v452, %v1791
        %1793 = vmatpush1.msra.mxu0 %v1792
        %1794 = vmatprep.subr.mxu0 0.0
        %v1795 = vand.u32 %v453, 4294901760
        %v1796 = vsub.f32 %v453, %v1795
        %1797 = vmatpush1.msra.mxu0 %v1796
        %1798 = vmatprep.subr.mxu0 0.0
        %v1799 = vand.u32 %v454, 4294901760
        %v1800 = vsub.f32 %v454, %v1799
        %1801 = vmatpush1.msra.mxu0 %v1800
        %1802 = vmatprep.subr.mxu0 0.0
        %v1803 = vand.u32 %v455, 4294901760
        %v1804 = vsub.f32 %v455, %v1803
        %1805 = vmatpush1.msra.mxu0 %v1804
        %1806 = vmatprep.subr.mxu0 0.0
        %v1807 = vand.u32 %v456, 4294901760
        %v1808 = vsub.f32 %v456, %v1807
        %1809 = vmatpush1.msra.mxu0 %v1808
        %1810 = vmatprep.subr.mxu0 0.0
        %v1811 = vand.u32 %v457, 4294901760
        %v1812 = vsub.f32 %v457, %v1811
        %1813 = vmatpush1.msra.mxu0 %v1812
        %1814 = vmatprep.subr.mxu0 0.0
        %v1815 = vand.u32 %v458, 4294901760
        %v1816 = vsub.f32 %v458, %v1815
        %1817 = vmatpush1.msra.mxu0 %v1816
        %1818 = vmatprep.subr.mxu0 0.0
        %v1819 = vand.u32 %v459, 4294901760
        %v1820 = vsub.f32 %v459, %v1819
        %1821 = vmatpush1.msra.mxu0 %v1820
        %1822 = vmatprep.subr.mxu0 0.0
        %v1823 = vand.u32 %v460, 4294901760
        %v1824 = vsub.f32 %v460, %v1823
        %1825 = vmatpush1.msra.mxu0 %v1824
        %1826 = vmatprep.subr.mxu0 0.0
        %v1827 = vand.u32 %v461, 4294901760
        %v1828 = vsub.f32 %v461, %v1827
        %1829 = vmatpush1.msra.mxu0 %v1828
        %1830 = vmatprep.subr.mxu0 0.0
        %1831 = vmatpush1.msra.mxu0 0.0
        %1832 = vmatprep.subr.mxu0 0.0
        %1833 = vmatpush1.msra.mxu0 0.0
        %1834 = vmatprep.subr.mxu0 0.0
        %1835 = vmatpush1.msra.mxu0 0.0
        %1836 = vmatprep.subr.mxu0 0.0
        %1837 = vmatpush1.msra.mxu0 0.0
        %1838 = vmatprep.subr.mxu0 0.0
        %1839 = vmatpush1.msra.mxu0 0.0
        %1840 = vmatprep.subr.mxu0 0.0
        %1841 = vmatpush1.msra.mxu0 0.0
        %1842 = vmatprep.subr.mxu0 0.0
        %1843 = vmatpush1.msra.mxu0 0.0
        %1844 = vmatprep.subr.mxu0 0.0
        %1845 = vmatpush1.msra.mxu0 0.0
        %1846 = vmatprep.subr.mxu0 0.0
        %1847 = vmatpush1.msra.mxu0 0.0
        %1848 = vmatprep.subr.mxu0 0.0
        %1849 = vmatpush1.msra.mxu0 0.0
        %1850 = vmatprep.subr.mxu0 0.0
        %1851 = vmatpush1.msra.mxu0 0.0
        %1852 = vmatprep.subr.mxu0 0.0
        %1853 = vmatpush1.msra.mxu0 0.0
        %1854 = vmatprep.subr.mxu0 0.0
        %1855 = vmatpush1.msra.mxu0 0.0
        %1856 = vmatprep.subr.mxu0 0.0
        %1857 = vmatpush1.msra.mxu0 0.0
        %1858 = vmatprep.subr.mxu0 0.0
        %1859 = vmatpush1.msra.mxu0 0.0
        %1860 = vmatprep.subr.mxu0 0.0
        %1861 = vmatpush1.msra.mxu0 0.0
        %1862 = vmatprep.mubr.f32.mxu0 0.0
        %v1863 = vand.u32 %v1404, 4294901760
        %v1864 = vsub.f32 %v1404, %v1863
        %1865 = vmatmul.mubr.f32.gmra.mrb[0].mxu0 %v1864
        %v1866 = vpop.f32.mrb[0].mxu0
        %v1867 = vadd.f32 %v1721, %v1866
        %v1868 = vpop.f32.mrb[0].mxu0
        %1869 = vmatprep.mubr.f32.mxu0 0.0
        %v1870 = vand.u32 %v1405, 4294901760
        %v1871 = vsub.f32 %v1405, %v1870
        %1872 = vmatmul.mubr.f32.gmra.mrb[0].mxu0 %v1871
        %v1873 = vpop.f32.mrb[0].mxu0
        %v1874 = vadd.f32 %v1727, %v1873
        %v1875 = vpop.f32.mrb[0].mxu0
        %1876 = vmatprep.mubr.f32.mxu0 0.0
        %v1877 = vand.u32 %v1406, 4294901760
        %v1878 = vsub.f32 %v1406, %v1877
        %1879 = vmatmul.mubr.f32.gmra.mrb[0].mxu0 %v1878
        %v1880 = vpop.f32.mrb[0].mxu0
        %v1881 = vadd.f32 %v1733, %v1880
        %v1882 = vpop.f32.mrb[0].mxu0
        %1883 = vmatprep.mubr.f32.mxu0 0.0
        %v1884 = vand.u32 %v1407, 4294901760
        %v1885 = vsub.f32 %v1407, %v1884
        %1886 = vmatmul.mubr.f32.gmra.mrb[0].mxu0 %v1885
        %v1887 = vpop.f32.mrb[0].mxu0
        %v1888 = vadd.f32 %v1739, %v1887
        %v1889 = vpop.f32.mrb[0].mxu0
        %1890 = vmatprep.mubr.f32.mxu0 0.0
        %v1891 = vand.u32 %v1408, 4294901760
        %v1892 = vsub.f32 %v1408, %v1891
        %1893 = vmatmul.mubr.f32.gmra.mrb[0].mxu0 %v1892
        %v1894 = vpop.f32.mrb[0].mxu0
        %v1895 = vadd.f32 %v1745, %v1894
        %v1896 = vpop.f32.mrb[0].mxu0
        %1897 = vmatprep.mubr.f32.mxu0 0.0
        %v1898 = vand.u32 %v1409, 4294901760
        %v1899 = vsub.f32 %v1409, %v1898
        %1900 = vmatmul.mubr.f32.gmra.mrb[0].mxu0 %v1899
        %v1901 = vpop.f32.mrb[0].mxu0
        %v1902 = vadd.f32 %v1751, %v1901
        %v1903 = vpop.f32.mrb[0].mxu0
        %1904 = vmatprep.mubr.f32.mxu0 0.0
        %v1905 = vand.u32 %v1410, 4294901760
        %v1906 = vsub.f32 %v1410, %v1905
        %1907 = vmatmul.mubr.f32.gmra.mrb[0].mxu0 %v1906
        %v1908 = vpop.f32.mrb[0].mxu0
        %v1909 = vadd.f32 %v1757, %v1908
        %v1910 = vpop.f32.mrb[0].mxu0
        %1911 = vmatprep.mubr.f32.mxu0 0.0
        %v1912 = vand.u32 %v1411, 4294901760
        %v1913 = vsub.f32 %v1411, %v1912
        %1914 = vmatmul.mubr.f32.gmra.mrb[0].mxu0 %v1913
        %v1915 = vpop.f32.mrb[0].mxu0
        %v1916 = vadd.f32 %v1763, %v1915
        %v1917 = vpop.f32.mrb[0].mxu0
        %1918 = vdwg.mxu0
        %1919 = vmatprep.subr.mxu0 0.0
        %v1920 = vand.u32 %v446, 4294901760
        %1921 = vmatpush1.msra.mxu0 %v1920
        %1922 = vmatprep.subr.mxu0 0.0
        %v1923 = vand.u32 %v447, 4294901760
        %1924 = vmatpush1.msra.mxu0 %v1923
        %1925 = vmatprep.subr.mxu0 0.0
        %v1926 = vand.u32 %v448, 4294901760
        %1927 = vmatpush1.msra.mxu0 %v1926
        %1928 = vmatprep.subr.mxu0 0.0
        %v1929 = vand.u32 %v449, 4294901760
        %1930 = vmatpush1.msra.mxu0 %v1929
        %1931 = vmatprep.subr.mxu0 0.0
        %v1932 = vand.u32 %v450, 4294901760
        %1933 = vmatpush1.msra.mxu0 %v1932
        %1934 = vmatprep.subr.mxu0 0.0
        %v1935 = vand.u32 %v451, 4294901760
        %1936 = vmatpush1.msra.mxu0 %v1935
        %1937 = vmatprep.subr.mxu0 0.0
        %v1938 = vand.u32 %v452, 4294901760
        %1939 = vmatpush1.msra.mxu0 %v1938
        %1940 = vmatprep.subr.mxu0 0.0
        %v1941 = vand.u32 %v453, 4294901760
        %1942 = vmatpush1.msra.mxu0 %v1941
        %1943 = vmatprep.subr.mxu0 0.0
        %v1944 = vand.u32 %v454, 4294901760
        %1945 = vmatpush1.msra.mxu0 %v1944
        %1946 = vmatprep.subr.mxu0 0.0
        %v1947 = vand.u32 %v455, 4294901760
        %1948 = vmatpush1.msra.mxu0 %v1947
        %1949 = vmatprep.subr.mxu0 0.0
        %v1950 = vand.u32 %v456, 4294901760
        %1951 = vmatpush1.msra.mxu0 %v1950
        %1952 = vmatprep.subr.mxu0 0.0
        %v1953 = vand.u32 %v457, 4294901760
        %1954 = vmatpush1.msra.mxu0 %v1953
        %1955 = vmatprep.subr.mxu0 0.0
        %v1956 = vand.u32 %v458, 4294901760
        %1957 = vmatpush1.msra.mxu0 %v1956
        %1958 = vmatprep.subr.mxu0 0.0
        %v1959 = vand.u32 %v459, 4294901760
        %1960 = vmatpush1.msra.mxu0 %v1959
        %1961 = vmatprep.subr.mxu0 0.0
        %v1962 = vand.u32 %v460, 4294901760
        %1963 = vmatpush1.msra.mxu0 %v1962
        %1964 = vmatprep.subr.mxu0 0.0
        %v1965 = vand.u32 %v461, 4294901760
        %1966 = vmatpush1.msra.mxu0 %v1965
        %1967 = vmatprep.subr.mxu0 0.0
        %1968 = vmatpush1.msra.mxu0 0.0
        %1969 = vmatprep.subr.mxu0 0.0
        %1970 = vmatpush1.msra.mxu0 0.0
        %1971 = vmatprep.subr.mxu0 0.0
        %1972 = vmatpush1.msra.mxu0 0.0
        %1973 = vmatprep.subr.mxu0 0.0
        %1974 = vmatpush1.msra.mxu0 0.0
        %1975 = vmatprep.subr.mxu0 0.0
        %1976 = vmatpush1.msra.mxu0 0.0
        %1977 = vmatprep.subr.mxu0 0.0
        %1978 = vmatpush1.msra.mxu0 0.0
        %1979 = vmatprep.subr.mxu0 0.0
        %1980 = vmatpush1.msra.mxu0 0.0
        %1981 = vmatprep.subr.mxu0 0.0
        %1982 = vmatpush1.msra.mxu0 0.0
        %1983 = vmatprep.subr.mxu0 0.0
        %1984 = vmatpush1.msra.mxu0 0.0
        %1985 = vmatprep.subr.mxu0 0.0
        %1986 = vmatpush1.msra.mxu0 0.0
        %1987 = vmatprep.subr.mxu0 0.0
        %1988 = vmatpush1.msra.mxu0 0.0
        %1989 = vmatprep.subr.mxu0 0.0
        %1990 = vmatpush1.msra.mxu0 0.0
        %1991 = vmatprep.subr.mxu0 0.0
        %1992 = vmatpush1.msra.mxu0 0.0
        %1993 = vmatprep.subr.mxu0 0.0
        %1994 = vmatpush1.msra.mxu0 0.0
        %1995 = vmatprep.subr.mxu0 0.0
        %1996 = vmatpush1.msra.mxu0 0.0
        %1997 = vmatprep.subr.mxu0 0.0
        %1998 = vmatpush1.msra.mxu0 0.0
        %1999 = vmatprep.mubr.f32.mxu0 0.0
        %v2000 = vand.u32 %v1404, 4294901760
        %v2001 = vsub.f32 %v1404, %v2000
        %v2002 = vand.u32 %v2001, 4294901760
        %2003 = vmatmul.mubr.f32.gmra.mrb[0].mxu0 %v2002
        %v2004 = vpop.f32.mrb[0].mxu0
        %v2005 = vadd.f32 %v1867, %v2004
        %v2006 = vpop.f32.mrb[0].mxu0
        %2007 = vmatprep.mubr.f32.mxu0 0.0
        %v2008 = vand.u32 %v1405, 4294901760
        %v2009 = vsub.f32 %v1405, %v2008
        %v2010 = vand.u32 %v2009, 4294901760
        %2011 = vmatmul.mubr.f32.gmra.mrb[0].mxu0 %v2010
        %v2012 = vpop.f32.mrb[0].mxu0
        %v2013 = vadd.f32 %v1874, %v2012
        %v2014 = vpop.f32.mrb[0].mxu0
        %2015 = vmatprep.mubr.f32.mxu0 0.0
        %v2016 = vand.u32 %v1406, 4294901760
        %v2017 = vsub.f32 %v1406, %v2016
        %v2018 = vand.u32 %v2017, 4294901760
        %2019 = vmatmul.mubr.f32.gmra.mrb[0].mxu0 %v2018
        %v2020 = vpop.f32.mrb[0].mxu0
        %v2021 = vadd.f32 %v1881, %v2020
        %v2022 = vpop.f32.mrb[0].mxu0
        %2023 = vmatprep.mubr.f32.mxu0 0.0
        %v2024 = vand.u32 %v1407, 4294901760
        %v2025 = vsub.f32 %v1407, %v2024
        %v2026 = vand.u32 %v2025, 4294901760
        %2027 = vmatmul.mubr.f32.gmra.mrb[0].mxu0 %v2026
        %v2028 = vpop.f32.mrb[0].mxu0
        %v2029 = vadd.f32 %v1888, %v2028
        %v2030 = vpop.f32.mrb[0].mxu0
        %2031 = vmatprep.mubr.f32.mxu0 0.0
        %v2032 = vand.u32 %v1408, 4294901760
        %v2033 = vsub.f32 %v1408, %v2032
        %v2034 = vand.u32 %v2033, 4294901760
        %2035 = vmatmul.mubr.f32.gmra.mrb[0].mxu0 %v2034
        %v2036 = vpop.f32.mrb[0].mxu0
        %v2037 = vadd.f32 %v1895, %v2036
        %v2038 = vpop.f32.mrb[0].mxu0
        %2039 = vmatprep.mubr.f32.mxu0 0.0
        %v2040 = vand.u32 %v1409, 4294901760
        %v2041 = vsub.f32 %v1409, %v2040
        %v2042 = vand.u32 %v2041, 4294901760
        %2043 = vmatmul.mubr.f32.gmra.mrb[0].mxu0 %v2042
        %v2044 = vpop.f32.mrb[0].mxu0
        %v2045 = vadd.f32 %v1902, %v2044
        %v2046 = vpop.f32.mrb[0].mxu0
        %2047 = vmatprep.mubr.f32.mxu0 0.0
        %v2048 = vand.u32 %v1410, 4294901760
        %v2049 = vsub.f32 %v1410, %v2048
        %v2050 = vand.u32 %v2049, 4294901760
        %2051 = vmatmul.mubr.f32.gmra.mrb[0].mxu0 %v2050
        %v2052 = vpop.f32.mrb[0].mxu0
        %v2053 = vadd.f32 %v1909, %v2052
        %v2054 = vpop.f32.mrb[0].mxu0
        %2055 = vmatprep.mubr.f32.mxu0 0.0
        %v2056 = vand.u32 %v1411, 4294901760
        %v2057 = vsub.f32 %v1411, %v2056
        %v2058 = vand.u32 %v2057, 4294901760
        %2059 = vmatmul.mubr.f32.gmra.mrb[0].mxu0 %v2058
        %v2060 = vpop.f32.mrb[0].mxu0
        %v2061 = vadd.f32 %v1916, %v2060
        %v2062 = vpop.f32.mrb[0].mxu0
        %2063 = vdwg.mxu0
        %2064 = vmatprep.subr.mxu0 0.0
        %v2065 = vand.u32 %v446, 4294901760
        %v2066 = vsub.f32 %v446, %v2065
        %v2067 = vand.u32 %v2066, 4294901760
        %2068 = vmatpush1.msra.mxu0 %v2067
        %2069 = vmatprep.subr.mxu0 0.0
        %v2070 = vand.u32 %v447, 4294901760
        %v2071 = vsub.f32 %v447, %v2070
        %v2072 = vand.u32 %v2071, 4294901760
        %2073 = vmatpush1.msra.mxu0 %v2072
        %2074 = vmatprep.subr.mxu0 0.0
        %v2075 = vand.u32 %v448, 4294901760
        %v2076 = vsub.f32 %v448, %v2075
        %v2077 = vand.u32 %v2076, 4294901760
        %2078 = vmatpush1.msra.mxu0 %v2077
        %2079 = vmatprep.subr.mxu0 0.0
        %v2080 = vand.u32 %v449, 4294901760
        %v2081 = vsub.f32 %v449, %v2080
        %v2082 = vand.u32 %v2081, 4294901760
        %2083 = vmatpush1.msra.mxu0 %v2082
        %2084 = vmatprep.subr.mxu0 0.0
        %v2085 = vand.u32 %v450, 4294901760
        %v2086 = vsub.f32 %v450, %v2085
        %v2087 = vand.u32 %v2086, 4294901760
        %2088 = vmatpush1.msra.mxu0 %v2087
        %2089 = vmatprep.subr.mxu0 0.0
        %v2090 = vand.u32 %v451, 4294901760
        %v2091 = vsub.f32 %v451, %v2090
        %v2092 = vand.u32 %v2091, 4294901760
        %2093 = vmatpush1.msra.mxu0 %v2092
        %2094 = vmatprep.subr.mxu0 0.0
        %v2095 = vand.u32 %v452, 4294901760
        %v2096 = vsub.f32 %v452, %v2095
        %v2097 = vand.u32 %v2096, 4294901760
        %2098 = vmatpush1.msra.mxu0 %v2097
        %2099 = vmatprep.subr.mxu0 0.0
        %v2100 = vand.u32 %v453, 4294901760
        %v2101 = vsub.f32 %v453, %v2100
        %v2102 = vand.u32 %v2101, 4294901760
        %2103 = vmatpush1.msra.mxu0 %v2102
        %2104 = vmatprep.subr.mxu0 0.0
        %v2105 = vand.u32 %v454, 4294901760
        %v2106 = vsub.f32 %v454, %v2105
        %v2107 = vand.u32 %v2106, 4294901760
        %2108 = vmatpush1.msra.mxu0 %v2107
        %2109 = vmatprep.subr.mxu0 0.0
        %v2110 = vand.u32 %v455, 4294901760
        %v2111 = vsub.f32 %v455, %v2110
        %v2112 = vand.u32 %v2111, 4294901760
        %2113 = vmatpush1.msra.mxu0 %v2112
        %2114 = vmatprep.subr.mxu0 0.0
        %v2115 = vand.u32 %v456, 4294901760
        %v2116 = vsub.f32 %v456, %v2115
        %v2117 = vand.u32 %v2116, 4294901760
        %2118 = vmatpush1.msra.mxu0 %v2117
        %2119 = vmatprep.subr.mxu0 0.0
        %v2120 = vand.u32 %v457, 4294901760
        %v2121 = vsub.f32 %v457, %v2120
        %v2122 = vand.u32 %v2121, 4294901760
        %2123 = vmatpush1.msra.mxu0 %v2122
        %2124 = vmatprep.subr.mxu0 0.0
        %v2125 = vand.u32 %v458, 4294901760
        %v2126 = vsub.f32 %v458, %v2125
        %v2127 = vand.u32 %v2126, 4294901760
        %2128 = vmatpush1.msra.mxu0 %v2127
        %2129 = vmatprep.subr.mxu0 0.0
        %v2130 = vand.u32 %v459, 4294901760
        %v2131 = vsub.f32 %v459, %v2130
        %v2132 = vand.u32 %v2131, 4294901760
        %2133 = vmatpush1.msra.mxu0 %v2132
        %2134 = vmatprep.subr.mxu0 0.0
        %v2135 = vand.u32 %v460, 4294901760
        %v2136 = vsub.f32 %v460, %v2135
        %v2137 = vand.u32 %v2136, 4294901760
        %2138 = vmatpush1.msra.mxu0 %v2137
        %2139 = vmatprep.subr.mxu0 0.0
        %v2140 = vand.u32 %v461, 4294901760
        %v2141 = vsub.f32 %v461, %v2140
        %v2142 = vand.u32 %v2141, 4294901760
        %2143 = vmatpush1.msra.mxu0 %v2142
        %2144 = vmatprep.subr.mxu0 0.0
        %2145 = vmatpush1.msra.mxu0 0.0
        %2146 = vmatprep.subr.mxu0 0.0
        %2147 = vmatpush1.msra.mxu0 0.0
        %2148 = vmatprep.subr.mxu0 0.0
        %2149 = vmatpush1.msra.mxu0 0.0
        %2150 = vmatprep.subr.mxu0 0.0
        %2151 = vmatpush1.msra.mxu0 0.0
        %2152 = vmatprep.subr.mxu0 0.0
        %2153 = vmatpush1.msra.mxu0 0.0
        %2154 = vmatprep.subr.mxu0 0.0
        %2155 = vmatpush1.msra.mxu0 0.0
        %2156 = vmatprep.subr.mxu0 0.0
        %2157 = vmatpush1.msra.mxu0 0.0
        %2158 = vmatprep.subr.mxu0 0.0
        %2159 = vmatpush1.msra.mxu0 0.0
        %2160 = vmatprep.subr.mxu0 0.0
        %2161 = vmatpush1.msra.mxu0 0.0
        %2162 = vmatprep.subr.mxu0 0.0
        %2163 = vmatpush1.msra.mxu0 0.0
        %2164 = vmatprep.subr.mxu0 0.0
        %2165 = vmatpush1.msra.mxu0 0.0
        %2166 = vmatprep.subr.mxu0 0.0
        %2167 = vmatpush1.msra.mxu0 0.0
        %2168 = vmatprep.subr.mxu0 0.0
        %2169 = vmatpush1.msra.mxu0 0.0
        %2170 = vmatprep.subr.mxu0 0.0
        %2171 = vmatpush1.msra.mxu0 0.0
        %2172 = vmatprep.subr.mxu0 0.0
        %2173 = vmatpush1.msra.mxu0 0.0
        %2174 = vmatprep.subr.mxu0 0.0
        %2175 = vmatpush1.msra.mxu0 0.0
        %2176 = vmatprep.mubr.f32.mxu0 0.0
        %v2177 = vand.u32 %v1404, 4294901760
        %2178 = vmatmul.mubr.f32.gmra.mrb[0].mxu0 %v2177
        %v2179 = vpop.f32.mrb[0].mxu0
        %v2180 = vadd.f32 %v2005, %v2179
        %v2181 = vpop.f32.mrb[0].mxu0
        %2182 = vmatprep.mubr.f32.mxu0 0.0
        %v2183 = vand.u32 %v1405, 4294901760
        %2184 = vmatmul.mubr.f32.gmra.mrb[0].mxu0 %v2183
        %v2185 = vpop.f32.mrb[0].mxu0
        %v2186 = vadd.f32 %v2013, %v2185
        %v2187 = vpop.f32.mrb[0].mxu0
        %2188 = vmatprep.mubr.f32.mxu0 0.0
        %v2189 = vand.u32 %v1406, 4294901760
        %2190 = vmatmul.mubr.f32.gmra.mrb[0].mxu0 %v2189
        %v2191 = vpop.f32.mrb[0].mxu0
        %v2192 = vadd.f32 %v2021, %v2191
        %v2193 = vpop.f32.mrb[0].mxu0
        %2194 = vmatprep.mubr.f32.mxu0 0.0
        %v2195 = vand.u32 %v1407, 4294901760
        %2196 = vmatmul.mubr.f32.gmra.mrb[0].mxu0 %v2195
        %v2197 = vpop.f32.mrb[0].mxu0
        %v2198 = vadd.f32 %v2029, %v2197
        %v2199 = vpop.f32.mrb[0].mxu0
        %2200 = vmatprep.mubr.f32.mxu0 0.0
        %v2201 = vand.u32 %v1408, 4294901760
        %2202 = vmatmul.mubr.f32.gmra.mrb[0].mxu0 %v2201
        %v2203 = vpop.f32.mrb[0].mxu0
        %v2204 = vadd.f32 %v2037, %v2203
        %v2205 = vpop.f32.mrb[0].mxu0
        %2206 = vmatprep.mubr.f32.mxu0 0.0
        %v2207 = vand.u32 %v1409, 4294901760
        %2208 = vmatmul.mubr.f32.gmra.mrb[0].mxu0 %v2207
        %v2209 = vpop.f32.mrb[0].mxu0
        %v2210 = vadd.f32 %v2045, %v2209
        %v2211 = vpop.f32.mrb[0].mxu0
        %2212 = vmatprep.mubr.f32.mxu0 0.0
        %v2213 = vand.u32 %v1410, 4294901760
        %2214 = vmatmul.mubr.f32.gmra.mrb[0].mxu0 %v2213
        %v2215 = vpop.f32.mrb[0].mxu0
        %v2216 = vadd.f32 %v2053, %v2215
        %v2217 = vpop.f32.mrb[0].mxu0
        %2218 = vmatprep.mubr.f32.mxu0 0.0
        %v2219 = vand.u32 %v1411, 4294901760
        %2220 = vmatmul.mubr.f32.gmra.mrb[0].mxu0 %v2219
        %v2221 = vpop.f32.mrb[0].mxu0
        %v2222 = vadd.f32 %v2061, %v2221
        %v2223 = vpop.f32.mrb[0].mxu0
        %2224 = vdwg.mxu0
        %2225 = vmatprep.subr.mxu0 0.0
        %v2226 = vand.u32 %v446, 4294901760
        %2227 = vmatpush1.msra.mxu0 %v2226
        %2228 = vmatprep.subr.mxu0 0.0
        %v2229 = vand.u32 %v447, 4294901760
        %2230 = vmatpush1.msra.mxu0 %v2229
        %2231 = vmatprep.subr.mxu0 0.0
        %v2232 = vand.u32 %v448, 4294901760
        %2233 = vmatpush1.msra.mxu0 %v2232
        %2234 = vmatprep.subr.mxu0 0.0
        %v2235 = vand.u32 %v449, 4294901760
        %2236 = vmatpush1.msra.mxu0 %v2235
        %2237 = vmatprep.subr.mxu0 0.0
        %v2238 = vand.u32 %v450, 4294901760
        %2239 = vmatpush1.msra.mxu0 %v2238
        %2240 = vmatprep.subr.mxu0 0.0
        %v2241 = vand.u32 %v451, 4294901760
        %2242 = vmatpush1.msra.mxu0 %v2241
        %2243 = vmatprep.subr.mxu0 0.0
        %v2244 = vand.u32 %v452, 4294901760
        %2245 = vmatpush1.msra.mxu0 %v2244
        %2246 = vmatprep.subr.mxu0 0.0
        %v2247 = vand.u32 %v453, 4294901760
        %2248 = vmatpush1.msra.mxu0 %v2247
        %2249 = vmatprep.subr.mxu0 0.0
        %v2250 = vand.u32 %v454, 4294901760
        %2251 = vmatpush1.msra.mxu0 %v2250
        %2252 = vmatprep.subr.mxu0 0.0
        %v2253 = vand.u32 %v455, 4294901760
        %2254 = vmatpush1.msra.mxu0 %v2253
        %2255 = vmatprep.subr.mxu0 0.0
        %v2256 = vand.u32 %v456, 4294901760
        %2257 = vmatpush1.msra.mxu0 %v2256
        %2258 = vmatprep.subr.mxu0 0.0
        %v2259 = vand.u32 %v457, 4294901760
        %2260 = vmatpush1.msra.mxu0 %v2259
        %2261 = vmatprep.subr.mxu0 0.0
        %v2262 = vand.u32 %v458, 4294901760
        %2263 = vmatpush1.msra.mxu0 %v2262
        %2264 = vmatprep.subr.mxu0 0.0
        %v2265 = vand.u32 %v459, 4294901760
        %2266 = vmatpush1.msra.mxu0 %v2265
        %2267 = vmatprep.subr.mxu0 0.0
        %v2268 = vand.u32 %v460, 4294901760
        %2269 = vmatpush1.msra.mxu0 %v2268
        %2270 = vmatprep.subr.mxu0 0.0
        %v2271 = vand.u32 %v461, 4294901760
        %2272 = vmatpush1.msra.mxu0 %v2271
        %2273 = vmatprep.subr.mxu0 0.0
        %2274 = vmatpush1.msra.mxu0 0.0
        %2275 = vmatprep.subr.mxu0 0.0
        %2276 = vmatpush1.msra.mxu0 0.0
        %2277 = vmatprep.subr.mxu0 0.0
        %2278 = vmatpush1.msra.mxu0 0.0
        %2279 = vmatprep.subr.mxu0 0.0
        %2280 = vmatpush1.msra.mxu0 0.0
        %2281 = vmatprep.subr.mxu0 0.0
        %2282 = vmatpush1.msra.mxu0 0.0
        %2283 = vmatprep.subr.mxu0 0.0
        %2284 = vmatpush1.msra.mxu0 0.0
        %2285 = vmatprep.subr.mxu0 0.0
        %2286 = vmatpush1.msra.mxu0 0.0
        %2287 = vmatprep.subr.mxu0 0.0
        %2288 = vmatpush1.msra.mxu0 0.0
        %2289 = vmatprep.subr.mxu0 0.0
        %2290 = vmatpush1.msra.mxu0 0.0
        %2291 = vmatprep.subr.mxu0 0.0
        %2292 = vmatpush1.msra.mxu0 0.0
        %2293 = vmatprep.subr.mxu0 0.0
        %2294 = vmatpush1.msra.mxu0 0.0
        %2295 = vmatprep.subr.mxu0 0.0
        %2296 = vmatpush1.msra.mxu0 0.0
        %2297 = vmatprep.subr.mxu0 0.0
        %2298 = vmatpush1.msra.mxu0 0.0
        %2299 = vmatprep.subr.mxu0 0.0
        %2300 = vmatpush1.msra.mxu0 0.0
        %2301 = vmatprep.subr.mxu0 0.0
        %2302 = vmatpush1.msra.mxu0 0.0
        %2303 = vmatprep.subr.mxu0 0.0
        %2304 = vmatpush1.msra.mxu0 0.0
        %2305 = vmatprep.mubr.f32.mxu0 0.0
        %v2306 = vand.u32 %v1404, 4294901760
        %2307 = vmatmul.mubr.f32.gmra.mrb[0].mxu0 %v2306
        %v2308 = vpop.f32.mrb[0].mxu0
        %v2309 = vadd.f32 %v2180, %v2308
        %v2310 = vpop.f32.mrb[0].mxu0
        %2311 = vmatprep.mubr.f32.mxu0 0.0
        %v2312 = vand.u32 %v1405, 4294901760
        %2313 = vmatmul.mubr.f32.gmra.mrb[0].mxu0 %v2312
        %v2314 = vpop.f32.mrb[0].mxu0
        %v2315 = vadd.f32 %v2186, %v2314
        %v2316 = vpop.f32.mrb[0].mxu0
        %2317 = vmatprep.mubr.f32.mxu0 0.0
        %v2318 = vand.u32 %v1406, 4294901760
        %2319 = vmatmul.mubr.f32.gmra.mrb[0].mxu0 %v2318
        %v2320 = vpop.f32.mrb[0].mxu0
        %v2321 = vadd.f32 %v2192, %v2320
        %v2322 = vpop.f32.mrb[0].mxu0
        %2323 = vmatprep.mubr.f32.mxu0 0.0
        %v2324 = vand.u32 %v1407, 4294901760
        %2325 = vmatmul.mubr.f32.gmra.mrb[0].mxu0 %v2324
        %v2326 = vpop.f32.mrb[0].mxu0
        %v2327 = vadd.f32 %v2198, %v2326
        %v2328 = vpop.f32.mrb[0].mxu0
        %2329 = vmatprep.mubr.f32.mxu0 0.0
        %v2330 = vand.u32 %v1408, 4294901760
        %2331 = vmatmul.mubr.f32.gmra.mrb[0].mxu0 %v2330
        %v2332 = vpop.f32.mrb[0].mxu0
        %v2333 = vadd.f32 %v2204, %v2332
        %v2334 = vpop.f32.mrb[0].mxu0
        %2335 = vmatprep.mubr.f32.mxu0 0.0
        %v2336 = vand.u32 %v1409, 4294901760
        %2337 = vmatmul.mubr.f32.gmra.mrb[0].mxu0 %v2336
        %v2338 = vpop.f32.mrb[0].mxu0
        %v2339 = vadd.f32 %v2210, %v2338
        %v2340 = vpop.f32.mrb[0].mxu0
        %2341 = vmatprep.mubr.f32.mxu0 0.0
        %v2342 = vand.u32 %v1410, 4294901760
        %2343 = vmatmul.mubr.f32.gmra.mrb[0].mxu0 %v2342
        %v2344 = vpop.f32.mrb[0].mxu0
        %v2345 = vadd.f32 %v2216, %v2344
        %v2346 = vpop.f32.mrb[0].mxu0
        %2347 = vmatprep.mubr.f32.mxu0 0.0
        %v2348 = vand.u32 %v1411, 4294901760
        %2349 = vmatmul.mubr.f32.gmra.mrb[0].mxu0 %v2348
        %v2350 = vpop.f32.mrb[0].mxu0
        %v2351 = vadd.f32 %v2222, %v2350
        %v2352 = vpop.f32.mrb[0].mxu0
        %2353 = vdwg.mxu0
        %v2354 = vmul.f32 %v1359, 0.03125
        %v2355 = vmul.f32 %v1365, 0.03125
        %v2356 = vmul.f32 %v1371, 0.03125
        %v2357 = vmul.f32 %v1377, 0.03125
        %v2358 = vmul.f32 %v1383, 0.03125
        %v2359 = vmul.f32 %v1389, 0.03125
        %v2360 = vmul.f32 %v1395, 0.03125
        %v2361 = vmul.f32 %v1401, 0.03125
        %v2362 = vmul.f32 %v2309, 0.03125
        %v2363 = vmul.f32 %v2315, 0.03125
        %v2364 = vmul.f32 %v2321, 0.03125
        %v2365 = vmul.f32 %v2327, 0.03125
        %v2366 = vmul.f32 %v2333, 0.03125
        %v2367 = vmul.f32 %v2339, 0.03125
        %v2368 = vmul.f32 %v2345, 0.03125
        %v2369 = vmul.f32 %v2351, 0.03125
        %v2370 = vmul.f32 %v2354, %v2354
        %v2371 = vmul.f32 %v2355, %v2355
        %v2372 = vmul.f32 %v2356, %v2356
        %v2373 = vmul.f32 %v2357, %v2357
        %v2374 = vmul.f32 %v2358, %v2358
        %v2375 = vmul.f32 %v2359, %v2359
        %v2376 = vmul.f32 %v2360, %v2360
        %v2377 = vmul.f32 %v2361, %v2361
        %v2378 = vsub.f32 %v2362, %v2370
        %v2379 = vsub.f32 %v2363, %v2371
        %v2380 = vsub.f32 %v2364, %v2372
        %v2381 = vsub.f32 %v2365, %v2373
        %v2382 = vsub.f32 %v2366, %v2374
        %v2383 = vsub.f32 %v2367, %v2375
        %v2384 = vsub.f32 %v2368, %v2376
        %v2385 = vsub.f32 %v2369, %v2377
        %v2386 = vsub.f32 %v438, %v2354
        %v2387 = vsub.f32 %v439, %v2355
        %v2388 = vsub.f32 %v440, %v2356
        %v2389 = vsub.f32 %v441, %v2357
        %v2390 = vsub.f32 %v442, %v2358
        %v2391 = vsub.f32 %v443, %v2359
        %v2392 = vsub.f32 %v444, %v2360
        %v2393 = vsub.f32 %v445, %v2361
        %v2394 = vadd.f32 %v2378, 1e-05
        %v2395 = vadd.f32 %v2379, 1e-05
        %v2396 = vadd.f32 %v2380, 1e-05
        %v2397 = vadd.f32 %v2381, 1e-05
        %v2398 = vadd.f32 %v2382, 1e-05
        %v2399 = vadd.f32 %v2383, 1e-05
        %v2400 = vadd.f32 %v2384, 1e-05
        %v2401 = vadd.f32 %v2385, 1e-05
        %v2402 = vrsqrt.pop %v2394
        %v2403 = vrsqrt.pop %v2395
        %v2404 = vrsqrt.pop %v2396
        %v2405 = vrsqrt.pop %v2397
        %v2406 = vrsqrt.pop %v2398
        %v2407 = vrsqrt.pop %v2399
        %v2408 = vrsqrt.pop %v2400
        %v2409 = vrsqrt.pop %v2401
        %v2410 = vmul.f32 %v2386, %v2402
        %v2411 = vmul.f32 %v2387, %v2403
        %v2412 = vmul.f32 %v2388, %v2404
        %v2413 = vmul.f32 %v2389, %v2405
        %v2414 = vmul.f32 %v2390, %v2406
        %v2415 = vmul.f32 %v2391, %v2407
        %v2416 = vmul.f32 %v2392, %v2408
        %v2417 = vmul.f32 %v2393, %v2409
        %v2418 = vld [vmem:[%s2] sm:$0x1]
        %v2420 = vlaneseq
        %v2421 = vshrl.u32 %v2420, 7
        %v2422 = vsub.s32 0, %v2421
        %v2423 = vrot.slane %v2418, %v2422
        %v2425 = vmul.f32 %v2410, %v2423
        %v2426 = vmul.f32 %v2411, %v2423
        %v2427 = vmul.f32 %v2412, %v2423
        %v2428 = vmul.f32 %v2413, %v2423
        %v2429 = vmul.f32 %v2414, %v2423
        %v2430 = vmul.f32 %v2415, %v2423
        %v2431 = vmul.f32 %v2416, %v2423
        %v2432 = vmul.f32 %v2417, %v2423
        %v2433 = vld [vmem:[%s3] sm:$0x1]
        %v2435 = vlaneseq
        %v2436 = vshrl.u32 %v2435, 7
        %v2437 = vsub.s32 0, %v2436
        %v2438 = vrot.slane %v2433, %v2437
        %v2440 = vadd.f32 %v2425, %v2438
        %v2441 = vadd.f32 %v2426, %v2438
        %v2442 = vadd.f32 %v2427, %v2438
        %v2443 = vadd.f32 %v2428, %v2438
        %v2444 = vadd.f32 %v2429, %v2438
        %v2445 = vadd.f32 %v2430, %v2438
        %v2446 = vadd.f32 %v2431, %v2438
        %v2447 = vadd.f32 %v2432, %v2438
        %v2448 = vld [vmem:[%s383] sm:$0xff]
        %v2449 = vld [vmem:[%s383 + $0x8] sm:$0xff]
        %v2450 = vld [vmem:[%s383 + $0x10] sm:$0xff]
        %v2451 = vld [vmem:[%s383 + $0x18] sm:$0xff]
        %v2452 = vld [vmem:[%s383 + $0x20] sm:$0xff]
        %v2453 = vld [vmem:[%s383 + $0x28] sm:$0xff]
        %v2454 = vld [vmem:[%s383 + $0x30] sm:$0xff]
        %v2455 = vld [vmem:[%s383 + $0x38] sm:$0xff]
        %v2456 = vld [vmem:[%s383 + $0x40] sm:$0xff]
        %v2457 = vld [vmem:[%s383 + $0x48] sm:$0xff]
        %v2458 = vld [vmem:[%s383 + $0x50] sm:$0xff]
        %v2459 = vld [vmem:[%s383 + $0x58] sm:$0xff]
        %v2460 = vld [vmem:[%s383 + $0x60] sm:$0xff]
        %v2461 = vld [vmem:[%s383 + $0x68] sm:$0xff]
        %v2462 = vld [vmem:[%s383 + $0x70] sm:$0xff]
        %v2463 = vld [vmem:[%s383 + $0x78] sm:$0xff]
        %v2464 = vsub.f32 0.0, %v2448
        %v2465 = vsub.f32 0.0, %v2449
        %v2466 = vsub.f32 0.0, %v2450
        %v2467 = vsub.f32 0.0, %v2451
        %v2468 = vsub.f32 0.0, %v2452
        %v2469 = vsub.f32 0.0, %v2453
        %v2470 = vsub.f32 0.0, %v2454
        %v2471 = vsub.f32 0.0, %v2455
        %v2472 = vsub.f32 0.0, %v2456
        %v2473 = vsub.f32 0.0, %v2457
        %v2474 = vsub.f32 0.0, %v2458
        %v2475 = vsub.f32 0.0, %v2459
        %v2476 = vsub.f32 0.0, %v2460
        %v2477 = vsub.f32 0.0, %v2461
        %v2478 = vsub.f32 0.0, %v2462
        %v2479 = vsub.f32 0.0, %v2463
        %v2480 = vmul.f32 %v2464, 1.442695
        %v2481 = vpow.pop %v2480
        %v2482 = vmul.f32 %v2465, 1.442695
        %v2483 = vpow.pop %v2482
        %v2484 = vmul.f32 %v2466, 1.442695
        %v2485 = vpow.pop %v2484
        %v2486 = vmul.f32 %v2467, 1.442695
        %v2487 = vpow.pop %v2486
        %v2488 = vmul.f32 %v2468, 1.442695
        %v2489 = vpow.pop %v2488
        %v2490 = vmul.f32 %v2469, 1.442695
        %v2491 = vpow.pop %v2490
        %v2492 = vmul.f32 %v2470, 1.442695
        %v2493 = vpow.pop %v2492
        %v2494 = vmul.f32 %v2471, 1.442695
        %v2495 = vpow.pop %v2494
        %v2496 = vmul.f32 %v2472, 1.442695
        %v2497 = vpow.pop %v2496
        %v2498 = vmul.f32 %v2473, 1.442695
        %v2499 = vpow.pop %v2498
        %v2500 = vmul.f32 %v2474, 1.442695
        %v2501 = vpow.pop %v2500
        %v2502 = vmul.f32 %v2475, 1.442695
        %v2503 = vpow.pop %v2502
        %v2504 = vmul.f32 %v2476, 1.442695
        %v2505 = vpow.pop %v2504
        %v2506 = vmul.f32 %v2477, 1.442695
        %v2507 = vpow.pop %v2506
        %v2508 = vmul.f32 %v2478, 1.442695
        %v2509 = vpow.pop %v2508
        %v2510 = vmul.f32 %v2479, 1.442695
        %v2511 = vpow.pop %v2510
        %v2512 = vadd.f32 %v2481, 1.0
        %v2513 = vadd.f32 %v2483, 1.0
        %v2514 = vadd.f32 %v2485, 1.0
        %v2515 = vadd.f32 %v2487, 1.0
        %v2516 = vadd.f32 %v2489, 1.0
        %v2517 = vadd.f32 %v2491, 1.0
        %v2518 = vadd.f32 %v2493, 1.0
        %v2519 = vadd.f32 %v2495, 1.0
        %v2520 = vadd.f32 %v2497, 1.0
        %v2521 = vadd.f32 %v2499, 1.0
        %v2522 = vadd.f32 %v2501, 1.0
        %v2523 = vadd.f32 %v2503, 1.0
        %v2524 = vadd.f32 %v2505, 1.0
        %v2525 = vadd.f32 %v2507, 1.0
        %v2526 = vadd.f32 %v2509, 1.0
        %v2527 = vadd.f32 %v2511, 1.0
        %v2528 = vrcp.pop %v2512
        %v2529 = vrcp.pop %v2513
        %v2530 = vrcp.pop %v2514
        %v2531 = vrcp.pop %v2515
        %v2532 = vrcp.pop %v2516
        %v2533 = vrcp.pop %v2517
        %v2534 = vrcp.pop %v2518
        %v2535 = vrcp.pop %v2519
        %v2536 = vrcp.pop %v2520
        %v2537 = vrcp.pop %v2521
        %v2538 = vrcp.pop %v2522
        %v2539 = vrcp.pop %v2523
        %v2540 = vrcp.pop %v2524
        %v2541 = vrcp.pop %v2525
        %v2542 = vrcp.pop %v2526
        %v2543 = vrcp.pop %v2527
        %v2544 = vmul.f32 %v2448, %v2528
        %v2545 = vmul.f32 %v2449, %v2529
        %v2546 = vmul.f32 %v2450, %v2530
        %v2547 = vmul.f32 %v2451, %v2531
        %v2548 = vmul.f32 %v2452, %v2532
        %v2549 = vmul.f32 %v2453, %v2533
        %v2550 = vmul.f32 %v2454, %v2534
        %v2551 = vmul.f32 %v2455, %v2535
        %v2552 = vmul.f32 %v2456, %v2536
        %v2553 = vmul.f32 %v2457, %v2537
        %v2554 = vmul.f32 %v2458, %v2538
        %v2555 = vmul.f32 %v2459, %v2539
        %v2556 = vmul.f32 %v2460, %v2540
        %v2557 = vmul.f32 %v2461, %v2541
        %v2558 = vmul.f32 %v2462, %v2542
        %v2559 = vmul.f32 %v2463, %v2543
        %v2560 = vld [vmem:[#allocation7] sm:$0xff]
        %v2561 = vld [vmem:[#allocation7 + $0x8] sm:$0xff]
        %v2562 = vld [vmem:[#allocation7 + $0x10] sm:$0xff]
        %v2563 = vld [vmem:[#allocation7 + $0x18] sm:$0xff]
        %v2564 = vld [vmem:[#allocation7 + $0x20] sm:$0xff]
        %v2565 = vld [vmem:[#allocation7 + $0x28] sm:$0xff]
        %v2566 = vld [vmem:[#allocation7 + $0x30] sm:$0xff]
        %v2567 = vld [vmem:[#allocation7 + $0x38] sm:$0xff]
        %v2568 = vld [vmem:[#allocation7 + $0x40] sm:$0xff]
        %v2569 = vld [vmem:[#allocation7 + $0x48] sm:$0xff]
        %v2570 = vld [vmem:[#allocation7 + $0x50] sm:$0xff]
        %v2571 = vld [vmem:[#allocation7 + $0x58] sm:$0xff]
        %v2572 = vld [vmem:[#allocation7 + $0x60] sm:$0xff]
        %v2573 = vld [vmem:[#allocation7 + $0x68] sm:$0xff]
        %v2574 = vld [vmem:[#allocation7 + $0x70] sm:$0xff]
        %v2575 = vld [vmem:[#allocation7 + $0x78] sm:$0xff]
        %v2576 = vld [vmem:[#allocation7 + $0x80] sm:$0xff]
        %v2577 = vld [vmem:[#allocation7 + $0x88] sm:$0xff]
        %v2578 = vld [vmem:[#allocation7 + $0x90] sm:$0xff]
        %v2579 = vld [vmem:[#allocation7 + $0x98] sm:$0xff]
        %v2580 = vld [vmem:[#allocation7 + $0xa0] sm:$0xff]
        %v2581 = vld [vmem:[#allocation7 + $0xa8] sm:$0xff]
        %v2582 = vld [vmem:[#allocation7 + $0xb0] sm:$0xff]
        %v2583 = vld [vmem:[#allocation7 + $0xb8] sm:$0xff]
        %v2584 = vld [vmem:[#allocation7 + $0xc0] sm:$0xff]
        %v2585 = vld [vmem:[#allocation7 + $0xc8] sm:$0xff]
        %v2586 = vld [vmem:[#allocation7 + $0xd0] sm:$0xff]
        %v2587 = vld [vmem:[#allocation7 + $0xd8] sm:$0xff]
        %v2588 = vld [vmem:[#allocation7 + $0xe0] sm:$0xff]
        %v2589 = vld [vmem:[#allocation7 + $0xe8] sm:$0xff]
        %v2590 = vld [vmem:[#allocation7 + $0xf0] sm:$0xff]
        %v2591 = vld [vmem:[#allocation7 + $0xf8] sm:$0xff]
        %v2592 = vld [vmem:[%s6] sm:$0x1]
        %v2594 = vlaneseq
        %v2595 = vshrl.u32 %v2594, 7
        %v2596 = vsub.s32 0, %v2595
        %v2597 = vrot.slane %v2592, %v2596
        %2599 = vmatprep.subr.mxu0 0.0
        %v2600 = vand.u32 %v2560, 4294901760
        %2601 = vmatpush1.msra.mxu0 %v2600
        %2602 = vmatprep.subr.mxu0 0.0
        %v2603 = vand.u32 %v2561, 4294901760
        %2604 = vmatpush1.msra.mxu0 %v2603
        %2605 = vmatprep.subr.mxu0 0.0
        %v2606 = vand.u32 %v2562, 4294901760
        %2607 = vmatpush1.msra.mxu0 %v2606
        %2608 = vmatprep.subr.mxu0 0.0
        %v2609 = vand.u32 %v2563, 4294901760
        %2610 = vmatpush1.msra.mxu0 %v2609
        %2611 = vmatprep.subr.mxu0 0.0
        %v2612 = vand.u32 %v2564, 4294901760
        %2613 = vmatpush1.msra.mxu0 %v2612
        %2614 = vmatprep.subr.mxu0 0.0
        %v2615 = vand.u32 %v2565, 4294901760
        %2616 = vmatpush1.msra.mxu0 %v2615
        %2617 = vmatprep.subr.mxu0 0.0
        %v2618 = vand.u32 %v2566, 4294901760
        %2619 = vmatpush1.msra.mxu0 %v2618
        %2620 = vmatprep.subr.mxu0 0.0
        %v2621 = vand.u32 %v2567, 4294901760
        %2622 = vmatpush1.msra.mxu0 %v2621
        %2623 = vmatprep.subr.mxu0 0.0
        %v2624 = vand.u32 %v2568, 4294901760
        %2625 = vmatpush1.msra.mxu0 %v2624
        %2626 = vmatprep.subr.mxu0 0.0
        %v2627 = vand.u32 %v2569, 4294901760
        %2628 = vmatpush1.msra.mxu0 %v2627
        %2629 = vmatprep.subr.mxu0 0.0
        %v2630 = vand.u32 %v2570, 4294901760
        %2631 = vmatpush1.msra.mxu0 %v2630
        %2632 = vmatprep.subr.mxu0 0.0
        %v2633 = vand.u32 %v2571, 4294901760
        %2634 = vmatpush1.msra.mxu0 %v2633
        %2635 = vmatprep.subr.mxu0 0.0
        %v2636 = vand.u32 %v2572, 4294901760
        %2637 = vmatpush1.msra.mxu0 %v2636
        %2638 = vmatprep.subr.mxu0 0.0
        %v2639 = vand.u32 %v2573, 4294901760
        %2640 = vmatpush1.msra.mxu0 %v2639
        %2641 = vmatprep.subr.mxu0 0.0
        %v2642 = vand.u32 %v2574, 4294901760
        %2643 = vmatpush1.msra.mxu0 %v2642
        %2644 = vmatprep.subr.mxu0 0.0
        %v2645 = vand.u32 %v2575, 4294901760
        %2646 = vmatpush1.msra.mxu0 %v2645
        %2647 = vmatprep.subr.mxu0 0.0
        %v2648 = vand.u32 %v2576, 4294901760
        %2649 = vmatpush1.msra.mxu0 %v2648
        %2650 = vmatprep.subr.mxu0 0.0
        %v2651 = vand.u32 %v2577, 4294901760
        %2652 = vmatpush1.msra.mxu0 %v2651
        %2653 = vmatprep.subr.mxu0 0.0
        %v2654 = vand.u32 %v2578, 4294901760
        %2655 = vmatpush1.msra.mxu0 %v2654
        %2656 = vmatprep.subr.mxu0 0.0
        %v2657 = vand.u32 %v2579, 4294901760
        %2658 = vmatpush1.msra.mxu0 %v2657
        %2659 = vmatprep.subr.mxu0 0.0
        %v2660 = vand.u32 %v2580, 4294901760
        %2661 = vmatpush1.msra.mxu0 %v2660
        %2662 = vmatprep.subr.mxu0 0.0
        %v2663 = vand.u32 %v2581, 4294901760
        %2664 = vmatpush1.msra.mxu0 %v2663
        %2665 = vmatprep.subr.mxu0 0.0
        %v2666 = vand.u32 %v2582, 4294901760
        %2667 = vmatpush1.msra.mxu0 %v2666
        %2668 = vmatprep.subr.mxu0 0.0
        %v2669 = vand.u32 %v2583, 4294901760
        %2670 = vmatpush1.msra.mxu0 %v2669
        %2671 = vmatprep.subr.mxu0 0.0
        %v2672 = vand.u32 %v2584, 4294901760
        %2673 = vmatpush1.msra.mxu0 %v2672
        %2674 = vmatprep.subr.mxu0 0.0
        %v2675 = vand.u32 %v2585, 4294901760
        %2676 = vmatpush1.msra.mxu0 %v2675
        %2677 = vmatprep.subr.mxu0 0.0
        %v2678 = vand.u32 %v2586, 4294901760
        %2679 = vmatpush1.msra.mxu0 %v2678
        %2680 = vmatprep.subr.mxu0 0.0
        %v2681 = vand.u32 %v2587, 4294901760
        %2682 = vmatpush1.msra.mxu0 %v2681
        %2683 = vmatprep.subr.mxu0 0.0
        %v2684 = vand.u32 %v2588, 4294901760
        %2685 = vmatpush1.msra.mxu0 %v2684
        %2686 = vmatprep.subr.mxu0 0.0
        %v2687 = vand.u32 %v2589, 4294901760
        %2688 = vmatpush1.msra.mxu0 %v2687
        %2689 = vmatprep.subr.mxu0 0.0
        %v2690 = vand.u32 %v2590, 4294901760
        %2691 = vmatpush1.msra.mxu0 %v2690
        %2692 = vmatprep.subr.mxu0 0.0
        %v2693 = vand.u32 %v2591, 4294901760
        %2694 = vmatpush1.msra.mxu0 %v2693
        %v2695 = vand.u32 %v2545, 4294901760
        %v2696 = vsub.f32 %v2545, %v2695
        %v2697 = vand.u32 %v2696, 4294901760
        %v2698 = vsub.f32 %v2696, %v2697
        %v2699 = vand.u32 %v2698, 4294901760
        %2700 = vmatprep.mubr.f32.mxu0 %v2699
        %v2701 = vand.u32 %v2544, 4294901760
        %v2702 = vsub.f32 %v2544, %v2701
        %v2703 = vand.u32 %v2702, 4294901760
        %v2704 = vsub.f32 %v2702, %v2703
        %v2705 = vand.u32 %v2704, 4294901760
        %2706 = vmatmul.mubr.f32.gmra.mrb[0].mxu0 %v2705
        %v2707 = vpop.f32.mrb[0].mxu0
        %v2708 = vadd.f32 %v2597, %v2707
        %v2709 = vpop.f32.mrb[0].mxu0
        %v2710 = vand.u32 %v2547, 4294901760
        %v2711 = vsub.f32 %v2547, %v2710
        %v2712 = vand.u32 %v2711, 4294901760
        %v2713 = vsub.f32 %v2711, %v2712
        %v2714 = vand.u32 %v2713, 4294901760
        %2715 = vmatprep.mubr.f32.mxu0 %v2714
        %v2716 = vand.u32 %v2546, 4294901760
        %v2717 = vsub.f32 %v2546, %v2716
        %v2718 = vand.u32 %v2717, 4294901760
        %v2719 = vsub.f32 %v2717, %v2718
        %v2720 = vand.u32 %v2719, 4294901760
        %2721 = vmatmul.mubr.f32.gmra.mrb[0].mxu0 %v2720
        %v2722 = vpop.f32.mrb[0].mxu0
        %v2723 = vadd.f32 %v2597, %v2722
        %v2724 = vpop.f32.mrb[0].mxu0
        %v2725 = vand.u32 %v2549, 4294901760
        %v2726 = vsub.f32 %v2549, %v2725
        %v2727 = vand.u32 %v2726, 4294901760
        %v2728 = vsub.f32 %v2726, %v2727
        %v2729 = vand.u32 %v2728, 4294901760
        %2730 = vmatprep.mubr.f32.mxu0 %v2729
        %v2731 = vand.u32 %v2548, 4294901760
        %v2732 = vsub.f32 %v2548, %v2731
        %v2733 = vand.u32 %v2732, 4294901760
        %v2734 = vsub.f32 %v2732, %v2733
        %v2735 = vand.u32 %v2734, 4294901760
        %2736 = vmatmul.mubr.f32.gmra.mrb[0].mxu0 %v2735
        %v2737 = vpop.f32.mrb[0].mxu0
        %v2738 = vadd.f32 %v2597, %v2737
        %v2739 = vpop.f32.mrb[0].mxu0
        %v2740 = vand.u32 %v2551, 4294901760
        %v2741 = vsub.f32 %v2551, %v2740
        %v2742 = vand.u32 %v2741, 4294901760
        %v2743 = vsub.f32 %v2741, %v2742
        %v2744 = vand.u32 %v2743, 4294901760
        %2745 = vmatprep.mubr.f32.mxu0 %v2744
        %v2746 = vand.u32 %v2550, 4294901760
        %v2747 = vsub.f32 %v2550, %v2746
        %v2748 = vand.u32 %v2747, 4294901760
        %v2749 = vsub.f32 %v2747, %v2748
        %v2750 = vand.u32 %v2749, 4294901760
        %2751 = vmatmul.mubr.f32.gmra.mrb[0].mxu0 %v2750
        %v2752 = vpop.f32.mrb[0].mxu0
        %v2753 = vadd.f32 %v2597, %v2752
        %v2754 = vpop.f32.mrb[0].mxu0
        %v2755 = vand.u32 %v2553, 4294901760
        %v2756 = vsub.f32 %v2553, %v2755
        %v2757 = vand.u32 %v2756, 4294901760
        %v2758 = vsub.f32 %v2756, %v2757
        %v2759 = vand.u32 %v2758, 4294901760
        %2760 = vmatprep.mubr.f32.mxu0 %v2759
        %v2761 = vand.u32 %v2552, 4294901760
        %v2762 = vsub.f32 %v2552, %v2761
        %v2763 = vand.u32 %v2762, 4294901760
        %v2764 = vsub.f32 %v2762, %v2763
        %v2765 = vand.u32 %v2764, 4294901760
        %2766 = vmatmul.mubr.f32.gmra.mrb[0].mxu0 %v2765
        %v2767 = vpop.f32.mrb[0].mxu0
        %v2768 = vadd.f32 %v2597, %v2767
        %v2769 = vpop.f32.mrb[0].mxu0
        %v2770 = vand.u32 %v2555, 4294901760
        %v2771 = vsub.f32 %v2555, %v2770
        %v2772 = vand.u32 %v2771, 4294901760
        %v2773 = vsub.f32 %v2771, %v2772
        %v2774 = vand.u32 %v2773, 4294901760
        %2775 = vmatprep.mubr.f32.mxu0 %v2774
        %v2776 = vand.u32 %v2554, 4294901760
        %v2777 = vsub.f32 %v2554, %v2776
        %v2778 = vand.u32 %v2777, 4294901760
        %v2779 = vsub.f32 %v2777, %v2778
        %v2780 = vand.u32 %v2779, 4294901760
        %2781 = vmatmul.mubr.f32.gmra.mrb[0].mxu0 %v2780
        %v2782 = vpop.f32.mrb[0].mxu0
        %v2783 = vadd.f32 %v2597, %v2782
        %v2784 = vpop.f32.mrb[0].mxu0
        %v2785 = vand.u32 %v2557, 4294901760
        %v2786 = vsub.f32 %v2557, %v2785
        %v2787 = vand.u32 %v2786, 4294901760
        %v2788 = vsub.f32 %v2786, %v2787
        %v2789 = vand.u32 %v2788, 4294901760
        %2790 = vmatprep.mubr.f32.mxu0 %v2789
        %v2791 = vand.u32 %v2556, 4294901760
        %v2792 = vsub.f32 %v2556, %v2791
        %v2793 = vand.u32 %v2792, 4294901760
        %v2794 = vsub.f32 %v2792, %v2793
        %v2795 = vand.u32 %v2794, 4294901760
        %2796 = vmatmul.mubr.f32.gmra.mrb[0].mxu0 %v2795
        %v2797 = vpop.f32.mrb[0].mxu0
        %v2798 = vadd.f32 %v2597, %v2797
        %v2799 = vpop.f32.mrb[0].mxu0
        %v2800 = vand.u32 %v2559, 4294901760
        %v2801 = vsub.f32 %v2559, %v2800
        %v2802 = vand.u32 %v2801, 4294901760
        %v2803 = vsub.f32 %v2801, %v2802
        %v2804 = vand.u32 %v2803, 4294901760
        %2805 = vmatprep.mubr.f32.mxu0 %v2804
        %v2806 = vand.u32 %v2558, 4294901760
        %v2807 = vsub.f32 %v2558, %v2806
        %v2808 = vand.u32 %v2807, 4294901760
        %v2809 = vsub.f32 %v2807, %v2808
        %v2810 = vand.u32 %v2809, 4294901760
        %2811 = vmatmul.mubr.f32.gmra.mrb[0].mxu0 %v2810
        %v2812 = vpop.f32.mrb[0].mxu0
        %v2813 = vadd.f32 %v2597, %v2812
        %v2814 = vpop.f32.mrb[0].mxu0
        %2815 = vdwg.mxu0
        %2816 = vmatprep.subr.mxu0 0.0
        %v2817 = vand.u32 %v2560, 4294901760
        %v2818 = vsub.f32 %v2560, %v2817
        %v2819 = vand.u32 %v2818, 4294901760
        %v2820 = vsub.f32 %v2818, %v2819
        %v2821 = vand.u32 %v2820, 4294901760
        %2822 = vmatpush1.msra.mxu0 %v2821
        %2823 = vmatprep.subr.mxu0 0.0
        %v2824 = vand.u32 %v2561, 4294901760
        %v2825 = vsub.f32 %v2561, %v2824
        %v2826 = vand.u32 %v2825, 4294901760
        %v2827 = vsub.f32 %v2825, %v2826
        %v2828 = vand.u32 %v2827, 4294901760
        %2829 = vmatpush1.msra.mxu0 %v2828
        %2830 = vmatprep.subr.mxu0 0.0
        %v2831 = vand.u32 %v2562, 4294901760
        %v2832 = vsub.f32 %v2562, %v2831
        %v2833 = vand.u32 %v2832, 4294901760
        %v2834 = vsub.f32 %v2832, %v2833
        %v2835 = vand.u32 %v2834, 4294901760
        %2836 = vmatpush1.msra.mxu0 %v2835
        %2837 = vmatprep.subr.mxu0 0.0
        %v2838 = vand.u32 %v2563, 4294901760
        %v2839 = vsub.f32 %v2563, %v2838
        %v2840 = vand.u32 %v2839, 4294901760
        %v2841 = vsub.f32 %v2839, %v2840
        %v2842 = vand.u32 %v2841, 4294901760
        %2843 = vmatpush1.msra.mxu0 %v2842
        %2844 = vmatprep.subr.mxu0 0.0
        %v2845 = vand.u32 %v2564, 4294901760
        %v2846 = vsub.f32 %v2564, %v2845
        %v2847 = vand.u32 %v2846, 4294901760
        %v2848 = vsub.f32 %v2846, %v2847
        %v2849 = vand.u32 %v2848, 4294901760
        %2850 = vmatpush1.msra.mxu0 %v2849
        %2851 = vmatprep.subr.mxu0 0.0
        %v2852 = vand.u32 %v2565, 4294901760
        %v2853 = vsub.f32 %v2565, %v2852
        %v2854 = vand.u32 %v2853, 4294901760
        %v2855 = vsub.f32 %v2853, %v2854
        %v2856 = vand.u32 %v2855, 4294901760
        %2857 = vmatpush1.msra.mxu0 %v2856
        %2858 = vmatprep.subr.mxu0 0.0
        %v2859 = vand.u32 %v2566, 4294901760
        %v2860 = vsub.f32 %v2566, %v2859
        %v2861 = vand.u32 %v2860, 4294901760
        %v2862 = vsub.f32 %v2860, %v2861
        %v2863 = vand.u32 %v2862, 4294901760
        %2864 = vmatpush1.msra.mxu0 %v2863
        %2865 = vmatprep.subr.mxu0 0.0
        %v2866 = vand.u32 %v2567, 4294901760
        %v2867 = vsub.f32 %v2567, %v2866
        %v2868 = vand.u32 %v2867, 4294901760
        %v2869 = vsub.f32 %v2867, %v2868
        %v2870 = vand.u32 %v2869, 4294901760
        %2871 = vmatpush1.msra.mxu0 %v2870
        %2872 = vmatprep.subr.mxu0 0.0
        %v2873 = vand.u32 %v2568, 4294901760
        %v2874 = vsub.f32 %v2568, %v2873
        %v2875 = vand.u32 %v2874, 4294901760
        %v2876 = vsub.f32 %v2874, %v2875
        %v2877 = vand.u32 %v2876, 4294901760
        %2878 = vmatpush1.msra.mxu0 %v2877
        %2879 = vmatprep.subr.mxu0 0.0
        %v2880 = vand.u32 %v2569, 4294901760
        %v2881 = vsub.f32 %v2569, %v2880
        %v2882 = vand.u32 %v2881, 4294901760
        %v2883 = vsub.f32 %v2881, %v2882
        %v2884 = vand.u32 %v2883, 4294901760
        %2885 = vmatpush1.msra.mxu0 %v2884
        %2886 = vmatprep.subr.mxu0 0.0
        %v2887 = vand.u32 %v2570, 4294901760
        %v2888 = vsub.f32 %v2570, %v2887
        %v2889 = vand.u32 %v2888, 4294901760
        %v2890 = vsub.f32 %v2888, %v2889
        %v2891 = vand.u32 %v2890, 4294901760
        %2892 = vmatpush1.msra.mxu0 %v2891
        %2893 = vmatprep.subr.mxu0 0.0
        %v2894 = vand.u32 %v2571, 4294901760
        %v2895 = vsub.f32 %v2571, %v2894
        %v2896 = vand.u32 %v2895, 4294901760
        %v2897 = vsub.f32 %v2895, %v2896
        %v2898 = vand.u32 %v2897, 4294901760
        %2899 = vmatpush1.msra.mxu0 %v2898
        %2900 = vmatprep.subr.mxu0 0.0
        %v2901 = vand.u32 %v2572, 4294901760
        %v2902 = vsub.f32 %v2572, %v2901
        %v2903 = vand.u32 %v2902, 4294901760
        %v2904 = vsub.f32 %v2902, %v2903
        %v2905 = vand.u32 %v2904, 4294901760
        %2906 = vmatpush1.msra.mxu0 %v2905
        %2907 = vmatprep.subr.mxu0 0.0
        %v2908 = vand.u32 %v2573, 4294901760
        %v2909 = vsub.f32 %v2573, %v2908
        %v2910 = vand.u32 %v2909, 4294901760
        %v2911 = vsub.f32 %v2909, %v2910
        %v2912 = vand.u32 %v2911, 4294901760
        %2913 = vmatpush1.msra.mxu0 %v2912
        %2914 = vmatprep.subr.mxu0 0.0
        %v2915 = vand.u32 %v2574, 4294901760
        %v2916 = vsub.f32 %v2574, %v2915
        %v2917 = vand.u32 %v2916, 4294901760
        %v2918 = vsub.f32 %v2916, %v2917
        %v2919 = vand.u32 %v2918, 4294901760
        %2920 = vmatpush1.msra.mxu0 %v2919
        %2921 = vmatprep.subr.mxu0 0.0
        %v2922 = vand.u32 %v2575, 4294901760
        %v2923 = vsub.f32 %v2575, %v2922
        %v2924 = vand.u32 %v2923, 4294901760
        %v2925 = vsub.f32 %v2923, %v2924
        %v2926 = vand.u32 %v2925, 4294901760
        %2927 = vmatpush1.msra.mxu0 %v2926
        %2928 = vmatprep.subr.mxu0 0.0
        %v2929 = vand.u32 %v2576, 4294901760
        %v2930 = vsub.f32 %v2576, %v2929
        %v2931 = vand.u32 %v2930, 4294901760
        %v2932 = vsub.f32 %v2930, %v2931
        %v2933 = vand.u32 %v2932, 4294901760
        %2934 = vmatpush1.msra.mxu0 %v2933
        %2935 = vmatprep.subr.mxu0 0.0
        %v2936 = vand.u32 %v2577, 4294901760
        %v2937 = vsub.f32 %v2577, %v2936
        %v2938 = vand.u32 %v2937, 4294901760
        %v2939 = vsub.f32 %v2937, %v2938
        %v2940 = vand.u32 %v2939, 4294901760
        %2941 = vmatpush1.msra.mxu0 %v2940
        %2942 = vmatprep.subr.mxu0 0.0
        %v2943 = vand.u32 %v2578, 4294901760
        %v2944 = vsub.f32 %v2578, %v2943
        %v2945 = vand.u32 %v2944, 4294901760
        %v2946 = vsub.f32 %v2944, %v2945
        %v2947 = vand.u32 %v2946, 4294901760
        %2948 = vmatpush1.msra.mxu0 %v2947
        %2949 = vmatprep.subr.mxu0 0.0
        %v2950 = vand.u32 %v2579, 4294901760
        %v2951 = vsub.f32 %v2579, %v2950
        %v2952 = vand.u32 %v2951, 4294901760
        %v2953 = vsub.f32 %v2951, %v2952
        %v2954 = vand.u32 %v2953, 4294901760
        %2955 = vmatpush1.msra.mxu0 %v2954
        %2956 = vmatprep.subr.mxu0 0.0
        %v2957 = vand.u32 %v2580, 4294901760
        %v2958 = vsub.f32 %v2580, %v2957
        %v2959 = vand.u32 %v2958, 4294901760
        %v2960 = vsub.f32 %v2958, %v2959
        %v2961 = vand.u32 %v2960, 4294901760
        %2962 = vmatpush1.msra.mxu0 %v2961
        %2963 = vmatprep.subr.mxu0 0.0
        %v2964 = vand.u32 %v2581, 4294901760
        %v2965 = vsub.f32 %v2581, %v2964
        %v2966 = vand.u32 %v2965, 4294901760
        %v2967 = vsub.f32 %v2965, %v2966
        %v2968 = vand.u32 %v2967, 4294901760
        %2969 = vmatpush1.msra.mxu0 %v2968
        %2970 = vmatprep.subr.mxu0 0.0
        %v2971 = vand.u32 %v2582, 4294901760
        %v2972 = vsub.f32 %v2582, %v2971
        %v2973 = vand.u32 %v2972, 4294901760
        %v2974 = vsub.f32 %v2972, %v2973
        %v2975 = vand.u32 %v2974, 4294901760
        %2976 = vmatpush1.msra.mxu0 %v2975
        %2977 = vmatprep.subr.mxu0 0.0
        %v2978 = vand.u32 %v2583, 4294901760
        %v2979 = vsub.f32 %v2583, %v2978
        %v2980 = vand.u32 %v2979, 4294901760
        %v2981 = vsub.f32 %v2979, %v2980
        %v2982 = vand.u32 %v2981, 4294901760
        %2983 = vmatpush1.msra.mxu0 %v2982
        %2984 = vmatprep.subr.mxu0 0.0
        %v2985 = vand.u32 %v2584, 4294901760
        %v2986 = vsub.f32 %v2584, %v2985
        %v2987 = vand.u32 %v2986, 4294901760
        %v2988 = vsub.f32 %v2986, %v2987
        %v2989 = vand.u32 %v2988, 4294901760
        %2990 = vmatpush1.msra.mxu0 %v2989
        %2991 = vmatprep.subr.mxu0 0.0
        %v2992 = vand.u32 %v2585, 4294901760
        %v2993 = vsub.f32 %v2585, %v2992
        %v2994 = vand.u32 %v2993, 4294901760
        %v2995 = vsub.f32 %v2993, %v2994
        %v2996 = vand.u32 %v2995, 4294901760
        %2997 = vmatpush1.msra.mxu0 %v2996
        %2998 = vmatprep.subr.mxu0 0.0
        %v2999 = vand.u32 %v2586, 4294901760
        %v3000 = vsub.f32 %v2586, %v2999
        %v3001 = vand.u32 %v3000, 4294901760
        %v3002 = vsub.f32 %v3000, %v3001
        %v3003 = vand.u32 %v3002, 4294901760
        %3004 = vmatpush1.msra.mxu0 %v3003
        %3005 = vmatprep.subr.mxu0 0.0
        %v3006 = vand.u32 %v2587, 4294901760
        %v3007 = vsub.f32 %v2587, %v3006
        %v3008 = vand.u32 %v3007, 4294901760
        %v3009 = vsub.f32 %v3007, %v3008
        %v3010 = vand.u32 %v3009, 4294901760
        %3011 = vmatpush1.msra.mxu0 %v3010
        %3012 = vmatprep.subr.mxu0 0.0
        %v3013 = vand.u32 %v2588, 4294901760
        %v3014 = vsub.f32 %v2588, %v3013
        %v3015 = vand.u32 %v3014, 4294901760
        %v3016 = vsub.f32 %v3014, %v3015
        %v3017 = vand.u32 %v3016, 4294901760
        %3018 = vmatpush1.msra.mxu0 %v3017
        %3019 = vmatprep.subr.mxu0 0.0
        %v3020 = vand.u32 %v2589, 4294901760
        %v3021 = vsub.f32 %v2589, %v3020
        %v3022 = vand.u32 %v3021, 4294901760
        %v3023 = vsub.f32 %v3021, %v3022
        %v3024 = vand.u32 %v3023, 4294901760
        %3025 = vmatpush1.msra.mxu0 %v3024
        %3026 = vmatprep.subr.mxu0 0.0
        %v3027 = vand.u32 %v2590, 4294901760
        %v3028 = vsub.f32 %v2590, %v3027
        %v3029 = vand.u32 %v3028, 4294901760
        %v3030 = vsub.f32 %v3028, %v3029
        %v3031 = vand.u32 %v3030, 4294901760
        %3032 = vmatpush1.msra.mxu0 %v3031
        %3033 = vmatprep.subr.mxu0 0.0
        %v3034 = vand.u32 %v2591, 4294901760
        %v3035 = vsub.f32 %v2591, %v3034
        %v3036 = vand.u32 %v3035, 4294901760
        %v3037 = vsub.f32 %v3035, %v3036
        %v3038 = vand.u32 %v3037, 4294901760
        %3039 = vmatpush1.msra.mxu0 %v3038
        %v3040 = vand.u32 %v2545, 4294901760
        %3041 = vmatprep.mubr.f32.mxu0 %v3040
        %v3042 = vand.u32 %v2544, 4294901760
        %3043 = vmatmul.mubr.f32.gmra.mrb[0].mxu0 %v3042
        %v3044 = vpop.f32.mrb[0].mxu0
        %v3045 = vadd.f32 %v2708, %v3044
        %v3046 = vpop.f32.mrb[0].mxu0
        %v3047 = vand.u32 %v2547, 4294901760
        %3048 = vmatprep.mubr.f32.mxu0 %v3047
        %v3049 = vand.u32 %v2546, 4294901760
        %3050 = vmatmul.mubr.f32.gmra.mrb[0].mxu0 %v3049
        %v3051 = vpop.f32.mrb[0].mxu0
        %v3052 = vadd.f32 %v2723, %v3051
        %v3053 = vpop.f32.mrb[0].mxu0
        %v3054 = vand.u32 %v2549, 4294901760
        %3055 = vmatprep.mubr.f32.mxu0 %v3054
        %v3056 = vand.u32 %v2548, 4294901760
        %3057 = vmatmul.mubr.f32.gmra.mrb[0].mxu0 %v3056
        %v3058 = vpop.f32.mrb[0].mxu0
        %v3059 = vadd.f32 %v2738, %v3058
        %v3060 = vpop.f32.mrb[0].mxu0
        %v3061 = vand.u32 %v2551, 4294901760
        %3062 = vmatprep.mubr.f32.mxu0 %v3061
        %v3063 = vand.u32 %v2550, 4294901760
        %3064 = vmatmul.mubr.f32.gmra.mrb[0].mxu0 %v3063
        %v3065 = vpop.f32.mrb[0].mxu0
        %v3066 = vadd.f32 %v2753, %v3065
        %v3067 = vpop.f32.mrb[0].mxu0
        %v3068 = vand.u32 %v2553, 4294901760
        %3069 = vmatprep.mubr.f32.mxu0 %v3068
        %v3070 = vand.u32 %v2552, 4294901760
        %3071 = vmatmul.mubr.f32.gmra.mrb[0].mxu0 %v3070
        %v3072 = vpop.f32.mrb[0].mxu0
        %v3073 = vadd.f32 %v2768, %v3072
        %v3074 = vpop.f32.mrb[0].mxu0
        %v3075 = vand.u32 %v2555, 4294901760
        %3076 = vmatprep.mubr.f32.mxu0 %v3075
        %v3077 = vand.u32 %v2554, 4294901760
        %3078 = vmatmul.mubr.f32.gmra.mrb[0].mxu0 %v3077
        %v3079 = vpop.f32.mrb[0].mxu0
        %v3080 = vadd.f32 %v2783, %v3079
        %v3081 = vpop.f32.mrb[0].mxu0
        %v3082 = vand.u32 %v2557, 4294901760
        %3083 = vmatprep.mubr.f32.mxu0 %v3082
        %v3084 = vand.u32 %v2556, 4294901760
        %3085 = vmatmul.mubr.f32.gmra.mrb[0].mxu0 %v3084
        %v3086 = vpop.f32.mrb[0].mxu0
        %v3087 = vadd.f32 %v2798, %v3086
        %v3088 = vpop.f32.mrb[0].mxu0
        %v3089 = vand.u32 %v2559, 4294901760
        %3090 = vmatprep.mubr.f32.mxu0 %v3089
        %v3091 = vand.u32 %v2558, 4294901760
        %3092 = vmatmul.mubr.f32.gmra.mrb[0].mxu0 %v3091
        %v3093 = vpop.f32.mrb[0].mxu0
        %v3094 = vadd.f32 %v2813, %v3093
        %v3095 = vpop.f32.mrb[0].mxu0
        %3096 = vdwg.mxu0
        %3097 = vmatprep.subr.mxu0 0.0
        %v3098 = vand.u32 %v2560, 4294901760
        %v3099 = vsub.f32 %v2560, %v3098
        %3100 = vmatpush1.msra.mxu0 %v3099
        %3101 = vmatprep.subr.mxu0 0.0
        %v3102 = vand.u32 %v2561, 4294901760
        %v3103 = vsub.f32 %v2561, %v3102
        %3104 = vmatpush1.msra.mxu0 %v3103
        %3105 = vmatprep.subr.mxu0 0.0
        %v3106 = vand.u32 %v2562, 4294901760
        %v3107 = vsub.f32 %v2562, %v3106
        %3108 = vmatpush1.msra.mxu0 %v3107
        %3109 = vmatprep.subr.mxu0 0.0
        %v3110 = vand.u32 %v2563, 4294901760
        %v3111 = vsub.f32 %v2563, %v3110
        %3112 = vmatpush1.msra.mxu0 %v3111
        %3113 = vmatprep.subr.mxu0 0.0
        %v3114 = vand.u32 %v2564, 4294901760
        %v3115 = vsub.f32 %v2564, %v3114
        %3116 = vmatpush1.msra.mxu0 %v3115
        %3117 = vmatprep.subr.mxu0 0.0
        %v3118 = vand.u32 %v2565, 4294901760
        %v3119 = vsub.f32 %v2565, %v3118
        %3120 = vmatpush1.msra.mxu0 %v3119
        %3121 = vmatprep.subr.mxu0 0.0
        %v3122 = vand.u32 %v2566, 4294901760
        %v3123 = vsub.f32 %v2566, %v3122
        %3124 = vmatpush1.msra.mxu0 %v3123
        %3125 = vmatprep.subr.mxu0 0.0
        %v3126 = vand.u32 %v2567, 4294901760
        %v3127 = vsub.f32 %v2567, %v3126
        %3128 = vmatpush1.msra.mxu0 %v3127
        %3129 = vmatprep.subr.mxu0 0.0
        %v3130 = vand.u32 %v2568, 4294901760
        %v3131 = vsub.f32 %v2568, %v3130
        %3132 = vmatpush1.msra.mxu0 %v3131
        %3133 = vmatprep.subr.mxu0 0.0
        %v3134 = vand.u32 %v2569, 4294901760
        %v3135 = vsub.f32 %v2569, %v3134
        %3136 = vmatpush1.msra.mxu0 %v3135
        %3137 = vmatprep.subr.mxu0 0.0
        %v3138 = vand.u32 %v2570, 4294901760
        %v3139 = vsub.f32 %v2570, %v3138
        %3140 = vmatpush1.msra.mxu0 %v3139
        %3141 = vmatprep.subr.mxu0 0.0
        %v3142 = vand.u32 %v2571, 4294901760
        %v3143 = vsub.f32 %v2571, %v3142
        %3144 = vmatpush1.msra.mxu0 %v3143
        %3145 = vmatprep.subr.mxu0 0.0
        %v3146 = vand.u32 %v2572, 4294901760
        %v3147 = vsub.f32 %v2572, %v3146
        %3148 = vmatpush1.msra.mxu0 %v3147
        %3149 = vmatprep.subr.mxu0 0.0
        %v3150 = vand.u32 %v2573, 4294901760
        %v3151 = vsub.f32 %v2573, %v3150
        %3152 = vmatpush1.msra.mxu0 %v3151
        %3153 = vmatprep.subr.mxu0 0.0
        %v3154 = vand.u32 %v2574, 4294901760
        %v3155 = vsub.f32 %v2574, %v3154
        %3156 = vmatpush1.msra.mxu0 %v3155
        %3157 = vmatprep.subr.mxu0 0.0
        %v3158 = vand.u32 %v2575, 4294901760
        %v3159 = vsub.f32 %v2575, %v3158
        %3160 = vmatpush1.msra.mxu0 %v3159
        %3161 = vmatprep.subr.mxu0 0.0
        %v3162 = vand.u32 %v2576, 4294901760
        %v3163 = vsub.f32 %v2576, %v3162
        %3164 = vmatpush1.msra.mxu0 %v3163
        %3165 = vmatprep.subr.mxu0 0.0
        %v3166 = vand.u32 %v2577, 4294901760
        %v3167 = vsub.f32 %v2577, %v3166
        %3168 = vmatpush1.msra.mxu0 %v3167
        %3169 = vmatprep.subr.mxu0 0.0
        %v3170 = vand.u32 %v2578, 4294901760
        %v3171 = vsub.f32 %v2578, %v3170
        %3172 = vmatpush1.msra.mxu0 %v3171
        %3173 = vmatprep.subr.mxu0 0.0
        %v3174 = vand.u32 %v2579, 4294901760
        %v3175 = vsub.f32 %v2579, %v3174
        %3176 = vmatpush1.msra.mxu0 %v3175
        %3177 = vmatprep.subr.mxu0 0.0
        %v3178 = vand.u32 %v2580, 4294901760
        %v3179 = vsub.f32 %v2580, %v3178
        %3180 = vmatpush1.msra.mxu0 %v3179
        %3181 = vmatprep.subr.mxu0 0.0
        %v3182 = vand.u32 %v2581, 4294901760
        %v3183 = vsub.f32 %v2581, %v3182
        %3184 = vmatpush1.msra.mxu0 %v3183
        %3185 = vmatprep.subr.mxu0 0.0
        %v3186 = vand.u32 %v2582, 4294901760
        %v3187 = vsub.f32 %v2582, %v3186
        %3188 = vmatpush1.msra.mxu0 %v3187
        %3189 = vmatprep.subr.mxu0 0.0
        %v3190 = vand.u32 %v2583, 4294901760
        %v3191 = vsub.f32 %v2583, %v3190
        %3192 = vmatpush1.msra.mxu0 %v3191
        %3193 = vmatprep.subr.mxu0 0.0
        %v3194 = vand.u32 %v2584, 4294901760
        %v3195 = vsub.f32 %v2584, %v3194
        %3196 = vmatpush1.msra.mxu0 %v3195
        %3197 = vmatprep.subr.mxu0 0.0
        %v3198 = vand.u32 %v2585, 4294901760
        %v3199 = vsub.f32 %v2585, %v3198
        %3200 = vmatpush1.msra.mxu0 %v3199
        %3201 = vmatprep.subr.mxu0 0.0
        %v3202 = vand.u32 %v2586, 4294901760
        %v3203 = vsub.f32 %v2586, %v3202
        %3204 = vmatpush1.msra.mxu0 %v3203
        %3205 = vmatprep.subr.mxu0 0.0
        %v3206 = vand.u32 %v2587, 4294901760
        %v3207 = vsub.f32 %v2587, %v3206
        %3208 = vmatpush1.msra.mxu0 %v3207
        %3209 = vmatprep.subr.mxu0 0.0
        %v3210 = vand.u32 %v2588, 4294901760
        %v3211 = vsub.f32 %v2588, %v3210
        %3212 = vmatpush1.msra.mxu0 %v3211
        %3213 = vmatprep.subr.mxu0 0.0
        %v3214 = vand.u32 %v2589, 4294901760
        %v3215 = vsub.f32 %v2589, %v3214
        %3216 = vmatpush1.msra.mxu0 %v3215
        %3217 = vmatprep.subr.mxu0 0.0
        %v3218 = vand.u32 %v2590, 4294901760
        %v3219 = vsub.f32 %v2590, %v3218
        %3220 = vmatpush1.msra.mxu0 %v3219
        %3221 = vmatprep.subr.mxu0 0.0
        %v3222 = vand.u32 %v2591, 4294901760
        %v3223 = vsub.f32 %v2591, %v3222
        %3224 = vmatpush1.msra.mxu0 %v3223
        %v3225 = vand.u32 %v2545, 4294901760
        %v3226 = vsub.f32 %v2545, %v3225
        %3227 = vmatprep.mubr.f32.mxu0 %v3226
        %v3228 = vand.u32 %v2544, 4294901760
        %v3229 = vsub.f32 %v2544, %v3228
        %3230 = vmatmul.mubr.f32.gmra.mrb[0].mxu0 %v3229
        %v3231 = vpop.f32.mrb[0].mxu0
        %v3232 = vadd.f32 %v3045, %v3231
        %v3233 = vpop.f32.mrb[0].mxu0
        %v3234 = vand.u32 %v2547, 4294901760
        %v3235 = vsub.f32 %v2547, %v3234
        %3236 = vmatprep.mubr.f32.mxu0 %v3235
        %v3237 = vand.u32 %v2546, 4294901760
        %v3238 = vsub.f32 %v2546, %v3237
        %3239 = vmatmul.mubr.f32.gmra.mrb[0].mxu0 %v3238
        %v3240 = vpop.f32.mrb[0].mxu0
        %v3241 = vadd.f32 %v3052, %v3240
        %v3242 = vpop.f32.mrb[0].mxu0
        %v3243 = vand.u32 %v2549, 4294901760
        %v3244 = vsub.f32 %v2549, %v3243
        %3245 = vmatprep.mubr.f32.mxu0 %v3244
        %v3246 = vand.u32 %v2548, 4294901760
        %v3247 = vsub.f32 %v2548, %v3246
        %3248 = vmatmul.mubr.f32.gmra.mrb[0].mxu0 %v3247
        %v3249 = vpop.f32.mrb[0].mxu0
        %v3250 = vadd.f32 %v3059, %v3249
        %v3251 = vpop.f32.mrb[0].mxu0
        %v3252 = vand.u32 %v2551, 4294901760
        %v3253 = vsub.f32 %v2551, %v3252
        %3254 = vmatprep.mubr.f32.mxu0 %v3253
        %v3255 = vand.u32 %v2550, 4294901760
        %v3256 = vsub.f32 %v2550, %v3255
        %3257 = vmatmul.mubr.f32.gmra.mrb[0].mxu0 %v3256
        %v3258 = vpop.f32.mrb[0].mxu0
        %v3259 = vadd.f32 %v3066, %v3258
        %v3260 = vpop.f32.mrb[0].mxu0
        %v3261 = vand.u32 %v2553, 4294901760
        %v3262 = vsub.f32 %v2553, %v3261
        %3263 = vmatprep.mubr.f32.mxu0 %v3262
        %v3264 = vand.u32 %v2552, 4294901760
        %v3265 = vsub.f32 %v2552, %v3264
        %3266 = vmatmul.mubr.f32.gmra.mrb[0].mxu0 %v3265
        %v3267 = vpop.f32.mrb[0].mxu0
        %v3268 = vadd.f32 %v3073, %v3267
        %v3269 = vpop.f32.mrb[0].mxu0
        %v3270 = vand.u32 %v2555, 4294901760
        %v3271 = vsub.f32 %v2555, %v3270
        %3272 = vmatprep.mubr.f32.mxu0 %v3271
        %v3273 = vand.u32 %v2554, 4294901760
        %v3274 = vsub.f32 %v2554, %v3273
        %3275 = vmatmul.mubr.f32.gmra.mrb[0].mxu0 %v3274
        %v3276 = vpop.f32.mrb[0].mxu0
        %v3277 = vadd.f32 %v3080, %v3276
        %v3278 = vpop.f32.mrb[0].mxu0
        %v3279 = vand.u32 %v2557, 4294901760
        %v3280 = vsub.f32 %v2557, %v3279
        %3281 = vmatprep.mubr.f32.mxu0 %v3280
        %v3282 = vand.u32 %v2556, 4294901760
        %v3283 = vsub.f32 %v2556, %v3282
        %3284 = vmatmul.mubr.f32.gmra.mrb[0].mxu0 %v3283
        %v3285 = vpop.f32.mrb[0].mxu0
        %v3286 = vadd.f32 %v3087, %v3285
        %v3287 = vpop.f32.mrb[0].mxu0
        %v3288 = vand.u32 %v2559, 4294901760
        %v3289 = vsub.f32 %v2559, %v3288
        %3290 = vmatprep.mubr.f32.mxu0 %v3289
        %v3291 = vand.u32 %v2558, 4294901760
        %v3292 = vsub.f32 %v2558, %v3291
        %3293 = vmatmul.mubr.f32.gmra.mrb[0].mxu0 %v3292
        %v3294 = vpop.f32.mrb[0].mxu0
        %v3295 = vadd.f32 %v3094, %v3294
        %v3296 = vpop.f32.mrb[0].mxu0
        %3297 = vdwg.mxu0
        %3298 = vmatprep.subr.mxu0 0.0
        %v3299 = vand.u32 %v2560, 4294901760
        %3300 = vmatpush1.msra.mxu0 %v3299
        %3301 = vmatprep.subr.mxu0 0.0
        %v3302 = vand.u32 %v2561, 4294901760
        %3303 = vmatpush1.msra.mxu0 %v3302
        %3304 = vmatprep.subr.mxu0 0.0
        %v3305 = vand.u32 %v2562, 4294901760
        %3306 = vmatpush1.msra.mxu0 %v3305
        %3307 = vmatprep.subr.mxu0 0.0
        %v3308 = vand.u32 %v2563, 4294901760
        %3309 = vmatpush1.msra.mxu0 %v3308
        %3310 = vmatprep.subr.mxu0 0.0
        %v3311 = vand.u32 %v2564, 4294901760
        %3312 = vmatpush1.msra.mxu0 %v3311
        %3313 = vmatprep.subr.mxu0 0.0
        %v3314 = vand.u32 %v2565, 4294901760
        %3315 = vmatpush1.msra.mxu0 %v3314
        %3316 = vmatprep.subr.mxu0 0.0
        %v3317 = vand.u32 %v2566, 4294901760
        %3318 = vmatpush1.msra.mxu0 %v3317
        %3319 = vmatprep.subr.mxu0 0.0
        %v3320 = vand.u32 %v2567, 4294901760
        %3321 = vmatpush1.msra.mxu0 %v3320
        %3322 = vmatprep.subr.mxu0 0.0
        %v3323 = vand.u32 %v2568, 4294901760
        %3324 = vmatpush1.msra.mxu0 %v3323
        %3325 = vmatprep.subr.mxu0 0.0
        %v3326 = vand.u32 %v2569, 4294901760
        %3327 = vmatpush1.msra.mxu0 %v3326
        %3328 = vmatprep.subr.mxu0 0.0
        %v3329 = vand.u32 %v2570, 4294901760
        %3330 = vmatpush1.msra.mxu0 %v3329
        %3331 = vmatprep.subr.mxu0 0.0
        %v3332 = vand.u32 %v2571, 4294901760
        %3333 = vmatpush1.msra.mxu0 %v3332
        %3334 = vmatprep.subr.mxu0 0.0
        %v3335 = vand.u32 %v2572, 4294901760
        %3336 = vmatpush1.msra.mxu0 %v3335
        %3337 = vmatprep.subr.mxu0 0.0
        %v3338 = vand.u32 %v2573, 4294901760
        %3339 = vmatpush1.msra.mxu0 %v3338
        %3340 = vmatprep.subr.mxu0 0.0
        %v3341 = vand.u32 %v2574, 4294901760
        %3342 = vmatpush1.msra.mxu0 %v3341
        %3343 = vmatprep.subr.mxu0 0.0
        %v3344 = vand.u32 %v2575, 4294901760
        %3345 = vmatpush1.msra.mxu0 %v3344
        %3346 = vmatprep.subr.mxu0 0.0
        %v3347 = vand.u32 %v2576, 4294901760
        %3348 = vmatpush1.msra.mxu0 %v3347
        %3349 = vmatprep.subr.mxu0 0.0
        %v3350 = vand.u32 %v2577, 4294901760
        %3351 = vmatpush1.msra.mxu0 %v3350
        %3352 = vmatprep.subr.mxu0 0.0
        %v3353 = vand.u32 %v2578, 4294901760
        %3354 = vmatpush1.msra.mxu0 %v3353
        %3355 = vmatprep.subr.mxu0 0.0
        %v3356 = vand.u32 %v2579, 4294901760
        %3357 = vmatpush1.msra.mxu0 %v3356
        %3358 = vmatprep.subr.mxu0 0.0
        %v3359 = vand.u32 %v2580, 4294901760
        %3360 = vmatpush1.msra.mxu0 %v3359
        %3361 = vmatprep.subr.mxu0 0.0
        %v3362 = vand.u32 %v2581, 4294901760
        %3363 = vmatpush1.msra.mxu0 %v3362
        %3364 = vmatprep.subr.mxu0 0.0
        %v3365 = vand.u32 %v2582, 4294901760
        %3366 = vmatpush1.msra.mxu0 %v3365
        %3367 = vmatprep.subr.mxu0 0.0
        %v3368 = vand.u32 %v2583, 4294901760
        %3369 = vmatpush1.msra.mxu0 %v3368
        %3370 = vmatprep.subr.mxu0 0.0
        %v3371 = vand.u32 %v2584, 4294901760
        %3372 = vmatpush1.msra.mxu0 %v3371
        %3373 = vmatprep.subr.mxu0 0.0
        %v3374 = vand.u32 %v2585, 4294901760
        %3375 = vmatpush1.msra.mxu0 %v3374
        %3376 = vmatprep.subr.mxu0 0.0
        %v3377 = vand.u32 %v2586, 4294901760
        %3378 = vmatpush1.msra.mxu0 %v3377
        %3379 = vmatprep.subr.mxu0 0.0
        %v3380 = vand.u32 %v2587, 4294901760
        %3381 = vmatpush1.msra.mxu0 %v3380
        %3382 = vmatprep.subr.mxu0 0.0
        %v3383 = vand.u32 %v2588, 4294901760
        %3384 = vmatpush1.msra.mxu0 %v3383
        %3385 = vmatprep.subr.mxu0 0.0
        %v3386 = vand.u32 %v2589, 4294901760
        %3387 = vmatpush1.msra.mxu0 %v3386
        %3388 = vmatprep.subr.mxu0 0.0
        %v3389 = vand.u32 %v2590, 4294901760
        %3390 = vmatpush1.msra.mxu0 %v3389
        %3391 = vmatprep.subr.mxu0 0.0
        %v3392 = vand.u32 %v2591, 4294901760
        %3393 = vmatpush1.msra.mxu0 %v3392
        %v3394 = vand.u32 %v2545, 4294901760
        %v3395 = vsub.f32 %v2545, %v3394
        %v3396 = vand.u32 %v3395, 4294901760
        %3397 = vmatprep.mubr.f32.mxu0 %v3396
        %v3398 = vand.u32 %v2544, 4294901760
        %v3399 = vsub.f32 %v2544, %v3398
        %v3400 = vand.u32 %v3399, 4294901760
        %3401 = vmatmul.mubr.f32.gmra.mrb[0].mxu0 %v3400
        %v3402 = vpop.f32.mrb[0].mxu0
        %v3403 = vadd.f32 %v3232, %v3402
        %v3404 = vpop.f32.mrb[0].mxu0
        %v3405 = vand.u32 %v2547, 4294901760
        %v3406 = vsub.f32 %v2547, %v3405
        %v3407 = vand.u32 %v3406, 4294901760
        %3408 = vmatprep.mubr.f32.mxu0 %v3407
        %v3409 = vand.u32 %v2546, 4294901760
        %v3410 = vsub.f32 %v2546, %v3409
        %v3411 = vand.u32 %v3410, 4294901760
        %3412 = vmatmul.mubr.f32.gmra.mrb[0].mxu0 %v3411
        %v3413 = vpop.f32.mrb[0].mxu0
        %v3414 = vadd.f32 %v3241, %v3413
        %v3415 = vpop.f32.mrb[0].mxu0
        %v3416 = vand.u32 %v2549, 4294901760
        %v3417 = vsub.f32 %v2549, %v3416
        %v3418 = vand.u32 %v3417, 4294901760
        %3419 = vmatprep.mubr.f32.mxu0 %v3418
        %v3420 = vand.u32 %v2548, 4294901760
        %v3421 = vsub.f32 %v2548, %v3420
        %v3422 = vand.u32 %v3421, 4294901760
        %3423 = vmatmul.mubr.f32.gmra.mrb[0].mxu0 %v3422
        %v3424 = vpop.f32.mrb[0].mxu0
        %v3425 = vadd.f32 %v3250, %v3424
        %v3426 = vpop.f32.mrb[0].mxu0
        %v3427 = vand.u32 %v2551, 4294901760
        %v3428 = vsub.f32 %v2551, %v3427
        %v3429 = vand.u32 %v3428, 4294901760
        %3430 = vmatprep.mubr.f32.mxu0 %v3429
        %v3431 = vand.u32 %v2550, 4294901760
        %v3432 = vsub.f32 %v2550, %v3431
        %v3433 = vand.u32 %v3432, 4294901760
        %3434 = vmatmul.mubr.f32.gmra.mrb[0].mxu0 %v3433
        %v3435 = vpop.f32.mrb[0].mxu0
        %v3436 = vadd.f32 %v3259, %v3435
        %v3437 = vpop.f32.mrb[0].mxu0
        %v3438 = vand.u32 %v2553, 4294901760
        %v3439 = vsub.f32 %v2553, %v3438
        %v3440 = vand.u32 %v3439, 4294901760
        %3441 = vmatprep.mubr.f32.mxu0 %v3440
        %v3442 = vand.u32 %v2552, 4294901760
        %v3443 = vsub.f32 %v2552, %v3442
        %v3444 = vand.u32 %v3443, 4294901760
        %3445 = vmatmul.mubr.f32.gmra.mrb[0].mxu0 %v3444
        %v3446 = vpop.f32.mrb[0].mxu0
        %v3447 = vadd.f32 %v3268, %v3446
        %v3448 = vpop.f32.mrb[0].mxu0
        %v3449 = vand.u32 %v2555, 4294901760
        %v3450 = vsub.f32 %v2555, %v3449
        %v3451 = vand.u32 %v3450, 4294901760
        %3452 = vmatprep.mubr.f32.mxu0 %v3451
        %v3453 = vand.u32 %v2554, 4294901760
        %v3454 = vsub.f32 %v2554, %v3453
        %v3455 = vand.u32 %v3454, 4294901760
        %3456 = vmatmul.mubr.f32.gmra.mrb[0].mxu0 %v3455
        %v3457 = vpop.f32.mrb[0].mxu0
        %v3458 = vadd.f32 %v3277, %v3457
        %v3459 = vpop.f32.mrb[0].mxu0
        %v3460 = vand.u32 %v2557, 4294901760
        %v3461 = vsub.f32 %v2557, %v3460
        %v3462 = vand.u32 %v3461, 4294901760
        %3463 = vmatprep.mubr.f32.mxu0 %v3462
        %v3464 = vand.u32 %v2556, 4294901760
        %v3465 = vsub.f32 %v2556, %v3464
        %v3466 = vand.u32 %v3465, 4294901760
        %3467 = vmatmul.mubr.f32.gmra.mrb[0].mxu0 %v3466
        %v3468 = vpop.f32.mrb[0].mxu0
        %v3469 = vadd.f32 %v3286, %v3468
        %v3470 = vpop.f32.mrb[0].mxu0
        %v3471 = vand.u32 %v2559, 4294901760
        %v3472 = vsub.f32 %v2559, %v3471
        %v3473 = vand.u32 %v3472, 4294901760
        %3474 = vmatprep.mubr.f32.mxu0 %v3473
        %v3475 = vand.u32 %v2558, 4294901760
        %v3476 = vsub.f32 %v2558, %v3475
        %v3477 = vand.u32 %v3476, 4294901760
        %3478 = vmatmul.mubr.f32.gmra.mrb[0].mxu0 %v3477
        %v3479 = vpop.f32.mrb[0].mxu0
        %v3480 = vadd.f32 %v3295, %v3479
        %v3481 = vpop.f32.mrb[0].mxu0
        %3482 = vdwg.mxu0
        %3483 = vmatprep.subr.mxu0 0.0
        %v3484 = vand.u32 %v2560, 4294901760
        %v3485 = vsub.f32 %v2560, %v3484
        %v3486 = vand.u32 %v3485, 4294901760
        %3487 = vmatpush1.msra.mxu0 %v3486
        %3488 = vmatprep.subr.mxu0 0.0
        %v3489 = vand.u32 %v2561, 4294901760
        %v3490 = vsub.f32 %v2561, %v3489
        %v3491 = vand.u32 %v3490, 4294901760
        %3492 = vmatpush1.msra.mxu0 %v3491
        %3493 = vmatprep.subr.mxu0 0.0
        %v3494 = vand.u32 %v2562, 4294901760
        %v3495 = vsub.f32 %v2562, %v3494
        %v3496 = vand.u32 %v3495, 4294901760
        %3497 = vmatpush1.msra.mxu0 %v3496
        %3498 = vmatprep.subr.mxu0 0.0
        %v3499 = vand.u32 %v2563, 4294901760
        %v3500 = vsub.f32 %v2563, %v3499
        %v3501 = vand.u32 %v3500, 4294901760
        %3502 = vmatpush1.msra.mxu0 %v3501
        %3503 = vmatprep.subr.mxu0 0.0
        %v3504 = vand.u32 %v2564, 4294901760
        %v3505 = vsub.f32 %v2564, %v3504
        %v3506 = vand.u32 %v3505, 4294901760
        %3507 = vmatpush1.msra.mxu0 %v3506
        %3508 = vmatprep.subr.mxu0 0.0
        %v3509 = vand.u32 %v2565, 4294901760
        %v3510 = vsub.f32 %v2565, %v3509
        %v3511 = vand.u32 %v3510, 4294901760
        %3512 = vmatpush1.msra.mxu0 %v3511
        %3513 = vmatprep.subr.mxu0 0.0
        %v3514 = vand.u32 %v2566, 4294901760
        %v3515 = vsub.f32 %v2566, %v3514
        %v3516 = vand.u32 %v3515, 4294901760
        %3517 = vmatpush1.msra.mxu0 %v3516
        %3518 = vmatprep.subr.mxu0 0.0
        %v3519 = vand.u32 %v2567, 4294901760
        %v3520 = vsub.f32 %v2567, %v3519
        %v3521 = vand.u32 %v3520, 4294901760
        %3522 = vmatpush1.msra.mxu0 %v3521
        %3523 = vmatprep.subr.mxu0 0.0
        %v3524 = vand.u32 %v2568, 4294901760
        %v3525 = vsub.f32 %v2568, %v3524
        %v3526 = vand.u32 %v3525, 4294901760
        %3527 = vmatpush1.msra.mxu0 %v3526
        %3528 = vmatprep.subr.mxu0 0.0
        %v3529 = vand.u32 %v2569, 4294901760
        %v3530 = vsub.f32 %v2569, %v3529
        %v3531 = vand.u32 %v3530, 4294901760
        %3532 = vmatpush1.msra.mxu0 %v3531
        %3533 = vmatprep.subr.mxu0 0.0
        %v3534 = vand.u32 %v2570, 4294901760
        %v3535 = vsub.f32 %v2570, %v3534
        %v3536 = vand.u32 %v3535, 4294901760
        %3537 = vmatpush1.msra.mxu0 %v3536
        %3538 = vmatprep.subr.mxu0 0.0
        %v3539 = vand.u32 %v2571, 4294901760
        %v3540 = vsub.f32 %v2571, %v3539
        %v3541 = vand.u32 %v3540, 4294901760
        %3542 = vmatpush1.msra.mxu0 %v3541
        %3543 = vmatprep.subr.mxu0 0.0
        %v3544 = vand.u32 %v2572, 4294901760
        %v3545 = vsub.f32 %v2572, %v3544
        %v3546 = vand.u32 %v3545, 4294901760
        %3547 = vmatpush1.msra.mxu0 %v3546
        %3548 = vmatprep.subr.mxu0 0.0
        %v3549 = vand.u32 %v2573, 4294901760
        %v3550 = vsub.f32 %v2573, %v3549
        %v3551 = vand.u32 %v3550, 4294901760
        %3552 = vmatpush1.msra.mxu0 %v3551
        %3553 = vmatprep.subr.mxu0 0.0
        %v3554 = vand.u32 %v2574, 4294901760
        %v3555 = vsub.f32 %v2574, %v3554
        %v3556 = vand.u32 %v3555, 4294901760
        %3557 = vmatpush1.msra.mxu0 %v3556
        %3558 = vmatprep.subr.mxu0 0.0
        %v3559 = vand.u32 %v2575, 4294901760
        %v3560 = vsub.f32 %v2575, %v3559
        %v3561 = vand.u32 %v3560, 4294901760
        %3562 = vmatpush1.msra.mxu0 %v3561
        %3563 = vmatprep.subr.mxu0 0.0
        %v3564 = vand.u32 %v2576, 4294901760
        %v3565 = vsub.f32 %v2576, %v3564
        %v3566 = vand.u32 %v3565, 4294901760
        %3567 = vmatpush1.msra.mxu0 %v3566
        %3568 = vmatprep.subr.mxu0 0.0
        %v3569 = vand.u32 %v2577, 4294901760
        %v3570 = vsub.f32 %v2577, %v3569
        %v3571 = vand.u32 %v3570, 4294901760
        %3572 = vmatpush1.msra.mxu0 %v3571
        %3573 = vmatprep.subr.mxu0 0.0
        %v3574 = vand.u32 %v2578, 4294901760
        %v3575 = vsub.f32 %v2578, %v3574
        %v3576 = vand.u32 %v3575, 4294901760
        %3577 = vmatpush1.msra.mxu0 %v3576
        %3578 = vmatprep.subr.mxu0 0.0
        %v3579 = vand.u32 %v2579, 4294901760
        %v3580 = vsub.f32 %v2579, %v3579
        %v3581 = vand.u32 %v3580, 4294901760
        %3582 = vmatpush1.msra.mxu0 %v3581
        %3583 = vmatprep.subr.mxu0 0.0
        %v3584 = vand.u32 %v2580, 4294901760
        %v3585 = vsub.f32 %v2580, %v3584
        %v3586 = vand.u32 %v3585, 4294901760
        %3587 = vmatpush1.msra.mxu0 %v3586
        %3588 = vmatprep.subr.mxu0 0.0
        %v3589 = vand.u32 %v2581, 4294901760
        %v3590 = vsub.f32 %v2581, %v3589
        %v3591 = vand.u32 %v3590, 4294901760
        %3592 = vmatpush1.msra.mxu0 %v3591
        %3593 = vmatprep.subr.mxu0 0.0
        %v3594 = vand.u32 %v2582, 4294901760
        %v3595 = vsub.f32 %v2582, %v3594
        %v3596 = vand.u32 %v3595, 4294901760
        %3597 = vmatpush1.msra.mxu0 %v3596
        %3598 = vmatprep.subr.mxu0 0.0
        %v3599 = vand.u32 %v2583, 4294901760
        %v3600 = vsub.f32 %v2583, %v3599
        %v3601 = vand.u32 %v3600, 4294901760
        %3602 = vmatpush1.msra.mxu0 %v3601
        %3603 = vmatprep.subr.mxu0 0.0
        %v3604 = vand.u32 %v2584, 4294901760
        %v3605 = vsub.f32 %v2584, %v3604
        %v3606 = vand.u32 %v3605, 4294901760
        %3607 = vmatpush1.msra.mxu0 %v3606
        %3608 = vmatprep.subr.mxu0 0.0
        %v3609 = vand.u32 %v2585, 4294901760
        %v3610 = vsub.f32 %v2585, %v3609
        %v3611 = vand.u32 %v3610, 4294901760
        %3612 = vmatpush1.msra.mxu0 %v3611
        %3613 = vmatprep.subr.mxu0 0.0
        %v3614 = vand.u32 %v2586, 4294901760
        %v3615 = vsub.f32 %v2586, %v3614
        %v3616 = vand.u32 %v3615, 4294901760
        %3617 = vmatpush1.msra.mxu0 %v3616
        %3618 = vmatprep.subr.mxu0 0.0
        %v3619 = vand.u32 %v2587, 4294901760
        %v3620 = vsub.f32 %v2587, %v3619
        %v3621 = vand.u32 %v3620, 4294901760
        %3622 = vmatpush1.msra.mxu0 %v3621
        %3623 = vmatprep.subr.mxu0 0.0
        %v3624 = vand.u32 %v2588, 4294901760
        %v3625 = vsub.f32 %v2588, %v3624
        %v3626 = vand.u32 %v3625, 4294901760
        %3627 = vmatpush1.msra.mxu0 %v3626
        %3628 = vmatprep.subr.mxu0 0.0
        %v3629 = vand.u32 %v2589, 4294901760
        %v3630 = vsub.f32 %v2589, %v3629
        %v3631 = vand.u32 %v3630, 4294901760
        %3632 = vmatpush1.msra.mxu0 %v3631
        %3633 = vmatprep.subr.mxu0 0.0
        %v3634 = vand.u32 %v2590, 4294901760
        %v3635 = vsub.f32 %v2590, %v3634
        %v3636 = vand.u32 %v3635, 4294901760
        %3637 = vmatpush1.msra.mxu0 %v3636
        %3638 = vmatprep.subr.mxu0 0.0
        %v3639 = vand.u32 %v2591, 4294901760
        %v3640 = vsub.f32 %v2591, %v3639
        %v3641 = vand.u32 %v3640, 4294901760
        %3642 = vmatpush1.msra.mxu0 %v3641
        %v3643 = vand.u32 %v2545, 4294901760
        %3644 = vmatprep.mubr.f32.mxu0 %v3643
        %v3645 = vand.u32 %v2544, 4294901760
        %3646 = vmatmul.mubr.f32.gmra.mrb[0].mxu0 %v3645
        %v3647 = vpop.f32.mrb[0].mxu0
        %v3648 = vadd.f32 %v3403, %v3647
        %v3649 = vpop.f32.mrb[0].mxu0
        %v3650 = vand.u32 %v2547, 4294901760
        %3651 = vmatprep.mubr.f32.mxu0 %v3650
        %v3652 = vand.u32 %v2546, 4294901760
        %3653 = vmatmul.mubr.f32.gmra.mrb[0].mxu0 %v3652
        %v3654 = vpop.f32.mrb[0].mxu0
        %v3655 = vadd.f32 %v3414, %v3654
        %v3656 = vpop.f32.mrb[0].mxu0
        %v3657 = vand.u32 %v2549, 4294901760
        %3658 = vmatprep.mubr.f32.mxu0 %v3657
        %v3659 = vand.u32 %v2548, 4294901760
        %3660 = vmatmul.mubr.f32.gmra.mrb[0].mxu0 %v3659
        %v3661 = vpop.f32.mrb[0].mxu0
        %v3662 = vadd.f32 %v3425, %v3661
        %v3663 = vpop.f32.mrb[0].mxu0
        %v3664 = vand.u32 %v2551, 4294901760
        %3665 = vmatprep.mubr.f32.mxu0 %v3664
        %v3666 = vand.u32 %v2550, 4294901760
        %3667 = vmatmul.mubr.f32.gmra.mrb[0].mxu0 %v3666
        %v3668 = vpop.f32.mrb[0].mxu0
        %v3669 = vadd.f32 %v3436, %v3668
        %v3670 = vpop.f32.mrb[0].mxu0
        %v3671 = vand.u32 %v2553, 4294901760
        %3672 = vmatprep.mubr.f32.mxu0 %v3671
        %v3673 = vand.u32 %v2552, 4294901760
        %3674 = vmatmul.mubr.f32.gmra.mrb[0].mxu0 %v3673
        %v3675 = vpop.f32.mrb[0].mxu0
        %v3676 = vadd.f32 %v3447, %v3675
        %v3677 = vpop.f32.mrb[0].mxu0
        %v3678 = vand.u32 %v2555, 4294901760
        %3679 = vmatprep.mubr.f32.mxu0 %v3678
        %v3680 = vand.u32 %v2554, 4294901760
        %3681 = vmatmul.mubr.f32.gmra.mrb[0].mxu0 %v3680
        %v3682 = vpop.f32.mrb[0].mxu0
        %v3683 = vadd.f32 %v3458, %v3682
        %v3684 = vpop.f32.mrb[0].mxu0
        %v3685 = vand.u32 %v2557, 4294901760
        %3686 = vmatprep.mubr.f32.mxu0 %v3685
        %v3687 = vand.u32 %v2556, 4294901760
        %3688 = vmatmul.mubr.f32.gmra.mrb[0].mxu0 %v3687
        %v3689 = vpop.f32.mrb[0].mxu0
        %v3690 = vadd.f32 %v3469, %v3689
        %v3691 = vpop.f32.mrb[0].mxu0
        %v3692 = vand.u32 %v2559, 4294901760
        %3693 = vmatprep.mubr.f32.mxu0 %v3692
        %v3694 = vand.u32 %v2558, 4294901760
        %3695 = vmatmul.mubr.f32.gmra.mrb[0].mxu0 %v3694
        %v3696 = vpop.f32.mrb[0].mxu0
        %v3697 = vadd.f32 %v3480, %v3696
        %v3698 = vpop.f32.mrb[0].mxu0
        %3699 = vdwg.mxu0
        %3700 = vmatprep.subr.mxu0 0.0
        %v3701 = vand.u32 %v2560, 4294901760
        %3702 = vmatpush1.msra.mxu0 %v3701
        %3703 = vmatprep.subr.mxu0 0.0
        %v3704 = vand.u32 %v2561, 4294901760
        %3705 = vmatpush1.msra.mxu0 %v3704
        %3706 = vmatprep.subr.mxu0 0.0
        %v3707 = vand.u32 %v2562, 4294901760
        %3708 = vmatpush1.msra.mxu0 %v3707
        %3709 = vmatprep.subr.mxu0 0.0
        %v3710 = vand.u32 %v2563, 4294901760
        %3711 = vmatpush1.msra.mxu0 %v3710
        %3712 = vmatprep.subr.mxu0 0.0
        %v3713 = vand.u32 %v2564, 4294901760
        %3714 = vmatpush1.msra.mxu0 %v3713
        %3715 = vmatprep.subr.mxu0 0.0
        %v3716 = vand.u32 %v2565, 4294901760
        %3717 = vmatpush1.msra.mxu0 %v3716
        %3718 = vmatprep.subr.mxu0 0.0
        %v3719 = vand.u32 %v2566, 4294901760
        %3720 = vmatpush1.msra.mxu0 %v3719
        %3721 = vmatprep.subr.mxu0 0.0
        %v3722 = vand.u32 %v2567, 4294901760
        %3723 = vmatpush1.msra.mxu0 %v3722
        %3724 = vmatprep.subr.mxu0 0.0
        %v3725 = vand.u32 %v2568, 4294901760
        %3726 = vmatpush1.msra.mxu0 %v3725
        %3727 = vmatprep.subr.mxu0 0.0
        %v3728 = vand.u32 %v2569, 4294901760
        %3729 = vmatpush1.msra.mxu0 %v3728
        %3730 = vmatprep.subr.mxu0 0.0
        %v3731 = vand.u32 %v2570, 4294901760
        %3732 = vmatpush1.msra.mxu0 %v3731
        %3733 = vmatprep.subr.mxu0 0.0
        %v3734 = vand.u32 %v2571, 4294901760
        %3735 = vmatpush1.msra.mxu0 %v3734
        %3736 = vmatprep.subr.mxu0 0.0
        %v3737 = vand.u32 %v2572, 4294901760
        %3738 = vmatpush1.msra.mxu0 %v3737
        %3739 = vmatprep.subr.mxu0 0.0
        %v3740 = vand.u32 %v2573, 4294901760
        %3741 = vmatpush1.msra.mxu0 %v3740
        %3742 = vmatprep.subr.mxu0 0.0
        %v3743 = vand.u32 %v2574, 4294901760
        %3744 = vmatpush1.msra.mxu0 %v3743
        %3745 = vmatprep.subr.mxu0 0.0
        %v3746 = vand.u32 %v2575, 4294901760
        %3747 = vmatpush1.msra.mxu0 %v3746
        %3748 = vmatprep.subr.mxu0 0.0
        %v3749 = vand.u32 %v2576, 4294901760
        %3750 = vmatpush1.msra.mxu0 %v3749
        %3751 = vmatprep.subr.mxu0 0.0
        %v3752 = vand.u32 %v2577, 4294901760
        %3753 = vmatpush1.msra.mxu0 %v3752
        %3754 = vmatprep.subr.mxu0 0.0
        %v3755 = vand.u32 %v2578, 4294901760
        %3756 = vmatpush1.msra.mxu0 %v3755
        %3757 = vmatprep.subr.mxu0 0.0
        %v3758 = vand.u32 %v2579, 4294901760
        %3759 = vmatpush1.msra.mxu0 %v3758
        %3760 = vmatprep.subr.mxu0 0.0
        %v3761 = vand.u32 %v2580, 4294901760
        %3762 = vmatpush1.msra.mxu0 %v3761
        %3763 = vmatprep.subr.mxu0 0.0
        %v3764 = vand.u32 %v2581, 4294901760
        %3765 = vmatpush1.msra.mxu0 %v3764
        %3766 = vmatprep.subr.mxu0 0.0
        %v3767 = vand.u32 %v2582, 4294901760
        %3768 = vmatpush1.msra.mxu0 %v3767
        %3769 = vmatprep.subr.mxu0 0.0
        %v3770 = vand.u32 %v2583, 4294901760
        %3771 = vmatpush1.msra.mxu0 %v3770
        %3772 = vmatprep.subr.mxu0 0.0
        %v3773 = vand.u32 %v2584, 4294901760
        %3774 = vmatpush1.msra.mxu0 %v3773
        %3775 = vmatprep.subr.mxu0 0.0
        %v3776 = vand.u32 %v2585, 4294901760
        %3777 = vmatpush1.msra.mxu0 %v3776
        %3778 = vmatprep.subr.mxu0 0.0
        %v3779 = vand.u32 %v2586, 4294901760
        %3780 = vmatpush1.msra.mxu0 %v3779
        %3781 = vmatprep.subr.mxu0 0.0
        %v3782 = vand.u32 %v2587, 4294901760
        %3783 = vmatpush1.msra.mxu0 %v3782
        %3784 = vmatprep.subr.mxu0 0.0
        %v3785 = vand.u32 %v2588, 4294901760
        %3786 = vmatpush1.msra.mxu0 %v3785
        %3787 = vmatprep.subr.mxu0 0.0
        %v3788 = vand.u32 %v2589, 4294901760
        %3789 = vmatpush1.msra.mxu0 %v3788
        %3790 = vmatprep.subr.mxu0 0.0
        %v3791 = vand.u32 %v2590, 4294901760
        %3792 = vmatpush1.msra.mxu0 %v3791
        %3793 = vmatprep.subr.mxu0 0.0
        %v3794 = vand.u32 %v2591, 4294901760
        %3795 = vmatpush1.msra.mxu0 %v3794
        %v3796 = vand.u32 %v2545, 4294901760
        %3797 = vmatprep.mubr.f32.mxu0 %v3796
        %v3798 = vand.u32 %v2544, 4294901760
        %3799 = vmatmul.mubr.f32.gmra.mrb[0].mxu0 %v3798
        %v3800 = vpop.f32.mrb[0].mxu0
        %v3801 = vadd.f32 %v3648, %v3800
        %v3802 = vpop.f32.mrb[0].mxu0
        %v3803 = vand.u32 %v2547, 4294901760
        %3804 = vmatprep.mubr.f32.mxu0 %v3803
        %v3805 = vand.u32 %v2546, 4294901760
        %3806 = vmatmul.mubr.f32.gmra.mrb[0].mxu0 %v3805
        %v3807 = vpop.f32.mrb[0].mxu0
        %v3808 = vadd.f32 %v3655, %v3807
        %v3809 = vpop.f32.mrb[0].mxu0
        %v3810 = vand.u32 %v2549, 4294901760
        %3811 = vmatprep.mubr.f32.mxu0 %v3810
        %v3812 = vand.u32 %v2548, 4294901760
        %3813 = vmatmul.mubr.f32.gmra.mrb[0].mxu0 %v3812
        %v3814 = vpop.f32.mrb[0].mxu0
        %v3815 = vadd.f32 %v3662, %v3814
        %v3816 = vpop.f32.mrb[0].mxu0
        %v3817 = vand.u32 %v2551, 4294901760
        %3818 = vmatprep.mubr.f32.mxu0 %v3817
        %v3819 = vand.u32 %v2550, 4294901760
        %3820 = vmatmul.mubr.f32.gmra.mrb[0].mxu0 %v3819
        %v3821 = vpop.f32.mrb[0].mxu0
        %v3822 = vadd.f32 %v3669, %v3821
        %v3823 = vpop.f32.mrb[0].mxu0
        %v3824 = vand.u32 %v2553, 4294901760
        %3825 = vmatprep.mubr.f32.mxu0 %v3824
        %v3826 = vand.u32 %v2552, 4294901760
        %3827 = vmatmul.mubr.f32.gmra.mrb[0].mxu0 %v3826
        %v3828 = vpop.f32.mrb[0].mxu0
        %v3829 = vadd.f32 %v3676, %v3828
        %v3830 = vpop.f32.mrb[0].mxu0
        %v3831 = vand.u32 %v2555, 4294901760
        %3832 = vmatprep.mubr.f32.mxu0 %v3831
        %v3833 = vand.u32 %v2554, 4294901760
        %3834 = vmatmul.mubr.f32.gmra.mrb[0].mxu0 %v3833
        %v3835 = vpop.f32.mrb[0].mxu0
        %v3836 = vadd.f32 %v3683, %v3835
        %v3837 = vpop.f32.mrb[0].mxu0
        %v3838 = vand.u32 %v2557, 4294901760
        %3839 = vmatprep.mubr.f32.mxu0 %v3838
        %v3840 = vand.u32 %v2556, 4294901760
        %3841 = vmatmul.mubr.f32.gmra.mrb[0].mxu0 %v3840
        %v3842 = vpop.f32.mrb[0].mxu0
        %v3843 = vadd.f32 %v3690, %v3842
        %v3844 = vpop.f32.mrb[0].mxu0
        %v3845 = vand.u32 %v2559, 4294901760
        %3846 = vmatprep.mubr.f32.mxu0 %v3845
        %v3847 = vand.u32 %v2558, 4294901760
        %3848 = vmatmul.mubr.f32.gmra.mrb[0].mxu0 %v3847
        %v3849 = vpop.f32.mrb[0].mxu0
        %v3850 = vadd.f32 %v3697, %v3849
        %v3851 = vpop.f32.mrb[0].mxu0
        %3852 = vdwg.mxu0
        %v3853 = vld [vmem:[#allocation8] sm:$0xff]
        %v3854 = vld [vmem:[#allocation8 + $0x8] sm:$0xff]
        %v3855 = vld [vmem:[#allocation8 + $0x10] sm:$0xff]
        %v3856 = vld [vmem:[#allocation8 + $0x18] sm:$0xff]
        %v3857 = vld [vmem:[#allocation8 + $0x20] sm:$0xff]
        %v3858 = vld [vmem:[#allocation8 + $0x28] sm:$0xff]
        %v3859 = vld [vmem:[#allocation8 + $0x30] sm:$0xff]
        %v3860 = vld [vmem:[#allocation8 + $0x38] sm:$0xff]
        %v3861 = vld [vmem:[#allocation8 + $0x40] sm:$0xff]
        %v3862 = vld [vmem:[#allocation8 + $0x48] sm:$0xff]
        %v3863 = vld [vmem:[#allocation8 + $0x50] sm:$0xff]
        %v3864 = vld [vmem:[#allocation8 + $0x58] sm:$0xff]
        %v3865 = vld [vmem:[#allocation8 + $0x60] sm:$0xff]
        %v3866 = vld [vmem:[#allocation8 + $0x68] sm:$0xff]
        %v3867 = vld [vmem:[#allocation8 + $0x70] sm:$0xff]
        %v3868 = vld [vmem:[#allocation8 + $0x78] sm:$0xff]
        %v3869 = vld [vmem:[#allocation8 + $0x80] sm:$0xff]
        %v3870 = vld [vmem:[#allocation8 + $0x88] sm:$0xff]
        %v3871 = vld [vmem:[#allocation8 + $0x90] sm:$0xff]
        %v3872 = vld [vmem:[#allocation8 + $0x98] sm:$0xff]
        %v3873 = vld [vmem:[#allocation8 + $0xa0] sm:$0xff]
        %v3874 = vld [vmem:[#allocation8 + $0xa8] sm:$0xff]
        %v3875 = vld [vmem:[#allocation8 + $0xb0] sm:$0xff]
        %v3876 = vld [vmem:[#allocation8 + $0xb8] sm:$0xff]
        %v3877 = vld [vmem:[#allocation8 + $0xc0] sm:$0xff]
        %v3878 = vld [vmem:[#allocation8 + $0xc8] sm:$0xff]
        %v3879 = vld [vmem:[#allocation8 + $0xd0] sm:$0xff]
        %v3880 = vld [vmem:[#allocation8 + $0xd8] sm:$0xff]
        %v3881 = vld [vmem:[#allocation8 + $0xe0] sm:$0xff]
        %v3882 = vld [vmem:[#allocation8 + $0xe8] sm:$0xff]
        %v3883 = vld [vmem:[#allocation8 + $0xf0] sm:$0xff]
        %v3884 = vld [vmem:[#allocation8 + $0xf8] sm:$0xff]
        %v3885 = vld [vmem:[%s7] sm:$0x1]
        %v3887 = vlaneseq
        %v3888 = vshrl.u32 %v3887, 7
        %v3889 = vsub.s32 0, %v3888
        %v3890 = vrot.slane %v3885, %v3889
        %3892 = vmatprep.subr.mxu0 0.0
        %v3893 = vand.u32 %v3853, 4294901760
        %3894 = vmatpush1.msra.mxu0 %v3893
        %3895 = vmatprep.subr.mxu0 0.0
        %v3896 = vand.u32 %v3854, 4294901760
        %3897 = vmatpush1.msra.mxu0 %v3896
        %3898 = vmatprep.subr.mxu0 0.0
        %v3899 = vand.u32 %v3855, 4294901760
        %3900 = vmatpush1.msra.mxu0 %v3899
        %3901 = vmatprep.subr.mxu0 0.0
        %v3902 = vand.u32 %v3856, 4294901760
        %3903 = vmatpush1.msra.mxu0 %v3902
        %3904 = vmatprep.subr.mxu0 0.0
        %v3905 = vand.u32 %v3857, 4294901760
        %3906 = vmatpush1.msra.mxu0 %v3905
        %3907 = vmatprep.subr.mxu0 0.0
        %v3908 = vand.u32 %v3858, 4294901760
        %3909 = vmatpush1.msra.mxu0 %v3908
        %3910 = vmatprep.subr.mxu0 0.0
        %v3911 = vand.u32 %v3859, 4294901760
        %3912 = vmatpush1.msra.mxu0 %v3911
        %3913 = vmatprep.subr.mxu0 0.0
        %v3914 = vand.u32 %v3860, 4294901760
        %3915 = vmatpush1.msra.mxu0 %v3914
        %3916 = vmatprep.subr.mxu0 0.0
        %v3917 = vand.u32 %v3861, 4294901760
        %3918 = vmatpush1.msra.mxu0 %v3917
        %3919 = vmatprep.subr.mxu0 0.0
        %v3920 = vand.u32 %v3862, 4294901760
        %3921 = vmatpush1.msra.mxu0 %v3920
        %3922 = vmatprep.subr.mxu0 0.0
        %v3923 = vand.u32 %v3863, 4294901760
        %3924 = vmatpush1.msra.mxu0 %v3923
        %3925 = vmatprep.subr.mxu0 0.0
        %v3926 = vand.u32 %v3864, 4294901760
        %3927 = vmatpush1.msra.mxu0 %v3926
        %3928 = vmatprep.subr.mxu0 0.0
        %v3929 = vand.u32 %v3865, 4294901760
        %3930 = vmatpush1.msra.mxu0 %v3929
        %3931 = vmatprep.subr.mxu0 0.0
        %v3932 = vand.u32 %v3866, 4294901760
        %3933 = vmatpush1.msra.mxu0 %v3932
        %3934 = vmatprep.subr.mxu0 0.0
        %v3935 = vand.u32 %v3867, 4294901760
        %3936 = vmatpush1.msra.mxu0 %v3935
        %3937 = vmatprep.subr.mxu0 0.0
        %v3938 = vand.u32 %v3868, 4294901760
        %3939 = vmatpush1.msra.mxu0 %v3938
        %3940 = vmatprep.subr.mxu0 0.0
        %v3941 = vand.u32 %v3869, 4294901760
        %3942 = vmatpush1.msra.mxu0 %v3941
        %3943 = vmatprep.subr.mxu0 0.0
        %v3944 = vand.u32 %v3870, 4294901760
        %3945 = vmatpush1.msra.mxu0 %v3944
        %3946 = vmatprep.subr.mxu0 0.0
        %v3947 = vand.u32 %v3871, 4294901760
        %3948 = vmatpush1.msra.mxu0 %v3947
        %3949 = vmatprep.subr.mxu0 0.0
        %v3950 = vand.u32 %v3872, 4294901760
        %3951 = vmatpush1.msra.mxu0 %v3950
        %3952 = vmatprep.subr.mxu0 0.0
        %v3953 = vand.u32 %v3873, 4294901760
        %3954 = vmatpush1.msra.mxu0 %v3953
        %3955 = vmatprep.subr.mxu0 0.0
        %v3956 = vand.u32 %v3874, 4294901760
        %3957 = vmatpush1.msra.mxu0 %v3956
        %3958 = vmatprep.subr.mxu0 0.0
        %v3959 = vand.u32 %v3875, 4294901760
        %3960 = vmatpush1.msra.mxu0 %v3959
        %3961 = vmatprep.subr.mxu0 0.0
        %v3962 = vand.u32 %v3876, 4294901760
        %3963 = vmatpush1.msra.mxu0 %v3962
        %3964 = vmatprep.subr.mxu0 0.0
        %v3965 = vand.u32 %v3877, 4294901760
        %3966 = vmatpush1.msra.mxu0 %v3965
        %3967 = vmatprep.subr.mxu0 0.0
        %v3968 = vand.u32 %v3878, 4294901760
        %3969 = vmatpush1.msra.mxu0 %v3968
        %3970 = vmatprep.subr.mxu0 0.0
        %v3971 = vand.u32 %v3879, 4294901760
        %3972 = vmatpush1.msra.mxu0 %v3971
        %3973 = vmatprep.subr.mxu0 0.0
        %v3974 = vand.u32 %v3880, 4294901760
        %3975 = vmatpush1.msra.mxu0 %v3974
        %3976 = vmatprep.subr.mxu0 0.0
        %v3977 = vand.u32 %v3881, 4294901760
        %3978 = vmatpush1.msra.mxu0 %v3977
        %3979 = vmatprep.subr.mxu0 0.0
        %v3980 = vand.u32 %v3882, 4294901760
        %3981 = vmatpush1.msra.mxu0 %v3980
        %3982 = vmatprep.subr.mxu0 0.0
        %v3983 = vand.u32 %v3883, 4294901760
        %3984 = vmatpush1.msra.mxu0 %v3983
        %3985 = vmatprep.subr.mxu0 0.0
        %v3986 = vand.u32 %v3884, 4294901760
        %3987 = vmatpush1.msra.mxu0 %v3986
        %v3988 = vand.u32 %v2545, 4294901760
        %v3989 = vsub.f32 %v2545, %v3988
        %v3990 = vand.u32 %v3989, 4294901760
        %v3991 = vsub.f32 %v3989, %v3990
        %v3992 = vand.u32 %v3991, 4294901760
        %3993 = vmatprep.mubr.f32.mxu0 %v3992
        %v3994 = vand.u32 %v2544, 4294901760
        %v3995 = vsub.f32 %v2544, %v3994
        %v3996 = vand.u32 %v3995, 4294901760
        %v3997 = vsub.f32 %v3995, %v3996
        %v3998 = vand.u32 %v3997, 4294901760
        %3999 = vmatmul.mubr.f32.gmra.mrb[0].mxu0 %v3998
        %v4000 = vpop.f32.mrb[0].mxu0
        %v4001 = vadd.f32 %v3890, %v4000
        %v4002 = vpop.f32.mrb[0].mxu0
        %v4003 = vand.u32 %v2547, 4294901760
        %v4004 = vsub.f32 %v2547, %v4003
        %v4005 = vand.u32 %v4004, 4294901760
        %v4006 = vsub.f32 %v4004, %v4005
        %v4007 = vand.u32 %v4006, 4294901760
        %4008 = vmatprep.mubr.f32.mxu0 %v4007
        %v4009 = vand.u32 %v2546, 4294901760
        %v4010 = vsub.f32 %v2546, %v4009
        %v4011 = vand.u32 %v4010, 4294901760
        %v4012 = vsub.f32 %v4010, %v4011
        %v4013 = vand.u32 %v4012, 4294901760
        %4014 = vmatmul.mubr.f32.gmra.mrb[0].mxu0 %v4013
        %v4015 = vpop.f32.mrb[0].mxu0
        %v4016 = vadd.f32 %v3890, %v4015
        %v4017 = vpop.f32.mrb[0].mxu0
        %v4018 = vand.u32 %v2549, 4294901760
        %v4019 = vsub.f32 %v2549, %v4018
        %v4020 = vand.u32 %v4019, 4294901760
        %v4021 = vsub.f32 %v4019, %v4020
        %v4022 = vand.u32 %v4021, 4294901760
        %4023 = vmatprep.mubr.f32.mxu0 %v4022
        %v4024 = vand.u32 %v2548, 4294901760
        %v4025 = vsub.f32 %v2548, %v4024
        %v4026 = vand.u32 %v4025, 4294901760
        %v4027 = vsub.f32 %v4025, %v4026
        %v4028 = vand.u32 %v4027, 4294901760
        %4029 = vmatmul.mubr.f32.gmra.mrb[0].mxu0 %v4028
        %v4030 = vpop.f32.mrb[0].mxu0
        %v4031 = vadd.f32 %v3890, %v4030
        %v4032 = vpop.f32.mrb[0].mxu0
        %v4033 = vand.u32 %v2551, 4294901760
        %v4034 = vsub.f32 %v2551, %v4033
        %v4035 = vand.u32 %v4034, 4294901760
        %v4036 = vsub.f32 %v4034, %v4035
        %v4037 = vand.u32 %v4036, 4294901760
        %4038 = vmatprep.mubr.f32.mxu0 %v4037
        %v4039 = vand.u32 %v2550, 4294901760
        %v4040 = vsub.f32 %v2550, %v4039
        %v4041 = vand.u32 %v4040, 4294901760
        %v4042 = vsub.f32 %v4040, %v4041
        %v4043 = vand.u32 %v4042, 4294901760
        %4044 = vmatmul.mubr.f32.gmra.mrb[0].mxu0 %v4043
        %v4045 = vpop.f32.mrb[0].mxu0
        %v4046 = vadd.f32 %v3890, %v4045
        %v4047 = vpop.f32.mrb[0].mxu0
        %v4048 = vand.u32 %v2553, 4294901760
        %v4049 = vsub.f32 %v2553, %v4048
        %v4050 = vand.u32 %v4049, 4294901760
        %v4051 = vsub.f32 %v4049, %v4050
        %v4052 = vand.u32 %v4051, 4294901760
        %4053 = vmatprep.mubr.f32.mxu0 %v4052
        %v4054 = vand.u32 %v2552, 4294901760
        %v4055 = vsub.f32 %v2552, %v4054
        %v4056 = vand.u32 %v4055, 4294901760
        %v4057 = vsub.f32 %v4055, %v4056
        %v4058 = vand.u32 %v4057, 4294901760
        %4059 = vmatmul.mubr.f32.gmra.mrb[0].mxu0 %v4058
        %v4060 = vpop.f32.mrb[0].mxu0
        %v4061 = vadd.f32 %v3890, %v4060
        %v4062 = vpop.f32.mrb[0].mxu0
        %v4063 = vand.u32 %v2555, 4294901760
        %v4064 = vsub.f32 %v2555, %v4063
        %v4065 = vand.u32 %v4064, 4294901760
        %v4066 = vsub.f32 %v4064, %v4065
        %v4067 = vand.u32 %v4066, 4294901760
        %4068 = vmatprep.mubr.f32.mxu0 %v4067
        %v4069 = vand.u32 %v2554, 4294901760
        %v4070 = vsub.f32 %v2554, %v4069
        %v4071 = vand.u32 %v4070, 4294901760
        %v4072 = vsub.f32 %v4070, %v4071
        %v4073 = vand.u32 %v4072, 4294901760
        %4074 = vmatmul.mubr.f32.gmra.mrb[0].mxu0 %v4073
        %v4075 = vpop.f32.mrb[0].mxu0
        %v4076 = vadd.f32 %v3890, %v4075
        %v4077 = vpop.f32.mrb[0].mxu0
        %v4078 = vand.u32 %v2557, 4294901760
        %v4079 = vsub.f32 %v2557, %v4078
        %v4080 = vand.u32 %v4079, 4294901760
        %v4081 = vsub.f32 %v4079, %v4080
        %v4082 = vand.u32 %v4081, 4294901760
        %4083 = vmatprep.mubr.f32.mxu0 %v4082
        %v4084 = vand.u32 %v2556, 4294901760
        %v4085 = vsub.f32 %v2556, %v4084
        %v4086 = vand.u32 %v4085, 4294901760
        %v4087 = vsub.f32 %v4085, %v4086
        %v4088 = vand.u32 %v4087, 4294901760
        %4089 = vmatmul.mubr.f32.gmra.mrb[0].mxu0 %v4088
        %v4090 = vpop.f32.mrb[0].mxu0
        %v4091 = vadd.f32 %v3890, %v4090
        %v4092 = vpop.f32.mrb[0].mxu0
        %v4093 = vand.u32 %v2559, 4294901760
        %v4094 = vsub.f32 %v2559, %v4093
        %v4095 = vand.u32 %v4094, 4294901760
        %v4096 = vsub.f32 %v4094, %v4095
        %v4097 = vand.u32 %v4096, 4294901760
        %4098 = vmatprep.mubr.f32.mxu0 %v4097
        %v4099 = vand.u32 %v2558, 4294901760
        %v4100 = vsub.f32 %v2558, %v4099
        %v4101 = vand.u32 %v4100, 4294901760
        %v4102 = vsub.f32 %v4100, %v4101
        %v4103 = vand.u32 %v4102, 4294901760
        %4104 = vmatmul.mubr.f32.gmra.mrb[0].mxu0 %v4103
        %v4105 = vpop.f32.mrb[0].mxu0
        %v4106 = vadd.f32 %v3890, %v4105
        %v4107 = vpop.f32.mrb[0].mxu0
        %4108 = vdwg.mxu0
        %4109 = vmatprep.subr.mxu0 0.0
        %v4110 = vand.u32 %v3853, 4294901760
        %v4111 = vsub.f32 %v3853, %v4110
        %v4112 = vand.u32 %v4111, 4294901760
        %v4113 = vsub.f32 %v4111, %v4112
        %v4114 = vand.u32 %v4113, 4294901760
        %4115 = vmatpush1.msra.mxu0 %v4114
        %4116 = vmatprep.subr.mxu0 0.0
        %v4117 = vand.u32 %v3854, 4294901760
        %v4118 = vsub.f32 %v3854, %v4117
        %v4119 = vand.u32 %v4118, 4294901760
        %v4120 = vsub.f32 %v4118, %v4119
        %v4121 = vand.u32 %v4120, 4294901760
        %4122 = vmatpush1.msra.mxu0 %v4121
        %4123 = vmatprep.subr.mxu0 0.0
        %v4124 = vand.u32 %v3855, 4294901760
        %v4125 = vsub.f32 %v3855, %v4124
        %v4126 = vand.u32 %v4125, 4294901760
        %v4127 = vsub.f32 %v4125, %v4126
        %v4128 = vand.u32 %v4127, 4294901760
        %4129 = vmatpush1.msra.mxu0 %v4128
        %4130 = vmatprep.subr.mxu0 0.0
        %v4131 = vand.u32 %v3856, 4294901760
        %v4132 = vsub.f32 %v3856, %v4131
        %v4133 = vand.u32 %v4132, 4294901760
        %v4134 = vsub.f32 %v4132, %v4133
        %v4135 = vand.u32 %v4134, 4294901760
        %4136 = vmatpush1.msra.mxu0 %v4135
        %4137 = vmatprep.subr.mxu0 0.0
        %v4138 = vand.u32 %v3857, 4294901760
        %v4139 = vsub.f32 %v3857, %v4138
        %v4140 = vand.u32 %v4139, 4294901760
        %v4141 = vsub.f32 %v4139, %v4140
        %v4142 = vand.u32 %v4141, 4294901760
        %4143 = vmatpush1.msra.mxu0 %v4142
        %4144 = vmatprep.subr.mxu0 0.0
        %v4145 = vand.u32 %v3858, 4294901760
        %v4146 = vsub.f32 %v3858, %v4145
        %v4147 = vand.u32 %v4146, 4294901760
        %v4148 = vsub.f32 %v4146, %v4147
        %v4149 = vand.u32 %v4148, 4294901760
        %4150 = vmatpush1.msra.mxu0 %v4149
        %4151 = vmatprep.subr.mxu0 0.0
        %v4152 = vand.u32 %v3859, 4294901760
        %v4153 = vsub.f32 %v3859, %v4152
        %v4154 = vand.u32 %v4153, 4294901760
        %v4155 = vsub.f32 %v4153, %v4154
        %v4156 = vand.u32 %v4155, 4294901760
        %4157 = vmatpush1.msra.mxu0 %v4156
        %4158 = vmatprep.subr.mxu0 0.0
        %v4159 = vand.u32 %v3860, 4294901760
        %v4160 = vsub.f32 %v3860, %v4159
        %v4161 = vand.u32 %v4160, 4294901760
        %v4162 = vsub.f32 %v4160, %v4161
        %v4163 = vand.u32 %v4162, 4294901760
        %4164 = vmatpush1.msra.mxu0 %v4163
        %4165 = vmatprep.subr.mxu0 0.0
        %v4166 = vand.u32 %v3861, 4294901760
        %v4167 = vsub.f32 %v3861, %v4166
        %v4168 = vand.u32 %v4167, 4294901760
        %v4169 = vsub.f32 %v4167, %v4168
        %v4170 = vand.u32 %v4169, 4294901760
        %4171 = vmatpush1.msra.mxu0 %v4170
        %4172 = vmatprep.subr.mxu0 0.0
        %v4173 = vand.u32 %v3862, 4294901760
        %v4174 = vsub.f32 %v3862, %v4173
        %v4175 = vand.u32 %v4174, 4294901760
        %v4176 = vsub.f32 %v4174, %v4175
        %v4177 = vand.u32 %v4176, 4294901760
        %4178 = vmatpush1.msra.mxu0 %v4177
        %4179 = vmatprep.subr.mxu0 0.0
        %v4180 = vand.u32 %v3863, 4294901760
        %v4181 = vsub.f32 %v3863, %v4180
        %v4182 = vand.u32 %v4181, 4294901760
        %v4183 = vsub.f32 %v4181, %v4182
        %v4184 = vand.u32 %v4183, 4294901760
        %4185 = vmatpush1.msra.mxu0 %v4184
        %4186 = vmatprep.subr.mxu0 0.0
        %v4187 = vand.u32 %v3864, 4294901760
        %v4188 = vsub.f32 %v3864, %v4187
        %v4189 = vand.u32 %v4188, 4294901760
        %v4190 = vsub.f32 %v4188, %v4189
        %v4191 = vand.u32 %v4190, 4294901760
        %4192 = vmatpush1.msra.mxu0 %v4191
        %4193 = vmatprep.subr.mxu0 0.0
        %v4194 = vand.u32 %v3865, 4294901760
        %v4195 = vsub.f32 %v3865, %v4194
        %v4196 = vand.u32 %v4195, 4294901760
        %v4197 = vsub.f32 %v4195, %v4196
        %v4198 = vand.u32 %v4197, 4294901760
        %4199 = vmatpush1.msra.mxu0 %v4198
        %4200 = vmatprep.subr.mxu0 0.0
        %v4201 = vand.u32 %v3866, 4294901760
        %v4202 = vsub.f32 %v3866, %v4201
        %v4203 = vand.u32 %v4202, 4294901760
        %v4204 = vsub.f32 %v4202, %v4203
        %v4205 = vand.u32 %v4204, 4294901760
        %4206 = vmatpush1.msra.mxu0 %v4205
        %4207 = vmatprep.subr.mxu0 0.0
        %v4208 = vand.u32 %v3867, 4294901760
        %v4209 = vsub.f32 %v3867, %v4208
        %v4210 = vand.u32 %v4209, 4294901760
        %v4211 = vsub.f32 %v4209, %v4210
        %v4212 = vand.u32 %v4211, 4294901760
        %4213 = vmatpush1.msra.mxu0 %v4212
        %4214 = vmatprep.subr.mxu0 0.0
        %v4215 = vand.u32 %v3868, 4294901760
        %v4216 = vsub.f32 %v3868, %v4215
        %v4217 = vand.u32 %v4216, 4294901760
        %v4218 = vsub.f32 %v4216, %v4217
        %v4219 = vand.u32 %v4218, 4294901760
        %4220 = vmatpush1.msra.mxu0 %v4219
        %4221 = vmatprep.subr.mxu0 0.0
        %v4222 = vand.u32 %v3869, 4294901760
        %v4223 = vsub.f32 %v3869, %v4222
        %v4224 = vand.u32 %v4223, 4294901760
        %v4225 = vsub.f32 %v4223, %v4224
        %v4226 = vand.u32 %v4225, 4294901760
        %4227 = vmatpush1.msra.mxu0 %v4226
        %4228 = vmatprep.subr.mxu0 0.0
        %v4229 = vand.u32 %v3870, 4294901760
        %v4230 = vsub.f32 %v3870, %v4229
        %v4231 = vand.u32 %v4230, 4294901760
        %v4232 = vsub.f32 %v4230, %v4231
        %v4233 = vand.u32 %v4232, 4294901760
        %4234 = vmatpush1.msra.mxu0 %v4233
        %4235 = vmatprep.subr.mxu0 0.0
        %v4236 = vand.u32 %v3871, 4294901760
        %v4237 = vsub.f32 %v3871, %v4236
        %v4238 = vand.u32 %v4237, 4294901760
        %v4239 = vsub.f32 %v4237, %v4238
        %v4240 = vand.u32 %v4239, 4294901760
        %4241 = vmatpush1.msra.mxu0 %v4240
        %4242 = vmatprep.subr.mxu0 0.0
        %v4243 = vand.u32 %v3872, 4294901760
        %v4244 = vsub.f32 %v3872, %v4243
        %v4245 = vand.u32 %v4244, 4294901760
        %v4246 = vsub.f32 %v4244, %v4245
        %v4247 = vand.u32 %v4246, 4294901760
        %4248 = vmatpush1.msra.mxu0 %v4247
        %4249 = vmatprep.subr.mxu0 0.0
        %v4250 = vand.u32 %v3873, 4294901760
        %v4251 = vsub.f32 %v3873, %v4250
        %v4252 = vand.u32 %v4251, 4294901760
        %v4253 = vsub.f32 %v4251, %v4252
        %v4254 = vand.u32 %v4253, 4294901760
        %4255 = vmatpush1.msra.mxu0 %v4254
        %4256 = vmatprep.subr.mxu0 0.0
        %v4257 = vand.u32 %v3874, 4294901760
        %v4258 = vsub.f32 %v3874, %v4257
        %v4259 = vand.u32 %v4258, 4294901760
        %v4260 = vsub.f32 %v4258, %v4259
        %v4261 = vand.u32 %v4260, 4294901760
        %4262 = vmatpush1.msra.mxu0 %v4261
        %4263 = vmatprep.subr.mxu0 0.0
        %v4264 = vand.u32 %v3875, 4294901760
        %v4265 = vsub.f32 %v3875, %v4264
        %v4266 = vand.u32 %v4265, 4294901760
        %v4267 = vsub.f32 %v4265, %v4266
        %v4268 = vand.u32 %v4267, 4294901760
        %4269 = vmatpush1.msra.mxu0 %v4268
        %4270 = vmatprep.subr.mxu0 0.0
        %v4271 = vand.u32 %v3876, 4294901760
        %v4272 = vsub.f32 %v3876, %v4271
        %v4273 = vand.u32 %v4272, 4294901760
        %v4274 = vsub.f32 %v4272, %v4273
        %v4275 = vand.u32 %v4274, 4294901760
        %4276 = vmatpush1.msra.mxu0 %v4275
        %4277 = vmatprep.subr.mxu0 0.0
        %v4278 = vand.u32 %v3877, 4294901760
        %v4279 = vsub.f32 %v3877, %v4278
        %v4280 = vand.u32 %v4279, 4294901760
        %v4281 = vsub.f32 %v4279, %v4280
        %v4282 = vand.u32 %v4281, 4294901760
        %4283 = vmatpush1.msra.mxu0 %v4282
        %4284 = vmatprep.subr.mxu0 0.0
        %v4285 = vand.u32 %v3878, 4294901760
        %v4286 = vsub.f32 %v3878, %v4285
        %v4287 = vand.u32 %v4286, 4294901760
        %v4288 = vsub.f32 %v4286, %v4287
        %v4289 = vand.u32 %v4288, 4294901760
        %4290 = vmatpush1.msra.mxu0 %v4289
        %4291 = vmatprep.subr.mxu0 0.0
        %v4292 = vand.u32 %v3879, 4294901760
        %v4293 = vsub.f32 %v3879, %v4292
        %v4294 = vand.u32 %v4293, 4294901760
        %v4295 = vsub.f32 %v4293, %v4294
        %v4296 = vand.u32 %v4295, 4294901760
        %4297 = vmatpush1.msra.mxu0 %v4296
        %4298 = vmatprep.subr.mxu0 0.0
        %v4299 = vand.u32 %v3880, 4294901760
        %v4300 = vsub.f32 %v3880, %v4299
        %v4301 = vand.u32 %v4300, 4294901760
        %v4302 = vsub.f32 %v4300, %v4301
        %v4303 = vand.u32 %v4302, 4294901760
        %4304 = vmatpush1.msra.mxu0 %v4303
        %4305 = vmatprep.subr.mxu0 0.0
        %v4306 = vand.u32 %v3881, 4294901760
        %v4307 = vsub.f32 %v3881, %v4306
        %v4308 = vand.u32 %v4307, 4294901760
        %v4309 = vsub.f32 %v4307, %v4308
        %v4310 = vand.u32 %v4309, 4294901760
        %4311 = vmatpush1.msra.mxu0 %v4310
        %4312 = vmatprep.subr.mxu0 0.0
        %v4313 = vand.u32 %v3882, 4294901760
        %v4314 = vsub.f32 %v3882, %v4313
        %v4315 = vand.u32 %v4314, 4294901760
        %v4316 = vsub.f32 %v4314, %v4315
        %v4317 = vand.u32 %v4316, 4294901760
        %4318 = vmatpush1.msra.mxu0 %v4317
        %4319 = vmatprep.subr.mxu0 0.0
        %v4320 = vand.u32 %v3883, 4294901760
        %v4321 = vsub.f32 %v3883, %v4320
        %v4322 = vand.u32 %v4321, 4294901760
        %v4323 = vsub.f32 %v4321, %v4322
        %v4324 = vand.u32 %v4323, 4294901760
        %4325 = vmatpush1.msra.mxu0 %v4324
        %4326 = vmatprep.subr.mxu0 0.0
        %v4327 = vand.u32 %v3884, 4294901760
        %v4328 = vsub.f32 %v3884, %v4327
        %v4329 = vand.u32 %v4328, 4294901760
        %v4330 = vsub.f32 %v4328, %v4329
        %v4331 = vand.u32 %v4330, 4294901760
        %4332 = vmatpush1.msra.mxu0 %v4331
        %v4333 = vand.u32 %v2545, 4294901760
        %4334 = vmatprep.mubr.f32.mxu0 %v4333
        %v4335 = vand.u32 %v2544, 4294901760
        %4336 = vmatmul.mubr.f32.gmra.mrb[0].mxu0 %v4335
        %v4337 = vpop.f32.mrb[0].mxu0
        %v4338 = vadd.f32 %v4001, %v4337
        %v4339 = vpop.f32.mrb[0].mxu0
        %v4340 = vand.u32 %v2547, 4294901760
        %4341 = vmatprep.mubr.f32.mxu0 %v4340
        %v4342 = vand.u32 %v2546, 4294901760
        %4343 = vmatmul.mubr.f32.gmra.mrb[0].mxu0 %v4342
        %v4344 = vpop.f32.mrb[0].mxu0
        %v4345 = vadd.f32 %v4016, %v4344
        %v4346 = vpop.f32.mrb[0].mxu0
        %v4347 = vand.u32 %v2549, 4294901760
        %4348 = vmatprep.mubr.f32.mxu0 %v4347
        %v4349 = vand.u32 %v2548, 4294901760
        %4350 = vmatmul.mubr.f32.gmra.mrb[0].mxu0 %v4349
        %v4351 = vpop.f32.mrb[0].mxu0
        %v4352 = vadd.f32 %v4031, %v4351
        %v4353 = vpop.f32.mrb[0].mxu0
        %v4354 = vand.u32 %v2551, 4294901760
        %4355 = vmatprep.mubr.f32.mxu0 %v4354
        %v4356 = vand.u32 %v2550, 4294901760
        %4357 = vmatmul.mubr.f32.gmra.mrb[0].mxu0 %v4356
        %v4358 = vpop.f32.mrb[0].mxu0
        %v4359 = vadd.f32 %v4046, %v4358
        %v4360 = vpop.f32.mrb[0].mxu0
        %v4361 = vand.u32 %v2553, 4294901760
        %4362 = vmatprep.mubr.f32.mxu0 %v4361
        %v4363 = vand.u32 %v2552, 4294901760
        %4364 = vmatmul.mubr.f32.gmra.mrb[0].mxu0 %v4363
        %v4365 = vpop.f32.mrb[0].mxu0
        %v4366 = vadd.f32 %v4061, %v4365
        %v4367 = vpop.f32.mrb[0].mxu0
        %v4368 = vand.u32 %v2555, 4294901760
        %4369 = vmatprep.mubr.f32.mxu0 %v4368
        %v4370 = vand.u32 %v2554, 4294901760
        %4371 = vmatmul.mubr.f32.gmra.mrb[0].mxu0 %v4370
        %v4372 = vpop.f32.mrb[0].mxu0
        %v4373 = vadd.f32 %v4076, %v4372
        %v4374 = vpop.f32.mrb[0].mxu0
        %v4375 = vand.u32 %v2557, 4294901760
        %4376 = vmatprep.mubr.f32.mxu0 %v4375
        %v4377 = vand.u32 %v2556, 4294901760
        %4378 = vmatmul.mubr.f32.gmra.mrb[0].mxu0 %v4377
        %v4379 = vpop.f32.mrb[0].mxu0
        %v4380 = vadd.f32 %v4091, %v4379
        %v4381 = vpop.f32.mrb[0].mxu0
        %v4382 = vand.u32 %v2559, 4294901760
        %4383 = vmatprep.mubr.f32.mxu0 %v4382
        %v4384 = vand.u32 %v2558, 4294901760
        %4385 = vmatmul.mubr.f32.gmra.mrb[0].mxu0 %v4384
        %v4386 = vpop.f32.mrb[0].mxu0
        %v4387 = vadd.f32 %v4106, %v4386
        %v4388 = vpop.f32.mrb[0].mxu0
        %4389 = vdwg.mxu0
        %4390 = vmatprep.subr.mxu0 0.0
        %v4391 = vand.u32 %v3853, 4294901760
        %v4392 = vsub.f32 %v3853, %v4391
        %4393 = vmatpush1.msra.mxu0 %v4392
        %4394 = vmatprep.subr.mxu0 0.0
        %v4395 = vand.u32 %v3854, 4294901760
        %v4396 = vsub.f32 %v3854, %v4395
        %4397 = vmatpush1.msra.mxu0 %v4396
        %4398 = vmatprep.subr.mxu0 0.0
        %v4399 = vand.u32 %v3855, 4294901760
        %v4400 = vsub.f32 %v3855, %v4399
        %4401 = vmatpush1.msra.mxu0 %v4400
        %4402 = vmatprep.subr.mxu0 0.0
        %v4403 = vand.u32 %v3856, 4294901760
        %v4404 = vsub.f32 %v3856, %v4403
        %4405 = vmatpush1.msra.mxu0 %v4404
        %4406 = vmatprep.subr.mxu0 0.0
        %v4407 = vand.u32 %v3857, 4294901760
        %v4408 = vsub.f32 %v3857, %v4407
        %4409 = vmatpush1.msra.mxu0 %v4408
        %4410 = vmatprep.subr.mxu0 0.0
        %v4411 = vand.u32 %v3858, 4294901760
        %v4412 = vsub.f32 %v3858, %v4411
        %4413 = vmatpush1.msra.mxu0 %v4412
        %4414 = vmatprep.subr.mxu0 0.0
        %v4415 = vand.u32 %v3859, 4294901760
        %v4416 = vsub.f32 %v3859, %v4415
        %4417 = vmatpush1.msra.mxu0 %v4416
        %4418 = vmatprep.subr.mxu0 0.0
        %v4419 = vand.u32 %v3860, 4294901760
        %v4420 = vsub.f32 %v3860, %v4419
        %4421 = vmatpush1.msra.mxu0 %v4420
        %4422 = vmatprep.subr.mxu0 0.0
        %v4423 = vand.u32 %v3861, 4294901760
        %v4424 = vsub.f32 %v3861, %v4423
        %4425 = vmatpush1.msra.mxu0 %v4424
        %4426 = vmatprep.subr.mxu0 0.0
        %v4427 = vand.u32 %v3862, 4294901760
        %v4428 = vsub.f32 %v3862, %v4427
        %4429 = vmatpush1.msra.mxu0 %v4428
        %4430 = vmatprep.subr.mxu0 0.0
        %v4431 = vand.u32 %v3863, 4294901760
        %v4432 = vsub.f32 %v3863, %v4431
        %4433 = vmatpush1.msra.mxu0 %v4432
        %4434 = vmatprep.subr.mxu0 0.0
        %v4435 = vand.u32 %v3864, 4294901760
        %v4436 = vsub.f32 %v3864, %v4435
        %4437 = vmatpush1.msra.mxu0 %v4436
        %4438 = vmatprep.subr.mxu0 0.0
        %v4439 = vand.u32 %v3865, 4294901760
        %v4440 = vsub.f32 %v3865, %v4439
        %4441 = vmatpush1.msra.mxu0 %v4440
        %4442 = vmatprep.subr.mxu0 0.0
        %v4443 = vand.u32 %v3866, 4294901760
        %v4444 = vsub.f32 %v3866, %v4443
        %4445 = vmatpush1.msra.mxu0 %v4444
        %4446 = vmatprep.subr.mxu0 0.0
        %v4447 = vand.u32 %v3867, 4294901760
        %v4448 = vsub.f32 %v3867, %v4447
        %4449 = vmatpush1.msra.mxu0 %v4448
        %4450 = vmatprep.subr.mxu0 0.0
        %v4451 = vand.u32 %v3868, 4294901760
        %v4452 = vsub.f32 %v3868, %v4451
        %4453 = vmatpush1.msra.mxu0 %v4452
        %4454 = vmatprep.subr.mxu0 0.0
        %v4455 = vand.u32 %v3869, 4294901760
        %v4456 = vsub.f32 %v3869, %v4455
        %4457 = vmatpush1.msra.mxu0 %v4456
        %4458 = vmatprep.subr.mxu0 0.0
        %v4459 = vand.u32 %v3870, 4294901760
        %v4460 = vsub.f32 %v3870, %v4459
        %4461 = vmatpush1.msra.mxu0 %v4460
        %4462 = vmatprep.subr.mxu0 0.0
        %v4463 = vand.u32 %v3871, 4294901760
        %v4464 = vsub.f32 %v3871, %v4463
        %4465 = vmatpush1.msra.mxu0 %v4464
        %4466 = vmatprep.subr.mxu0 0.0
        %v4467 = vand.u32 %v3872, 4294901760
        %v4468 = vsub.f32 %v3872, %v4467
        %4469 = vmatpush1.msra.mxu0 %v4468
        %4470 = vmatprep.subr.mxu0 0.0
        %v4471 = vand.u32 %v3873, 4294901760
        %v4472 = vsub.f32 %v3873, %v4471
        %4473 = vmatpush1.msra.mxu0 %v4472
        %4474 = vmatprep.subr.mxu0 0.0
        %v4475 = vand.u32 %v3874, 4294901760
        %v4476 = vsub.f32 %v3874, %v4475
        %4477 = vmatpush1.msra.mxu0 %v4476
        %4478 = vmatprep.subr.mxu0 0.0
        %v4479 = vand.u32 %v3875, 4294901760
        %v4480 = vsub.f32 %v3875, %v4479
        %4481 = vmatpush1.msra.mxu0 %v4480
        %4482 = vmatprep.subr.mxu0 0.0
        %v4483 = vand.u32 %v3876, 4294901760
        %v4484 = vsub.f32 %v3876, %v4483
        %4485 = vmatpush1.msra.mxu0 %v4484
        %4486 = vmatprep.subr.mxu0 0.0
        %v4487 = vand.u32 %v3877, 4294901760
        %v4488 = vsub.f32 %v3877, %v4487
        %4489 = vmatpush1.msra.mxu0 %v4488
        %4490 = vmatprep.subr.mxu0 0.0
        %v4491 = vand.u32 %v3878, 4294901760
        %v4492 = vsub.f32 %v3878, %v4491
        %4493 = vmatpush1.msra.mxu0 %v4492
        %4494 = vmatprep.subr.mxu0 0.0
        %v4495 = vand.u32 %v3879, 4294901760
        %v4496 = vsub.f32 %v3879, %v4495
        %4497 = vmatpush1.msra.mxu0 %v4496
        %4498 = vmatprep.subr.mxu0 0.0
        %v4499 = vand.u32 %v3880, 4294901760
        %v4500 = vsub.f32 %v3880, %v4499
        %4501 = vmatpush1.msra.mxu0 %v4500
        %4502 = vmatprep.subr.mxu0 0.0
        %v4503 = vand.u32 %v3881, 4294901760
        %v4504 = vsub.f32 %v3881, %v4503
        %4505 = vmatpush1.msra.mxu0 %v4504
        %4506 = vmatprep.subr.mxu0 0.0
        %v4507 = vand.u32 %v3882, 4294901760
        %v4508 = vsub.f32 %v3882, %v4507
        %4509 = vmatpush1.msra.mxu0 %v4508
        %4510 = vmatprep.subr.mxu0 0.0
        %v4511 = vand.u32 %v3883, 4294901760
        %v4512 = vsub.f32 %v3883, %v4511
        %4513 = vmatpush1.msra.mxu0 %v4512
        %4514 = vmatprep.subr.mxu0 0.0
        %v4515 = vand.u32 %v3884, 4294901760
        %v4516 = vsub.f32 %v3884, %v4515
        %4517 = vmatpush1.msra.mxu0 %v4516
        %v4518 = vand.u32 %v2545, 4294901760
        %v4519 = vsub.f32 %v2545, %v4518
        %4520 = vmatprep.mubr.f32.mxu0 %v4519
        %v4521 = vand.u32 %v2544, 4294901760
        %v4522 = vsub.f32 %v2544, %v4521
        %4523 = vmatmul.mubr.f32.gmra.mrb[0].mxu0 %v4522
        %v4524 = vpop.f32.mrb[0].mxu0
        %v4525 = vadd.f32 %v4338, %v4524
        %v4526 = vpop.f32.mrb[0].mxu0
        %v4527 = vand.u32 %v2547, 4294901760
        %v4528 = vsub.f32 %v2547, %v4527
        %4529 = vmatprep.mubr.f32.mxu0 %v4528
        %v4530 = vand.u32 %v2546, 4294901760
        %v4531 = vsub.f32 %v2546, %v4530
        %4532 = vmatmul.mubr.f32.gmra.mrb[0].mxu0 %v4531
        %v4533 = vpop.f32.mrb[0].mxu0
        %v4534 = vadd.f32 %v4345, %v4533
        %v4535 = vpop.f32.mrb[0].mxu0
        %v4536 = vand.u32 %v2549, 4294901760
        %v4537 = vsub.f32 %v2549, %v4536
        %4538 = vmatprep.mubr.f32.mxu0 %v4537
        %v4539 = vand.u32 %v2548, 4294901760
        %v4540 = vsub.f32 %v2548, %v4539
        %4541 = vmatmul.mubr.f32.gmra.mrb[0].mxu0 %v4540
        %v4542 = vpop.f32.mrb[0].mxu0
        %v4543 = vadd.f32 %v4352, %v4542
        %v4544 = vpop.f32.mrb[0].mxu0
        %v4545 = vand.u32 %v2551, 4294901760
        %v4546 = vsub.f32 %v2551, %v4545
        %4547 = vmatprep.mubr.f32.mxu0 %v4546
        %v4548 = vand.u32 %v2550, 4294901760
        %v4549 = vsub.f32 %v2550, %v4548
        %4550 = vmatmul.mubr.f32.gmra.mrb[0].mxu0 %v4549
        %v4551 = vpop.f32.mrb[0].mxu0
        %v4552 = vadd.f32 %v4359, %v4551
        %v4553 = vpop.f32.mrb[0].mxu0
        %v4554 = vand.u32 %v2553, 4294901760
        %v4555 = vsub.f32 %v2553, %v4554
        %4556 = vmatprep.mubr.f32.mxu0 %v4555
        %v4557 = vand.u32 %v2552, 4294901760
        %v4558 = vsub.f32 %v2552, %v4557
        %4559 = vmatmul.mubr.f32.gmra.mrb[0].mxu0 %v4558
        %v4560 = vpop.f32.mrb[0].mxu0
        %v4561 = vadd.f32 %v4366, %v4560
        %v4562 = vpop.f32.mrb[0].mxu0
        %v4563 = vand.u32 %v2555, 4294901760
        %v4564 = vsub.f32 %v2555, %v4563
        %4565 = vmatprep.mubr.f32.mxu0 %v4564
        %v4566 = vand.u32 %v2554, 4294901760
        %v4567 = vsub.f32 %v2554, %v4566
        %4568 = vmatmul.mubr.f32.gmra.mrb[0].mxu0 %v4567
        %v4569 = vpop.f32.mrb[0].mxu0
        %v4570 = vadd.f32 %v4373, %v4569
        %v4571 = vpop.f32.mrb[0].mxu0
        %v4572 = vand.u32 %v2557, 4294901760
        %v4573 = vsub.f32 %v2557, %v4572
        %4574 = vmatprep.mubr.f32.mxu0 %v4573
        %v4575 = vand.u32 %v2556, 4294901760
        %v4576 = vsub.f32 %v2556, %v4575
        %4577 = vmatmul.mubr.f32.gmra.mrb[0].mxu0 %v4576
        %v4578 = vpop.f32.mrb[0].mxu0
        %v4579 = vadd.f32 %v4380, %v4578
        %v4580 = vpop.f32.mrb[0].mxu0
        %v4581 = vand.u32 %v2559, 4294901760
        %v4582 = vsub.f32 %v2559, %v4581
        %4583 = vmatprep.mubr.f32.mxu0 %v4582
        %v4584 = vand.u32 %v2558, 4294901760
        %v4585 = vsub.f32 %v2558, %v4584
        %4586 = vmatmul.mubr.f32.gmra.mrb[0].mxu0 %v4585
        %v4587 = vpop.f32.mrb[0].mxu0
        %v4588 = vadd.f32 %v4387, %v4587
        %v4589 = vpop.f32.mrb[0].mxu0
        %4590 = vdwg.mxu0
        %4591 = vmatprep.subr.mxu0 0.0
        %v4592 = vand.u32 %v3853, 4294901760
        %4593 = vmatpush1.msra.mxu0 %v4592
        %4594 = vmatprep.subr.mxu0 0.0
        %v4595 = vand.u32 %v3854, 4294901760
        %4596 = vmatpush1.msra.mxu0 %v4595
        %4597 = vmatprep.subr.mxu0 0.0
        %v4598 = vand.u32 %v3855, 4294901760
        %4599 = vmatpush1.msra.mxu0 %v4598
        %4600 = vmatprep.subr.mxu0 0.0
        %v4601 = vand.u32 %v3856, 4294901760
        %4602 = vmatpush1.msra.mxu0 %v4601
        %4603 = vmatprep.subr.mxu0 0.0
        %v4604 = vand.u32 %v3857, 4294901760
        %4605 = vmatpush1.msra.mxu0 %v4604
        %4606 = vmatprep.subr.mxu0 0.0
        %v4607 = vand.u32 %v3858, 4294901760
        %4608 = vmatpush1.msra.mxu0 %v4607
        %4609 = vmatprep.subr.mxu0 0.0
        %v4610 = vand.u32 %v3859, 4294901760
        %4611 = vmatpush1.msra.mxu0 %v4610
        %4612 = vmatprep.subr.mxu0 0.0
        %v4613 = vand.u32 %v3860, 4294901760
        %4614 = vmatpush1.msra.mxu0 %v4613
        %4615 = vmatprep.subr.mxu0 0.0
        %v4616 = vand.u32 %v3861, 4294901760
        %4617 = vmatpush1.msra.mxu0 %v4616
        %4618 = vmatprep.subr.mxu0 0.0
        %v4619 = vand.u32 %v3862, 4294901760
        %4620 = vmatpush1.msra.mxu0 %v4619
        %4621 = vmatprep.subr.mxu0 0.0
        %v4622 = vand.u32 %v3863, 4294901760
        %4623 = vmatpush1.msra.mxu0 %v4622
        %4624 = vmatprep.subr.mxu0 0.0
        %v4625 = vand.u32 %v3864, 4294901760
        %4626 = vmatpush1.msra.mxu0 %v4625
        %4627 = vmatprep.subr.mxu0 0.0
        %v4628 = vand.u32 %v3865, 4294901760
        %4629 = vmatpush1.msra.mxu0 %v4628
        %4630 = vmatprep.subr.mxu0 0.0
        %v4631 = vand.u32 %v3866, 4294901760
        %4632 = vmatpush1.msra.mxu0 %v4631
        %4633 = vmatprep.subr.mxu0 0.0
        %v4634 = vand.u32 %v3867, 4294901760
        %4635 = vmatpush1.msra.mxu0 %v4634
        %4636 = vmatprep.subr.mxu0 0.0
        %v4637 = vand.u32 %v3868, 4294901760
        %4638 = vmatpush1.msra.mxu0 %v4637
        %4639 = vmatprep.subr.mxu0 0.0
        %v4640 = vand.u32 %v3869, 4294901760
        %4641 = vmatpush1.msra.mxu0 %v4640
        %4642 = vmatprep.subr.mxu0 0.0
        %v4643 = vand.u32 %v3870, 4294901760
        %4644 = vmatpush1.msra.mxu0 %v4643
        %4645 = vmatprep.subr.mxu0 0.0
        %v4646 = vand.u32 %v3871, 4294901760
        %4647 = vmatpush1.msra.mxu0 %v4646
        %4648 = vmatprep.subr.mxu0 0.0
        %v4649 = vand.u32 %v3872, 4294901760
        %4650 = vmatpush1.msra.mxu0 %v4649
        %4651 = vmatprep.subr.mxu0 0.0
        %v4652 = vand.u32 %v3873, 4294901760
        %4653 = vmatpush1.msra.mxu0 %v4652
        %4654 = vmatprep.subr.mxu0 0.0
        %v4655 = vand.u32 %v3874, 4294901760
        %4656 = vmatpush1.msra.mxu0 %v4655
        %4657 = vmatprep.subr.mxu0 0.0
        %v4658 = vand.u32 %v3875, 4294901760
        %4659 = vmatpush1.msra.mxu0 %v4658
        %4660 = vmatprep.subr.mxu0 0.0
        %v4661 = vand.u32 %v3876, 4294901760
        %4662 = vmatpush1.msra.mxu0 %v4661
        %4663 = vmatprep.subr.mxu0 0.0
        %v4664 = vand.u32 %v3877, 4294901760
        %4665 = vmatpush1.msra.mxu0 %v4664
        %4666 = vmatprep.subr.mxu0 0.0
        %v4667 = vand.u32 %v3878, 4294901760
        %4668 = vmatpush1.msra.mxu0 %v4667
        %4669 = vmatprep.subr.mxu0 0.0
        %v4670 = vand.u32 %v3879, 4294901760
        %4671 = vmatpush1.msra.mxu0 %v4670
        %4672 = vmatprep.subr.mxu0 0.0
        %v4673 = vand.u32 %v3880, 4294901760
        %4674 = vmatpush1.msra.mxu0 %v4673
        %4675 = vmatprep.subr.mxu0 0.0
        %v4676 = vand.u32 %v3881, 4294901760
        %4677 = vmatpush1.msra.mxu0 %v4676
        %4678 = vmatprep.subr.mxu0 0.0
        %v4679 = vand.u32 %v3882, 4294901760
        %4680 = vmatpush1.msra.mxu0 %v4679
        %4681 = vmatprep.subr.mxu0 0.0
        %v4682 = vand.u32 %v3883, 4294901760
        %4683 = vmatpush1.msra.mxu0 %v4682
        %4684 = vmatprep.subr.mxu0 0.0
        %v4685 = vand.u32 %v3884, 4294901760
        %4686 = vmatpush1.msra.mxu0 %v4685
        %v4687 = vand.u32 %v2545, 4294901760
        %v4688 = vsub.f32 %v2545, %v4687
        %v4689 = vand.u32 %v4688, 4294901760
        %4690 = vmatprep.mubr.f32.mxu0 %v4689
        %v4691 = vand.u32 %v2544, 4294901760
        %v4692 = vsub.f32 %v2544, %v4691
        %v4693 = vand.u32 %v4692, 4294901760
        %4694 = vmatmul.mubr.f32.gmra.mrb[0].mxu0 %v4693
        %v4695 = vpop.f32.mrb[0].mxu0
        %v4696 = vadd.f32 %v4525, %v4695
        %v4697 = vpop.f32.mrb[0].mxu0
        %v4698 = vand.u32 %v2547, 4294901760
        %v4699 = vsub.f32 %v2547, %v4698
        %v4700 = vand.u32 %v4699, 4294901760
        %4701 = vmatprep.mubr.f32.mxu0 %v4700
        %v4702 = vand.u32 %v2546, 4294901760
        %v4703 = vsub.f32 %v2546, %v4702
        %v4704 = vand.u32 %v4703, 4294901760
        %4705 = vmatmul.mubr.f32.gmra.mrb[0].mxu0 %v4704
        %v4706 = vpop.f32.mrb[0].mxu0
        %v4707 = vadd.f32 %v4534, %v4706
        %v4708 = vpop.f32.mrb[0].mxu0
        %v4709 = vand.u32 %v2549, 4294901760
        %v4710 = vsub.f32 %v2549, %v4709
        %v4711 = vand.u32 %v4710, 4294901760
        %4712 = vmatprep.mubr.f32.mxu0 %v4711
        %v4713 = vand.u32 %v2548, 4294901760
        %v4714 = vsub.f32 %v2548, %v4713
        %v4715 = vand.u32 %v4714, 4294901760
        %4716 = vmatmul.mubr.f32.gmra.mrb[0].mxu0 %v4715
        %v4717 = vpop.f32.mrb[0].mxu0
        %v4718 = vadd.f32 %v4543, %v4717
        %v4719 = vpop.f32.mrb[0].mxu0
        %v4720 = vand.u32 %v2551, 4294901760
        %v4721 = vsub.f32 %v2551, %v4720
        %v4722 = vand.u32 %v4721, 4294901760
        %4723 = vmatprep.mubr.f32.mxu0 %v4722
        %v4724 = vand.u32 %v2550, 4294901760
        %v4725 = vsub.f32 %v2550, %v4724
        %v4726 = vand.u32 %v4725, 4294901760
        %4727 = vmatmul.mubr.f32.gmra.mrb[0].mxu0 %v4726
        %v4728 = vpop.f32.mrb[0].mxu0
        %v4729 = vadd.f32 %v4552, %v4728
        %v4730 = vpop.f32.mrb[0].mxu0
        %v4731 = vand.u32 %v2553, 4294901760
        %v4732 = vsub.f32 %v2553, %v4731
        %v4733 = vand.u32 %v4732, 4294901760
        %4734 = vmatprep.mubr.f32.mxu0 %v4733
        %v4735 = vand.u32 %v2552, 4294901760
        %v4736 = vsub.f32 %v2552, %v4735
        %v4737 = vand.u32 %v4736, 4294901760
        %4738 = vmatmul.mubr.f32.gmra.mrb[0].mxu0 %v4737
        %v4739 = vpop.f32.mrb[0].mxu0
        %v4740 = vadd.f32 %v4561, %v4739
        %v4741 = vpop.f32.mrb[0].mxu0
        %v4742 = vand.u32 %v2555, 4294901760
        %v4743 = vsub.f32 %v2555, %v4742
        %v4744 = vand.u32 %v4743, 4294901760
        %4745 = vmatprep.mubr.f32.mxu0 %v4744
        %v4746 = vand.u32 %v2554, 4294901760
        %v4747 = vsub.f32 %v2554, %v4746
        %v4748 = vand.u32 %v4747, 4294901760
        %4749 = vmatmul.mubr.f32.gmra.mrb[0].mxu0 %v4748
        %v4750 = vpop.f32.mrb[0].mxu0
        %v4751 = vadd.f32 %v4570, %v4750
        %v4752 = vpop.f32.mrb[0].mxu0
        %v4753 = vand.u32 %v2557, 4294901760
        %v4754 = vsub.f32 %v2557, %v4753
        %v4755 = vand.u32 %v4754, 4294901760
        %4756 = vmatprep.mubr.f32.mxu0 %v4755
        %v4757 = vand.u32 %v2556, 4294901760
        %v4758 = vsub.f32 %v2556, %v4757
        %v4759 = vand.u32 %v4758, 4294901760
        %4760 = vmatmul.mubr.f32.gmra.mrb[0].mxu0 %v4759
        %v4761 = vpop.f32.mrb[0].mxu0
        %v4762 = vadd.f32 %v4579, %v4761
        %v4763 = vpop.f32.mrb[0].mxu0
        %v4764 = vand.u32 %v2559, 4294901760
        %v4765 = vsub.f32 %v2559, %v4764
        %v4766 = vand.u32 %v4765, 4294901760
        %4767 = vmatprep.mubr.f32.mxu0 %v4766
        %v4768 = vand.u32 %v2558, 4294901760
        %v4769 = vsub.f32 %v2558, %v4768
        %v4770 = vand.u32 %v4769, 4294901760
        %4771 = vmatmul.mubr.f32.gmra.mrb[0].mxu0 %v4770
        %v4772 = vpop.f32.mrb[0].mxu0
        %v4773 = vadd.f32 %v4588, %v4772
        %v4774 = vpop.f32.mrb[0].mxu0
        %4775 = vdwg.mxu0
        %4776 = vmatprep.subr.mxu0 0.0
        %v4777 = vand.u32 %v3853, 4294901760
        %v4778 = vsub.f32 %v3853, %v4777
        %v4779 = vand.u32 %v4778, 4294901760
        %4780 = vmatpush1.msra.mxu0 %v4779
        %4781 = vmatprep.subr.mxu0 0.0
        %v4782 = vand.u32 %v3854, 4294901760
        %v4783 = vsub.f32 %v3854, %v4782
        %v4784 = vand.u32 %v4783, 4294901760
        %4785 = vmatpush1.msra.mxu0 %v4784
        %4786 = vmatprep.subr.mxu0 0.0
        %v4787 = vand.u32 %v3855, 4294901760
        %v4788 = vsub.f32 %v3855, %v4787
        %v4789 = vand.u32 %v4788, 4294901760
        %4790 = vmatpush1.msra.mxu0 %v4789
        %4791 = vmatprep.subr.mxu0 0.0
        %v4792 = vand.u32 %v3856, 4294901760
        %v4793 = vsub.f32 %v3856, %v4792
        %v4794 = vand.u32 %v4793, 4294901760
        %4795 = vmatpush1.msra.mxu0 %v4794
        %4796 = vmatprep.subr.mxu0 0.0
        %v4797 = vand.u32 %v3857, 4294901760
        %v4798 = vsub.f32 %v3857, %v4797
        %v4799 = vand.u32 %v4798, 4294901760
        %4800 = vmatpush1.msra.mxu0 %v4799
        %4801 = vmatprep.subr.mxu0 0.0
        %v4802 = vand.u32 %v3858, 4294901760
        %v4803 = vsub.f32 %v3858, %v4802
        %v4804 = vand.u32 %v4803, 4294901760
        %4805 = vmatpush1.msra.mxu0 %v4804
        %4806 = vmatprep.subr.mxu0 0.0
        %v4807 = vand.u32 %v3859, 4294901760
        %v4808 = vsub.f32 %v3859, %v4807
        %v4809 = vand.u32 %v4808, 4294901760
        %4810 = vmatpush1.msra.mxu0 %v4809
        %4811 = vmatprep.subr.mxu0 0.0
        %v4812 = vand.u32 %v3860, 4294901760
        %v4813 = vsub.f32 %v3860, %v4812
        %v4814 = vand.u32 %v4813, 4294901760
        %4815 = vmatpush1.msra.mxu0 %v4814
        %4816 = vmatprep.subr.mxu0 0.0
        %v4817 = vand.u32 %v3861, 4294901760
        %v4818 = vsub.f32 %v3861, %v4817
        %v4819 = vand.u32 %v4818, 4294901760
        %4820 = vmatpush1.msra.mxu0 %v4819
        %4821 = vmatprep.subr.mxu0 0.0
        %v4822 = vand.u32 %v3862, 4294901760
        %v4823 = vsub.f32 %v3862, %v4822
        %v4824 = vand.u32 %v4823, 4294901760
        %4825 = vmatpush1.msra.mxu0 %v4824
        %4826 = vmatprep.subr.mxu0 0.0
        %v4827 = vand.u32 %v3863, 4294901760
        %v4828 = vsub.f32 %v3863, %v4827
        %v4829 = vand.u32 %v4828, 4294901760
        %4830 = vmatpush1.msra.mxu0 %v4829
        %4831 = vmatprep.subr.mxu0 0.0
        %v4832 = vand.u32 %v3864, 4294901760
        %v4833 = vsub.f32 %v3864, %v4832
        %v4834 = vand.u32 %v4833, 4294901760
        %4835 = vmatpush1.msra.mxu0 %v4834
        %4836 = vmatprep.subr.mxu0 0.0
        %v4837 = vand.u32 %v3865, 4294901760
        %v4838 = vsub.f32 %v3865, %v4837
        %v4839 = vand.u32 %v4838, 4294901760
        %4840 = vmatpush1.msra.mxu0 %v4839
        %4841 = vmatprep.subr.mxu0 0.0
        %v4842 = vand.u32 %v3866, 4294901760
        %v4843 = vsub.f32 %v3866, %v4842
        %v4844 = vand.u32 %v4843, 4294901760
        %4845 = vmatpush1.msra.mxu0 %v4844
        %4846 = vmatprep.subr.mxu0 0.0
        %v4847 = vand.u32 %v3867, 4294901760
        %v4848 = vsub.f32 %v3867, %v4847
        %v4849 = vand.u32 %v4848, 4294901760
        %4850 = vmatpush1.msra.mxu0 %v4849
        %4851 = vmatprep.subr.mxu0 0.0
        %v4852 = vand.u32 %v3868, 4294901760
        %v4853 = vsub.f32 %v3868, %v4852
        %v4854 = vand.u32 %v4853, 4294901760
        %4855 = vmatpush1.msra.mxu0 %v4854
        %4856 = vmatprep.subr.mxu0 0.0
        %v4857 = vand.u32 %v3869, 4294901760
        %v4858 = vsub.f32 %v3869, %v4857
        %v4859 = vand.u32 %v4858, 4294901760
        %4860 = vmatpush1.msra.mxu0 %v4859
        %4861 = vmatprep.subr.mxu0 0.0
        %v4862 = vand.u32 %v3870, 4294901760
        %v4863 = vsub.f32 %v3870, %v4862
        %v4864 = vand.u32 %v4863, 4294901760
        %4865 = vmatpush1.msra.mxu0 %v4864
        %4866 = vmatprep.subr.mxu0 0.0
        %v4867 = vand.u32 %v3871, 4294901760
        %v4868 = vsub.f32 %v3871, %v4867
        %v4869 = vand.u32 %v4868, 4294901760
        %4870 = vmatpush1.msra.mxu0 %v4869
        %4871 = vmatprep.subr.mxu0 0.0
        %v4872 = vand.u32 %v3872, 4294901760
        %v4873 = vsub.f32 %v3872, %v4872
        %v4874 = vand.u32 %v4873, 4294901760
        %4875 = vmatpush1.msra.mxu0 %v4874
        %4876 = vmatprep.subr.mxu0 0.0
        %v4877 = vand.u32 %v3873, 4294901760
        %v4878 = vsub.f32 %v3873, %v4877
        %v4879 = vand.u32 %v4878, 4294901760
        %4880 = vmatpush1.msra.mxu0 %v4879
        %4881 = vmatprep.subr.mxu0 0.0
        %v4882 = vand.u32 %v3874, 4294901760
        %v4883 = vsub.f32 %v3874, %v4882
        %v4884 = vand.u32 %v4883, 4294901760
        %4885 = vmatpush1.msra.mxu0 %v4884
        %4886 = vmatprep.subr.mxu0 0.0
        %v4887 = vand.u32 %v3875, 4294901760
        %v4888 = vsub.f32 %v3875, %v4887
        %v4889 = vand.u32 %v4888, 4294901760
        %4890 = vmatpush1.msra.mxu0 %v4889
        %4891 = vmatprep.subr.mxu0 0.0
        %v4892 = vand.u32 %v3876, 4294901760
        %v4893 = vsub.f32 %v3876, %v4892
        %v4894 = vand.u32 %v4893, 4294901760
        %4895 = vmatpush1.msra.mxu0 %v4894
        %4896 = vmatprep.subr.mxu0 0.0
        %v4897 = vand.u32 %v3877, 4294901760
        %v4898 = vsub.f32 %v3877, %v4897
        %v4899 = vand.u32 %v4898, 4294901760
        %4900 = vmatpush1.msra.mxu0 %v4899
        %4901 = vmatprep.subr.mxu0 0.0
        %v4902 = vand.u32 %v3878, 4294901760
        %v4903 = vsub.f32 %v3878, %v4902
        %v4904 = vand.u32 %v4903, 4294901760
        %4905 = vmatpush1.msra.mxu0 %v4904
        %4906 = vmatprep.subr.mxu0 0.0
        %v4907 = vand.u32 %v3879, 4294901760
        %v4908 = vsub.f32 %v3879, %v4907
        %v4909 = vand.u32 %v4908, 4294901760
        %4910 = vmatpush1.msra.mxu0 %v4909
        %4911 = vmatprep.subr.mxu0 0.0
        %v4912 = vand.u32 %v3880, 4294901760
        %v4913 = vsub.f32 %v3880, %v4912
        %v4914 = vand.u32 %v4913, 4294901760
        %4915 = vmatpush1.msra.mxu0 %v4914
        %4916 = vmatprep.subr.mxu0 0.0
        %v4917 = vand.u32 %v3881, 4294901760
        %v4918 = vsub.f32 %v3881, %v4917
        %v4919 = vand.u32 %v4918, 4294901760
        %4920 = vmatpush1.msra.mxu0 %v4919
        %4921 = vmatprep.subr.mxu0 0.0
        %v4922 = vand.u32 %v3882, 4294901760
        %v4923 = vsub.f32 %v3882, %v4922
        %v4924 = vand.u32 %v4923, 4294901760
        %4925 = vmatpush1.msra.mxu0 %v4924
        %4926 = vmatprep.subr.mxu0 0.0
        %v4927 = vand.u32 %v3883, 4294901760
        %v4928 = vsub.f32 %v3883, %v4927
        %v4929 = vand.u32 %v4928, 4294901760
        %4930 = vmatpush1.msra.mxu0 %v4929
        %4931 = vmatprep.subr.mxu0 0.0
        %v4932 = vand.u32 %v3884, 4294901760
        %v4933 = vsub.f32 %v3884, %v4932
        %v4934 = vand.u32 %v4933, 4294901760
        %4935 = vmatpush1.msra.mxu0 %v4934
        %v4936 = vand.u32 %v2545, 4294901760
        %4937 = vmatprep.mubr.f32.mxu0 %v4936
        %v4938 = vand.u32 %v2544, 4294901760
        %4939 = vmatmul.mubr.f32.gmra.mrb[0].mxu0 %v4938
        %v4940 = vpop.f32.mrb[0].mxu0
        %v4941 = vadd.f32 %v4696, %v4940
        %v4942 = vpop.f32.mrb[0].mxu0
        %v4943 = vand.u32 %v2547, 4294901760
        %4944 = vmatprep.mubr.f32.mxu0 %v4943
        %v4945 = vand.u32 %v2546, 4294901760
        %4946 = vmatmul.mubr.f32.gmra.mrb[0].mxu0 %v4945
        %v4947 = vpop.f32.mrb[0].mxu0
        %v4948 = vadd.f32 %v4707, %v4947
        %v4949 = vpop.f32.mrb[0].mxu0
        %v4950 = vand.u32 %v2549, 4294901760
        %4951 = vmatprep.mubr.f32.mxu0 %v4950
        %v4952 = vand.u32 %v2548, 4294901760
        %4953 = vmatmul.mubr.f32.gmra.mrb[0].mxu0 %v4952
        %v4954 = vpop.f32.mrb[0].mxu0
        %v4955 = vadd.f32 %v4718, %v4954
        %v4956 = vpop.f32.mrb[0].mxu0
        %v4957 = vand.u32 %v2551, 4294901760
        %4958 = vmatprep.mubr.f32.mxu0 %v4957
        %v4959 = vand.u32 %v2550, 4294901760
        %4960 = vmatmul.mubr.f32.gmra.mrb[0].mxu0 %v4959
        %v4961 = vpop.f32.mrb[0].mxu0
        %v4962 = vadd.f32 %v4729, %v4961
        %v4963 = vpop.f32.mrb[0].mxu0
        %v4964 = vand.u32 %v2553, 4294901760
        %4965 = vmatprep.mubr.f32.mxu0 %v4964
        %v4966 = vand.u32 %v2552, 4294901760
        %4967 = vmatmul.mubr.f32.gmra.mrb[0].mxu0 %v4966
        %v4968 = vpop.f32.mrb[0].mxu0
        %v4969 = vadd.f32 %v4740, %v4968
        %v4970 = vpop.f32.mrb[0].mxu0
        %v4971 = vand.u32 %v2555, 4294901760
        %4972 = vmatprep.mubr.f32.mxu0 %v4971
        %v4973 = vand.u32 %v2554, 4294901760
        %4974 = vmatmul.mubr.f32.gmra.mrb[0].mxu0 %v4973
        %v4975 = vpop.f32.mrb[0].mxu0
        %v4976 = vadd.f32 %v4751, %v4975
        %v4977 = vpop.f32.mrb[0].mxu0
        %v4978 = vand.u32 %v2557, 4294901760
        %4979 = vmatprep.mubr.f32.mxu0 %v4978
        %v4980 = vand.u32 %v2556, 4294901760
        %4981 = vmatmul.mubr.f32.gmra.mrb[0].mxu0 %v4980
        %v4982 = vpop.f32.mrb[0].mxu0
        %v4983 = vadd.f32 %v4762, %v4982
        %v4984 = vpop.f32.mrb[0].mxu0
        %v4985 = vand.u32 %v2559, 4294901760
        %4986 = vmatprep.mubr.f32.mxu0 %v4985
        %v4987 = vand.u32 %v2558, 4294901760
        %4988 = vmatmul.mubr.f32.gmra.mrb[0].mxu0 %v4987
        %v4989 = vpop.f32.mrb[0].mxu0
        %v4990 = vadd.f32 %v4773, %v4989
        %v4991 = vpop.f32.mrb[0].mxu0
        %4992 = vdwg.mxu0
        %4993 = vmatprep.subr.mxu0 0.0
        %v4994 = vand.u32 %v3853, 4294901760
        %4995 = vmatpush1.msra.mxu0 %v4994
        %4996 = vmatprep.subr.mxu0 0.0
        %v4997 = vand.u32 %v3854, 4294901760
        %4998 = vmatpush1.msra.mxu0 %v4997
        %4999 = vmatprep.subr.mxu0 0.0
        %v5000 = vand.u32 %v3855, 4294901760
        %5001 = vmatpush1.msra.mxu0 %v5000
        %5002 = vmatprep.subr.mxu0 0.0
        %v5003 = vand.u32 %v3856, 4294901760
        %5004 = vmatpush1.msra.mxu0 %v5003
        %5005 = vmatprep.subr.mxu0 0.0
        %v5006 = vand.u32 %v3857, 4294901760
        %5007 = vmatpush1.msra.mxu0 %v5006
        %5008 = vmatprep.subr.mxu0 0.0
        %v5009 = vand.u32 %v3858, 4294901760
        %5010 = vmatpush1.msra.mxu0 %v5009
        %5011 = vmatprep.subr.mxu0 0.0
        %v5012 = vand.u32 %v3859, 4294901760
        %5013 = vmatpush1.msra.mxu0 %v5012
        %5014 = vmatprep.subr.mxu0 0.0
        %v5015 = vand.u32 %v3860, 4294901760
        %5016 = vmatpush1.msra.mxu0 %v5015
        %5017 = vmatprep.subr.mxu0 0.0
        %v5018 = vand.u32 %v3861, 4294901760
        %5019 = vmatpush1.msra.mxu0 %v5018
        %5020 = vmatprep.subr.mxu0 0.0
        %v5021 = vand.u32 %v3862, 4294901760
        %5022 = vmatpush1.msra.mxu0 %v5021
        %5023 = vmatprep.subr.mxu0 0.0
        %v5024 = vand.u32 %v3863, 4294901760
        %5025 = vmatpush1.msra.mxu0 %v5024
        %5026 = vmatprep.subr.mxu0 0.0
        %v5027 = vand.u32 %v3864, 4294901760
        %5028 = vmatpush1.msra.mxu0 %v5027
        %5029 = vmatprep.subr.mxu0 0.0
        %v5030 = vand.u32 %v3865, 4294901760
        %5031 = vmatpush1.msra.mxu0 %v5030
        %5032 = vmatprep.subr.mxu0 0.0
        %v5033 = vand.u32 %v3866, 4294901760
        %5034 = vmatpush1.msra.mxu0 %v5033
        %5035 = vmatprep.subr.mxu0 0.0
        %v5036 = vand.u32 %v3867, 4294901760
        %5037 = vmatpush1.msra.mxu0 %v5036
        %5038 = vmatprep.subr.mxu0 0.0
        %v5039 = vand.u32 %v3868, 4294901760
        %5040 = vmatpush1.msra.mxu0 %v5039
        %5041 = vmatprep.subr.mxu0 0.0
        %v5042 = vand.u32 %v3869, 4294901760
        %5043 = vmatpush1.msra.mxu0 %v5042
        %5044 = vmatprep.subr.mxu0 0.0
        %v5045 = vand.u32 %v3870, 4294901760
        %5046 = vmatpush1.msra.mxu0 %v5045
        %5047 = vmatprep.subr.mxu0 0.0
        %v5048 = vand.u32 %v3871, 4294901760
        %5049 = vmatpush1.msra.mxu0 %v5048
        %5050 = vmatprep.subr.mxu0 0.0
        %v5051 = vand.u32 %v3872, 4294901760
        %5052 = vmatpush1.msra.mxu0 %v5051
        %5053 = vmatprep.subr.mxu0 0.0
        %v5054 = vand.u32 %v3873, 4294901760
        %5055 = vmatpush1.msra.mxu0 %v5054
        %5056 = vmatprep.subr.mxu0 0.0
        %v5057 = vand.u32 %v3874, 4294901760
        %5058 = vmatpush1.msra.mxu0 %v5057
        %5059 = vmatprep.subr.mxu0 0.0
        %v5060 = vand.u32 %v3875, 4294901760
        %5061 = vmatpush1.msra.mxu0 %v5060
        %5062 = vmatprep.subr.mxu0 0.0
        %v5063 = vand.u32 %v3876, 4294901760
        %5064 = vmatpush1.msra.mxu0 %v5063
        %5065 = vmatprep.subr.mxu0 0.0
        %v5066 = vand.u32 %v3877, 4294901760
        %5067 = vmatpush1.msra.mxu0 %v5066
        %5068 = vmatprep.subr.mxu0 0.0
        %v5069 = vand.u32 %v3878, 4294901760
        %5070 = vmatpush1.msra.mxu0 %v5069
        %5071 = vmatprep.subr.mxu0 0.0
        %v5072 = vand.u32 %v3879, 4294901760
        %5073 = vmatpush1.msra.mxu0 %v5072
        %5074 = vmatprep.subr.mxu0 0.0
        %v5075 = vand.u32 %v3880, 4294901760
        %5076 = vmatpush1.msra.mxu0 %v5075
        %5077 = vmatprep.subr.mxu0 0.0
        %v5078 = vand.u32 %v3881, 4294901760
        %5079 = vmatpush1.msra.mxu0 %v5078
        %5080 = vmatprep.subr.mxu0 0.0
        %v5081 = vand.u32 %v3882, 4294901760
        %5082 = vmatpush1.msra.mxu0 %v5081
        %5083 = vmatprep.subr.mxu0 0.0
        %v5084 = vand.u32 %v3883, 4294901760
        %5085 = vmatpush1.msra.mxu0 %v5084
        %5086 = vmatprep.subr.mxu0 0.0
        %v5087 = vand.u32 %v3884, 4294901760
        %5088 = vmatpush1.msra.mxu0 %v5087
        %v5089 = vand.u32 %v2545, 4294901760
        %5090 = vmatprep.mubr.f32.mxu0 %v5089
        %v5091 = vand.u32 %v2544, 4294901760
        %5092 = vmatmul.mubr.f32.gmra.mrb[0].mxu0 %v5091
        %v5093 = vpop.f32.mrb[0].mxu0
        %v5094 = vadd.f32 %v4941, %v5093
        %v5095 = vpop.f32.mrb[0].mxu0
        %v5096 = vand.u32 %v2547, 4294901760
        %5097 = vmatprep.mubr.f32.mxu0 %v5096
        %v5098 = vand.u32 %v2546, 4294901760
        %5099 = vmatmul.mubr.f32.gmra.mrb[0].mxu0 %v5098
        %v5100 = vpop.f32.mrb[0].mxu0
        %v5101 = vadd.f32 %v4948, %v5100
        %v5102 = vpop.f32.mrb[0].mxu0
        %v5103 = vand.u32 %v2549, 4294901760
        %5104 = vmatprep.mubr.f32.mxu0 %v5103
        %v5105 = vand.u32 %v2548, 4294901760
        %5106 = vmatmul.mubr.f32.gmra.mrb[0].mxu0 %v5105
        %v5107 = vpop.f32.mrb[0].mxu0
        %v5108 = vadd.f32 %v4955, %v5107
        %v5109 = vpop.f32.mrb[0].mxu0
        %v5110 = vand.u32 %v2551, 4294901760
        %5111 = vmatprep.mubr.f32.mxu0 %v5110
        %v5112 = vand.u32 %v2550, 4294901760
        %5113 = vmatmul.mubr.f32.gmra.mrb[0].mxu0 %v5112
        %v5114 = vpop.f32.mrb[0].mxu0
        %v5115 = vadd.f32 %v4962, %v5114
        %v5116 = vpop.f32.mrb[0].mxu0
        %v5117 = vand.u32 %v2553, 4294901760
        %5118 = vmatprep.mubr.f32.mxu0 %v5117
        %v5119 = vand.u32 %v2552, 4294901760
        %5120 = vmatmul.mubr.f32.gmra.mrb[0].mxu0 %v5119
        %v5121 = vpop.f32.mrb[0].mxu0
        %v5122 = vadd.f32 %v4969, %v5121
        %v5123 = vpop.f32.mrb[0].mxu0
        %v5124 = vand.u32 %v2555, 4294901760
        %5125 = vmatprep.mubr.f32.mxu0 %v5124
        %v5126 = vand.u32 %v2554, 4294901760
        %5127 = vmatmul.mubr.f32.gmra.mrb[0].mxu0 %v5126
        %v5128 = vpop.f32.mrb[0].mxu0
        %v5129 = vadd.f32 %v4976, %v5128
        %v5130 = vpop.f32.mrb[0].mxu0
        %v5131 = vand.u32 %v2557, 4294901760
        %5132 = vmatprep.mubr.f32.mxu0 %v5131
        %v5133 = vand.u32 %v2556, 4294901760
        %5134 = vmatmul.mubr.f32.gmra.mrb[0].mxu0 %v5133
        %v5135 = vpop.f32.mrb[0].mxu0
        %v5136 = vadd.f32 %v4983, %v5135
        %v5137 = vpop.f32.mrb[0].mxu0
        %v5138 = vand.u32 %v2559, 4294901760
        %5139 = vmatprep.mubr.f32.mxu0 %v5138
        %v5140 = vand.u32 %v2558, 4294901760
        %5141 = vmatmul.mubr.f32.gmra.mrb[0].mxu0 %v5140
        %v5142 = vpop.f32.mrb[0].mxu0
        %v5143 = vadd.f32 %v4990, %v5142
        %v5144 = vpop.f32.mrb[0].mxu0
        %5145 = vdwg.mxu0
        %v5146 = vadd.f32 %v5094, 1.0
        %v5147 = vadd.f32 %v5101, 1.0
        %v5148 = vadd.f32 %v5108, 1.0
        %v5149 = vadd.f32 %v5115, 1.0
        %v5150 = vadd.f32 %v5122, 1.0
        %v5151 = vadd.f32 %v5129, 1.0
        %v5152 = vadd.f32 %v5136, 1.0
        %v5153 = vadd.f32 %v5143, 1.0
        %v5154 = vmul.f32 %v2440, %v5146
        %v5155 = vmul.f32 %v2441, %v5147
        %v5156 = vmul.f32 %v2442, %v5148
        %v5157 = vmul.f32 %v2443, %v5149
        %v5158 = vmul.f32 %v2444, %v5150
        %v5159 = vmul.f32 %v2445, %v5151
        %v5160 = vmul.f32 %v2446, %v5152
        %v5161 = vmul.f32 %v2447, %v5153
        %v5162 = vadd.f32 %v5154, %v3801
        %v5163 = vadd.f32 %v5155, %v3808
        %v5164 = vadd.f32 %v5156, %v3815
        %v5165 = vadd.f32 %v5157, %v3822
        %v5166 = vadd.f32 %v5158, %v3829
        %v5167 = vadd.f32 %v5159, %v3836
        %v5168 = vadd.f32 %v5160, %v3843
        %v5169 = vadd.f32 %v5161, %v3850
        %5170 = vst [vmem:[%s434] sm:$0xff] %v5162
        %5171 = vst [vmem:[%s434 + $0x8] sm:$0xff] %v5163
        %5172 = vst [vmem:[%s434 + $0x10] sm:$0xff] %v5164
        %5173 = vst [vmem:[%s434 + $0x18] sm:$0xff] %v5165
        %5174 = vst [vmem:[%s434 + $0x20] sm:$0xff] %v5166
        %5175 = vst [vmem:[%s434 + $0x28] sm:$0xff] %v5167
        %5176 = vst [vmem:[%s434 + $0x30] sm:$0xff] %v5168
        %5177 = vst [vmem:[%s434 + $0x38] sm:$0xff] %v5169
        %s5178 = sand.u32 %s237, 1
        %s5179 = scalar_lea.sflag [#allocation4], %s5178
        %s5180 = sand.u32 %s237, 1
        %s5181 = smul.addr %s5180, 64
        %s5182 = scalar_lea.vmem [#allocation11], %s5181
        // Predicated region
        $region77: #{tpu_custom_call.1} parent=55 // pred_check
          %p5183 = pneg %p247
        $region78: #{tpu_custom_call.1} parent=55 // pred_check_branch
          %5185 = sbr.rel (%p5183) target = $region80
        $region79: #{tpu_custom_call.1} parent=55 // pred_region
          %s5186 = smul.u32 8, %s30
          %s5188 = ssub.s32 1024, 1024
          %5189 = vsyncadd %s5179, %s5188
          %s5190 = smul.addr %s5186, 128
          %s5191 = scalar_lea.hbm %s9, %s5190
          %s5192 = sshll.u32 %s5182, 4
          %s5193 = int_to_ptr.vmem [resolvable:$true] %s5192
          %5198 = dma.vmem_to_hbm [thread:$0]  %s5193, 1024, %s5191, %s5179, 128, 128, 8
        $region80: #{tpu_custom_call.1} parent=55 // pred_fallthru
          _
      $region56: #{tpu_custom_call.1} parent=5 // pred_fallthru
        _
      %p5199 = scmp.le.s32.totalorder 2, %s25
      // Predicated region
      $region81: #{tpu_custom_call.1} parent=5 // pred_check
        %p5200 = pneg %p5199
      $region82: #{tpu_custom_call.1} parent=5 // pred_check_branch
        %5202 = sbr.rel (%p5200) target = $region84
      $region83: #{tpu_custom_call.1} parent=5 // pred_region
        %s5203 = ssub.s32 %s25, 2
        // Predicated region
        $region85: #{tpu_custom_call.1} parent=83 // pred_check
          %p5204 = pneg %p253
        $region86: #{tpu_custom_call.1} parent=83 // pred_check_branch
          %5206 = sbr.rel (%p5204) target = $region88
        $region87: #{tpu_custom_call.1} parent=83 // pred_region
          %s5207 = sand.u32 %s238, 1
          %s5208 = scalar_lea.sflag [#allocation4], %s5207
          %s5209 = sand.u32 %s238, 1
          %s5210 = smul.addr %s5209, 64
          %s5211 = scalar_lea.vmem [#allocation11], %s5210
          %5212 = dma.done %s5208, 1024
        $region88: #{tpu_custom_call.1} parent=83 // pred_fallthru
          _
      $region84: #{tpu_custom_call.1} parent=5 // pred_fallthru
        _
    $region6: #{tpu_custom_call.1} parent=1 // loop_footer
      %s29 = sadd.s32 1, %s25
    $region7: #{tpu_custom_call.1} parent=1 // loop_footer_branch
      %24 = sbr.rel target = $region3
    $region8: #{tpu_custom_call.1} parent=1 // loop_exit
      _
    %5213 = vsyncpa [#allocation3], 1
    %s5214 = scalar_lea.sflag [#allocation3], 1
    %5215 = vsyncpa %s5214, 1
    %5216 = vsyncpa [#allocation6], 1
    %s5217 = scalar_lea.sflag [#allocation6], 1
    %5218 = vsyncpa %s5217, 1
    %5219 = vsyncpa [#allocation9], 1
    %5220 = vsyncpa [#allocation4], 1
    %s5221 = scalar_lea.sflag [#allocation4], 1
    %5222 = vsyncpa %s5221, 1

</llo_original>
